<compile_context>
chip_gen: v5e
topology: v5e:2x2
jax: 0.10.0
libtpu: 0.0.40
codegen_flags: <defaults>
</compile_context>

<pallas_src>
import functools

import jax
import jax.numpy as jnp
from jax import lax
from jax.experimental import pallas as pl
from jax.experimental.pallas import tpu as pltpu


# For output row 2*m + a (identically for columns / b) of the k=4, s=2, p=1
# transposed convolution, the contributing (padded-row offset ry, kernel row ky)
# pairs are:
_TERMS = (((1, 1), (0, 3)),   # a == 0
          ((2, 0), (1, 2)))   # a == 1


def _round_up(x, m):
    return ((x + m - 1) // m) * m


def _decoder_block_kernel(x_ref, w1_ref, b1_ref, wf_ref, bf_ref, o_ref, hp_ref):
    """One batch image per grid step.

    Refs:
      x_ref : (H*W, Cin)          input pixels, channels on lanes
      w1_ref: (Cin, C4p)          conv1 weight, columns zero-padded to C4p
      b1_ref: (1, C4p)            conv1 bias (f32)
      wf_ref: (4, 4, C4p, Coutp)  fused (deconv o conv2) weight per (parity, term)
      bf_ref: (1, Coutp)          fused bias (f32), identical for all parities
      o_ref : (H*W, 4*Coutp)      4 sub-pixel parities, lane-dense
      hp_ref: (H+2, W+2, C4p)     VMEM scratch: zero-padded conv1 output
    """
    Hp2, Wp2, C4p = hp_ref.shape
    H, W = Hp2 - 2, Wp2 - 2
    HW = H * W
    Cp = o_ref.shape[-1] // 4

    # ---- conv1: 1x1 conv + ReLU, one matmul over all H*W pixels -------------
    h1 = jnp.dot(x_ref[...], w1_ref[...], preferred_element_type=jnp.float32)
    h1 = jnp.maximum(h1 + b1_ref[...], 0.0)

    # ---- zero-padded scratch: one full-width fill, interior written once ----
    # (single unmasked fill instead of 4 narrow border stores; keeps the
    #  scratch fully initialized every step before the tap reads below.)
    hp_ref[...] = jnp.zeros(hp_ref.shape, hp_ref.dtype)
    hp_ref[pl.ds(1, H), pl.ds(1, W), :] = h1.reshape(H, W, C4p).astype(hp_ref.dtype)

    # ---- fused ConvTranspose2d(4,2,1) + conv2(1x1) + ReLU --------------------
    # Per output parity p = 2a+b, accumulate the 4 structurally non-zero
    # (tap, kernel) contributions:  acc_p = sum_t  tap(ry,rx) @ wf[p, t].
    # Every tap read is a full-lane (HW, C4p) window of the scratch; each tap
    # is loaded at most once and reused across parities.
    taps = {}

    def tap(ry, rx):
        if (ry, rx) not in taps:
            taps[(ry, rx)] = hp_ref[pl.ds(ry, H), pl.ds(rx, W), :].reshape(HW, C4p)
        return taps[(ry, rx)]

    bias = bf_ref[...]
    parity_out = []
    for a in range(2):
        for b in range(2):
            p = 2 * a + b
            acc = None
            t = 0
            for (ry, _ky) in _TERMS[a]:
                for (rx, _kx) in _TERMS[b]:
                    term = jnp.dot(tap(ry, rx), wf_ref[p, t],
                                   preferred_element_type=jnp.float32)
                    acc = term if acc is None else acc + term
                    t += 1
            parity_out.append(jnp.maximum(acc + bias, 0.0))

    # Single 4-way, 32-lane-aligned assembly -> one full-width lane-dense store.
    o_ref[...] = jnp.concatenate(parity_out, axis=-1).astype(o_ref.dtype)


def _fuse_params(params, compute_dtype):
    """Trace-time weight prep: fold conv2 into the deconv taps, pad to
    lane-dense shapes, pre-cast the matmul operands to the compute dtype."""
    w1, b1, wd, bd, w2, b2 = params                      # PyTorch layouts
    C4, Cin = w1.shape[0], w1.shape[1]
    Cout = w2.shape[0]
    C4p = _round_up(C4, 128)    # scratch / matmul-K lane width
    Cp = _round_up(Cout, 32)    # 4*Cp is a multiple of 128 (lane-dense output)

    w1_k = jnp.zeros((Cin, C4p), jnp.float32)
    w1_k = w1_k.at[:, :C4].set(jnp.transpose(w1[:, :, 0, 0], (1, 0)))
    b1_k = jnp.zeros((1, C4p), jnp.float32).at[:, :C4].set(b1.reshape(1, C4))

    w2_k = jnp.transpose(w2[:, :, 0, 0], (1, 0))         # (C4, Cout)
    wd_k = jnp.transpose(wd, (2, 3, 0, 1))               # (ky, kx, C4in, C4out)

    # wf[p, t] = wd[ky, kx] @ W2 for the t-th (row-term, col-term) of parity p.
    wf = jnp.zeros((4, 4, C4p, Cp), jnp.float32)
    for a in range(2):
        for b in range(2):
            p = 2 * a + b
            t = 0
            for (_ry, ky) in _TERMS[a]:
                for (_rx, kx) in _TERMS[b]:
                    wf = wf.at[p, t, :C4, :Cout].set(wd_k[ky, kx] @ w2_k)
                    t += 1
    bf = jnp.zeros((1, Cp), jnp.float32)
    bf = bf.at[:, :Cout].set(bd.reshape(1, C4) @ w2_k + b2.reshape(1, Cout))

    # Matmul operands in the compute dtype; biases stay f32 (VPU math in f32).
    return (w1_k.astype(compute_dtype), b1_k, wf.astype(compute_dtype), bf,
            C4p, Cp)


def decoder_block_forward(x_nchw, params, *, compute_dtype=jnp.float32):
    """x_nchw: (B, Cin, H, W) float32  ->  (B, Cout, 2H, 2W) float32."""
    B, Cin, H, W = x_nchw.shape
    Cout = params[4].shape[0]
    w1_k, b1_k, wf, bf, C4p, Cp = _fuse_params(params, compute_dtype)

    # NCHW -> (B, H*W, Cin) with channels on lanes.
    # TODO(synk): if the surrounding model is NHWC this transpose (an extra HBM
    # pass at realistic sizes) disappears; kept here to match the NCHW spec.
    x2d = jnp.transpose(x_nchw, (0, 2, 3, 1)).reshape(B, H * W, Cin)
    x2d = x2d.astype(compute_dtype)

    slab = pl.pallas_call(
        _decoder_block_kernel,
        out_shape=jax.ShapeDtypeStruct((B, H * W, 4 * Cp), jnp.float32),
        grid_spec=pltpu.PrefetchScalarGridSpec(
            num_scalar_prefetch=0,
            grid=(B,),      # one image per step; weights stay VMEM-resident.
            in_specs=[
                pl.BlockSpec((None, H * W, Cin), lambda b: (b, 0, 0)),
                pl.BlockSpec((Cin, C4p), lambda b: (0, 0)),
                pl.BlockSpec((1, C4p), lambda b: (0, 0)),
                pl.BlockSpec((4, 4, C4p, Cp), lambda b: (0, 0, 0, 0)),
                pl.BlockSpec((1, Cp), lambda b: (0, 0)),
            ],
            out_specs=pl.BlockSpec((None, H * W, 4 * Cp), lambda b: (b, 0, 0)),
            scratch_shapes=[pltpu.VMEM((H + 2, W + 2, C4p), compute_dtype)],
        ),
        compiler_params=pltpu.CompilerParams(
            dimension_semantics=("parallel",)),
    )(x2d, w1_k, b1_k, wf, bf)

    # Pixel-shuffle + NHWC->NCHW, dropping output-channel padding:
    #   slab[b, i*W + j, (2a+c)*Cp + co]  ->  out[b, co, 2i+a, 2j+c]
    y = slab.reshape(B, H, W, 2, 2, Cp)[..., :Cout]
    y = jnp.transpose(y, (0, 5, 1, 3, 2, 4)).reshape(B, Cout, 2 * H, 2 * W)
    return y


def reference_forward(x, params):
    """Pure-JAX (XLA conv) reference replicating the PyTorch module."""
    w1, b1, wd, bd, w2, b2 = params
    dn = ('NCHW', 'OIHW', 'NCHW')
    h = lax.conv_general_dilated(x, w1, (1, 1), 'VALID', dimension_numbers=dn)
    h = jax.nn.relu(h + b1[None, :, None, None])
    # ConvTranspose2d(k=4, s=2, p=1) == dilated conv with flipped/swapped kernel
    wflip = jnp.transpose(jnp.flip(wd, (2, 3)), (1, 0, 2, 3))
    h = lax.conv_general_dilated(h, wflip, (1, 1), [(2, 2), (2, 2)],
                                 lhs_dilation=(2, 2), dimension_numbers=dn)
    h = h + bd[None, :, None, None]
    h = lax.conv_general_dilated(h, w2, (1, 1), 'VALID', dimension_numbers=dn)
    return jax.nn.relu(h + b2[None, :, None, None])


def make_params(key, in_channels, out_channels):
    c4 = in_channels // 4
    ks = jax.random.split(key, 6)
    w1 = 0.1 * jax.random.normal(ks[0], (c4, in_channels, 1, 1), jnp.float32)
    b1 = 0.1 * jax.random.normal(ks[1], (c4,), jnp.float32)
    wd = 0.1 * jax.random.normal(ks[2], (c4, c4, 4, 4), jnp.float32)
    bd = 0.1 * jax.random.normal(ks[3], (c4,), jnp.float32)
    w2 = 0.1 * jax.random.normal(ks[4], (out_channels, c4, 1, 1), jnp.float32)
    b2 = 0.1 * jax.random.normal(ks[5], (out_channels,), jnp.float32)
    return (w1, b1, wd, bd, w2, b2)


if __name__ == "__main__":
    B, Cin, Cout, H, W = 2, 32, 32, 16, 16   # Cout=32 -> 4*Cout=128 lane-dense

    key = jax.random.PRNGKey(0)
    kx, kp = jax.random.split(key)
    x = jax.random.normal(kx, (B, Cin, H, W), jnp.float32)
    params = make_params(kp, Cin, Cout)

    ref = jax.block_until_ready(reference_forward(x, params))

    # f32 path: bit-for-bit-level match with the PyTorch/XLA numerics.
    fwd_f32 = jax.jit(functools.partial(decoder_block_forward,
                                        compute_dtype=jnp.float32))
    out = jax.block_until_ready(fwd_f32(x, params))
    assert out.shape == (B, Cout, 2 * H, 2 * W), out.shape
    err_f32 = float(jnp.max(jnp.abs(out - ref)))
    assert jnp.allclose(out, ref, rtol=1e-4, atol=1e-4), err_f32

    # bf16-operand path (native MXU rate on v6e/v7x); f32 accumulation/bias,
    # verified at a looser tolerance since numerics change.
    fwd_bf16 = jax.jit(functools.partial(decoder_block_forward,
                                         compute_dtype=jnp.bfloat16))
    out_bf16 = jax.block_until_ready(fwd_bf16(x, params))
    err_bf16 = float(jnp.max(jnp.abs(out_bf16 - ref)))
    assert jnp.allclose(out_bf16, ref, rtol=5e-2, atol=5e-2), err_bf16

    print("KERNEL_OK")
</pallas_src>

<mosaic_0001>
module attributes {stable_mosaic.version = 11 : i64} {
  func.func @_decoder_block_kernel(%arg0: i32, %arg1: memref<1x256x32xf32, #tpu.memory_space<vmem>>, %arg2: memref<32x128xf32, #tpu.memory_space<vmem>>, %arg3: memref<1x128xf32, #tpu.memory_space<vmem>>, %arg4: memref<4x4x128x32xf32, #tpu.memory_space<vmem>>, %arg5: memref<1x32xf32, #tpu.memory_space<vmem>>, %arg6: memref<1x256x128xf32, #tpu.memory_space<vmem>>, %arg7: memref<18x18x128xf32, #tpu.memory_space<vmem>>) attributes {dimension_semantics = [#tpu.dimension_semantics<parallel>], iteration_bounds = array<i64: 2>, scalar_prefetch = 0 : i64, scratch_operands = 1 : i64, tpu.core_type = #tpu.core_type<tc>, window_params = [{transform_indices = @transform_0, window_bounds = array<i64: 1, 256, 32>}, {pipeline_mode = #tpu.pipeline_mode<synchronous>, transform_indices = @transform_1, window_bounds = array<i64: 32, 128>}, {pipeline_mode = #tpu.pipeline_mode<synchronous>, transform_indices = @transform_2, window_bounds = array<i64: 1, 128>}, {pipeline_mode = #tpu.pipeline_mode<synchronous>, transform_indices = @transform_3, window_bounds = array<i64: 4, 4, 128, 32>}, {pipeline_mode = #tpu.pipeline_mode<synchronous>, transform_indices = @transform_4, window_bounds = array<i64: 1, 32>}, {transform_indices = @transform_5, window_bounds = array<i64: 1, 256, 128>}]} {
    %c0 = arith.constant 0 : index
    %c0_0 = arith.constant 0 : index
    %c0_1 = arith.constant 0 : index
    %0 = vector.load %arg1[%c0, %c0_0, %c0_1] : memref<1x256x32xf32, #tpu.memory_space<vmem>>, vector<1x256x32xf32>
    %1 = vector.shape_cast %0 : vector<1x256x32xf32> to vector<256x32xf32>
    %c0_2 = arith.constant 0 : index
    %c0_3 = arith.constant 0 : index
    %2 = vector.load %arg2[%c0_2, %c0_3] : memref<32x128xf32, #tpu.memory_space<vmem>>, vector<32x128xf32>
    %cst = arith.constant dense<0.000000e+00> : vector<256x128xf32>
    %3 = tpu.matmul %1, %2, %cst {dimension_numbers = #tpu.dot_dimension_numbers<[1], [0], [0], [1], [0, 0, 1, 1], [], []>} : vector<256x32xf32>, vector<32x128xf32>, vector<256x128xf32> -> vector<256x128xf32>
    %c0_4 = arith.constant 0 : index
    %c0_5 = arith.constant 0 : index
    %4 = vector.load %arg3[%c0_4, %c0_5] : memref<1x128xf32, #tpu.memory_space<vmem>>, vector<1x128xf32>
    %5 = vector.broadcast %4 : vector<1x128xf32> to vector<256x128xf32>
    %6 = arith.addf %3, %5 : vector<256x128xf32>
    %cst_6 = arith.constant 0.000000e+00 : f32
    %7 = vector.broadcast %cst_6 : f32 to vector<256x128xf32>
    %8 = arith.maximumf %6, %7 : vector<256x128xf32>
    %cst_7 = arith.constant 0.000000e+00 : f32
    %9 = vector.broadcast %cst_7 : f32 to vector<18x18x128xf32>
    %c0_8 = arith.constant 0 : index
    %c0_9 = arith.constant 0 : index
    %c0_10 = arith.constant 0 : index
    %10 = vector.load %arg7[%c0_8, %c0_9, %c0_10] : memref<18x18x128xf32, #tpu.memory_space<vmem>>, vector<18x18x128xf32>
    tpu.vector_store %arg7[%c0_8, %c0_9, %c0_10], %9 {strides = array<i32>} : memref<18x18x128xf32, #tpu.memory_space<vmem>>, vector<18x18x128xf32>,
    %11 = vector.shape_cast %8 : vector<256x128xf32> to vector<16x16x128xf32>
    %c1 = arith.constant 1 : index
    %c1_11 = arith.constant 1 : index
    %c0_12 = arith.constant 0 : index
    %12 = vector.load %arg7[%c1, %c1_11, %c0_12] : memref<18x18x128xf32, #tpu.memory_space<vmem>>, vector<16x16x128xf32>
    tpu.vector_store %arg7[%c1, %c1_11, %c0_12], %11 {strides = array<i32>} : memref<18x18x128xf32, #tpu.memory_space<vmem>>, vector<16x16x128xf32>,
    %c0_13 = arith.constant 0 : index
    %c0_14 = arith.constant 0 : index
    %13 = vector.load %arg5[%c0_13, %c0_14] : memref<1x32xf32, #tpu.memory_space<vmem>>, vector<1x32xf32>
    %c1_15 = arith.constant 1 : index
    %c1_16 = arith.constant 1 : index
    %c0_17 = arith.constant 0 : index
    %14 = vector.load %arg7[%c1_15, %c1_16, %c0_17] : memref<18x18x128xf32, #tpu.memory_space<vmem>>, vector<16x16x128xf32>
    %15 = vector.shape_cast %14 : vector<16x16x128xf32> to vector<256x128xf32>
    %c0_18 = arith.constant 0 : index
    %c0_19 = arith.constant 0 : index
    %c0_20 = arith.constant 0 : index
    %c0_21 = arith.constant 0 : index
    %16 = vector.load %arg4[%c0_18, %c0_19, %c0_20, %c0_21] : memref<4x4x128x32xf32, #tpu.memory_space<vmem>>, vector<1x1x128x32xf32>
    %17 = vector.shape_cast %16 : vector<1x1x128x32xf32> to vector<128x32xf32>
    %cst_22 = arith.constant dense<0.000000e+00> : vector<256x32xf32>
    %18 = tpu.matmul %15, %17, %cst_22 {dimension_numbers = #tpu.dot_dimension_numbers<[1], [0], [0], [1], [0, 0, 1, 1], [], []>} : vector<256x128xf32>, vector<128x32xf32>, vector<256x32xf32> -> vector<256x32xf32>
    %c1_23 = arith.constant 1 : index
    %c0_24 = arith.constant 0 : index
    %c0_25 = arith.constant 0 : index
    %19 = vector.load %arg7[%c1_23, %c0_24, %c0_25] : memref<18x18x128xf32, #tpu.memory_space<vmem>>, vector<16x16x128xf32>
    %20 = vector.shape_cast %19 : vector<16x16x128xf32> to vector<256x128xf32>
    %c0_26 = arith.constant 0 : index
    %c1_27 = arith.constant 1 : index
    %c0_28 = arith.constant 0 : index
    %c0_29 = arith.constant 0 : index
    %21 = vector.load %arg4[%c0_26, %c1_27, %c0_28, %c0_29] : memref<4x4x128x32xf32, #tpu.memory_space<vmem>>, vector<1x1x128x32xf32>
    %22 = vector.shape_cast %21 : vector<1x1x128x32xf32> to vector<128x32xf32>
    %cst_30 = arith.constant dense<0.000000e+00> : vector<256x32xf32>
    %23 = tpu.matmul %20, %22, %cst_30 {dimension_numbers = #tpu.dot_dimension_numbers<[1], [0], [0], [1], [0, 0, 1, 1], [], []>} : vector<256x128xf32>, vector<128x32xf32>, vector<256x32xf32> -> vector<256x32xf32>
    %24 = arith.addf %18, %23 : vector<256x32xf32>
    %c0_31 = arith.constant 0 : index
    %c1_32 = arith.constant 1 : index
    %c0_33 = arith.constant 0 : index
    %25 = vector.load %arg7[%c0_31, %c1_32, %c0_33] : memref<18x18x128xf32, #tpu.memory_space<vmem>>, vector<16x16x128xf32>
    %26 = vector.shape_cast %25 : vector<16x16x128xf32> to vector<256x128xf32>
    %c0_34 = arith.constant 0 : index
    %c2 = arith.constant 2 : index
    %c0_35 = arith.constant 0 : index
    %c0_36 = arith.constant 0 : index
    %27 = vector.load %arg4[%c0_34, %c2, %c0_35, %c0_36] : memref<4x4x128x32xf32, #tpu.memory_space<vmem>>, vector<1x1x128x32xf32>
    %28 = vector.shape_cast %27 : vector<1x1x128x32xf32> to vector<128x32xf32>
    %cst_37 = arith.constant dense<0.000000e+00> : vector<256x32xf32>
    %29 = tpu.matmul %26, %28, %cst_37 {dimension_numbers = #tpu.dot_dimension_numbers<[1], [0], [0], [1], [0, 0, 1, 1], [], []>} : vector<256x128xf32>, vector<128x32xf32>, vector<256x32xf32> -> vector<256x32xf32>
    %30 = arith.addf %24, %29 : vector<256x32xf32>
    %c0_38 = arith.constant 0 : index
    %c0_39 = arith.constant 0 : index
    %c0_40 = arith.constant 0 : index
    %31 = vector.load %arg7[%c0_38, %c0_39, %c0_40] : memref<18x18x128xf32, #tpu.memory_space<vmem>>, vector<16x16x128xf32>
    %32 = vector.shape_cast %31 : vector<16x16x128xf32> to vector<256x128xf32>
    %c0_41 = arith.constant 0 : index
    %c3 = arith.constant 3 : index
    %c0_42 = arith.constant 0 : index
    %c0_43 = arith.constant 0 : index
    %33 = vector.load %arg4[%c0_41, %c3, %c0_42, %c0_43] : memref<4x4x128x32xf32, #tpu.memory_space<vmem>>, vector<1x1x128x32xf32>
    %34 = vector.shape_cast %33 : vector<1x1x128x32xf32> to vector<128x32xf32>
    %cst_44 = arith.constant dense<0.000000e+00> : vector<256x32xf32>
    %35 = tpu.matmul %32, %34, %cst_44 {dimension_numbers = #tpu.dot_dimension_numbers<[1], [0], [0], [1], [0, 0, 1, 1], [], []>} : vector<256x128xf32>, vector<128x32xf32>, vector<256x32xf32> -> vector<256x32xf32>
    %36 = arith.addf %30, %35 : vector<256x32xf32>
    %37 = vector.broadcast %13 : vector<1x32xf32> to vector<256x32xf32>
    %38 = arith.addf %36, %37 : vector<256x32xf32>
    %cst_45 = arith.constant 0.000000e+00 : f32
    %39 = vector.broadcast %cst_45 : f32 to vector<256x32xf32>
    %40 = arith.maximumf %38, %39 : vector<256x32xf32>
    %c1_46 = arith.constant 1 : index
    %c2_47 = arith.constant 2 : index
    %c0_48 = arith.constant 0 : index
    %41 = vector.load %arg7[%c1_46, %c2_47, %c0_48] : memref<18x18x128xf32, #tpu.memory_space<vmem>>, vector<16x16x128xf32>
    %42 = vector.shape_cast %41 : vector<16x16x128xf32> to vector<256x128xf32>
    %c1_49 = arith.constant 1 : index
    %c0_50 = arith.constant 0 : index
    %c0_51 = arith.constant 0 : index
    %c0_52 = arith.constant 0 : index
    %43 = vector.load %arg4[%c1_49, %c0_50, %c0_51, %c0_52] : memref<4x4x128x32xf32, #tpu.memory_space<vmem>>, vector<1x1x128x32xf32>
    %44 = vector.shape_cast %43 : vector<1x1x128x32xf32> to vector<128x32xf32>
    %cst_53 = arith.constant dense<0.000000e+00> : vector<256x32xf32>
    %45 = tpu.matmul %42, %44, %cst_53 {dimension_numbers = #tpu.dot_dimension_numbers<[1], [0], [0], [1], [0, 0, 1, 1], [], []>} : vector<256x128xf32>, vector<128x32xf32>, vector<256x32xf32> -> vector<256x32xf32>
    %c1_54 = arith.constant 1 : index
    %c1_55 = arith.constant 1 : index
    %c0_56 = arith.constant 0 : index
    %c0_57 = arith.constant 0 : index
    %46 = vector.load %arg4[%c1_54, %c1_55, %c0_56, %c0_57] : memref<4x4x128x32xf32, #tpu.memory_space<vmem>>, vector<1x1x128x32xf32>
    %47 = vector.shape_cast %46 : vector<1x1x128x32xf32> to vector<128x32xf32>
    %cst_58 = arith.constant dense<0.000000e+00> : vector<256x32xf32>
    %48 = tpu.matmul %15, %47, %cst_58 {dimension_numbers = #tpu.dot_dimension_numbers<[1], [0], [0], [1], [0, 0, 1, 1], [], []>} : vector<256x128xf32>, vector<128x32xf32>, vector<256x32xf32> -> vector<256x32xf32>
    %49 = arith.addf %45, %48 : vector<256x32xf32>
    %c0_59 = arith.constant 0 : index
    %c2_60 = arith.constant 2 : index
    %c0_61 = arith.constant 0 : index
    %50 = vector.load %arg7[%c0_59, %c2_60, %c0_61] : memref<18x18x128xf32, #tpu.memory_space<vmem>>, vector<16x16x128xf32>
    %51 = vector.shape_cast %50 : vector<16x16x128xf32> to vector<256x128xf32>
    %c1_62 = arith.constant 1 : index
    %c2_63 = arith.constant 2 : index
    %c0_64 = arith.constant 0 : index
    %c0_65 = arith.constant 0 : index
    %52 = vector.load %arg4[%c1_62, %c2_63, %c0_64, %c0_65] : memref<4x4x128x32xf32, #tpu.memory_space<vmem>>, vector<1x1x128x32xf32>
    %53 = vector.shape_cast %52 : vector<1x1x128x32xf32> to vector<128x32xf32>
    %cst_66 = arith.constant dense<0.000000e+00> : vector<256x32xf32>
    %54 = tpu.matmul %51, %53, %cst_66 {dimension_numbers = #tpu.dot_dimension_numbers<[1], [0], [0], [1], [0, 0, 1, 1], [], []>} : vector<256x128xf32>, vector<128x32xf32>, vector<256x32xf32> -> vector<256x32xf32>
    %55 = arith.addf %49, %54 : vector<256x32xf32>
    %c1_67 = arith.constant 1 : index
    %c3_68 = arith.constant 3 : index
    %c0_69 = arith.constant 0 : index
    %c0_70 = arith.constant 0 : index
    %56 = vector.load %arg4[%c1_67, %c3_68, %c0_69, %c0_70] : memref<4x4x128x32xf32, #tpu.memory_space<vmem>>, vector<1x1x128x32xf32>
    %57 = vector.shape_cast %56 : vector<1x1x128x32xf32> to vector<128x32xf32>
    %cst_71 = arith.constant dense<0.000000e+00> : vector<256x32xf32>
    %58 = tpu.matmul %26, %57, %cst_71 {dimension_numbers = #tpu.dot_dimension_numbers<[1], [0], [0], [1], [0, 0, 1, 1], [], []>} : vector<256x128xf32>, vector<128x32xf32>, vector<256x32xf32> -> vector<256x32xf32>
    %59 = arith.addf %55, %58 : vector<256x32xf32>
    %60 = vector.broadcast %13 : vector<1x32xf32> to vector<256x32xf32>
    %61 = arith.addf %59, %60 : vector<256x32xf32>
    %cst_72 = arith.constant 0.000000e+00 : f32
    %62 = vector.broadcast %cst_72 : f32 to vector<256x32xf32>
    %63 = arith.maximumf %61, %62 : vector<256x32xf32>
    %c2_73 = arith.constant 2 : index
    %c1_74 = arith.constant 1 : index
    %c0_75 = arith.constant 0 : index
    %64 = vector.load %arg7[%c2_73, %c1_74, %c0_75] : memref<18x18x128xf32, #tpu.memory_space<vmem>>, vector<16x16x128xf32>
    %65 = vector.shape_cast %64 : vector<16x16x128xf32> to vector<256x128xf32>
    %c2_76 = arith.constant 2 : index
    %c0_77 = arith.constant 0 : index
    %c0_78 = arith.constant 0 : index
    %c0_79 = arith.constant 0 : index
    %66 = vector.load %arg4[%c2_76, %c0_77, %c0_78, %c0_79] : memref<4x4x128x32xf32, #tpu.memory_space<vmem>>, vector<1x1x128x32xf32>
    %67 = vector.shape_cast %66 : vector<1x1x128x32xf32> to vector<128x32xf32>
    %cst_80 = arith.constant dense<0.000000e+00> : vector<256x32xf32>
    %68 = tpu.matmul %65, %67, %cst_80 {dimension_numbers = #tpu.dot_dimension_numbers<[1], [0], [0], [1], [0, 0, 1, 1], [], []>} : vector<256x128xf32>, vector<128x32xf32>, vector<256x32xf32> -> vector<256x32xf32>
    %c2_81 = arith.constant 2 : index
    %c0_82 = arith.constant 0 : index
    %c0_83 = arith.constant 0 : index
    %69 = vector.load %arg7[%c2_81, %c0_82, %c0_83] : memref<18x18x128xf32, #tpu.memory_space<vmem>>, vector<16x16x128xf32>
    %70 = vector.shape_cast %69 : vector<16x16x128xf32> to vector<256x128xf32>
    %c2_84 = arith.constant 2 : index
    %c1_85 = arith.constant 1 : index
    %c0_86 = arith.constant 0 : index
    %c0_87 = arith.constant 0 : index
    %71 = vector.load %arg4[%c2_84, %c1_85, %c0_86, %c0_87] : memref<4x4x128x32xf32, #tpu.memory_space<vmem>>, vector<1x1x128x32xf32>
    %72 = vector.shape_cast %71 : vector<1x1x128x32xf32> to vector<128x32xf32>
    %cst_88 = arith.constant dense<0.000000e+00> : vector<256x32xf32>
    %73 = tpu.matmul %70, %72, %cst_88 {dimension_numbers = #tpu.dot_dimension_numbers<[1], [0], [0], [1], [0, 0, 1, 1], [], []>} : vector<256x128xf32>, vector<128x32xf32>, vector<256x32xf32> -> vector<256x32xf32>
    %74 = arith.addf %68, %73 : vector<256x32xf32>
    %c2_89 = arith.constant 2 : index
    %c2_90 = arith.constant 2 : index
    %c0_91 = arith.constant 0 : index
    %c0_92 = arith.constant 0 : index
    %75 = vector.load %arg4[%c2_89, %c2_90, %c0_91, %c0_92] : memref<4x4x128x32xf32, #tpu.memory_space<vmem>>, vector<1x1x128x32xf32>
    %76 = vector.shape_cast %75 : vector<1x1x128x32xf32> to vector<128x32xf32>
    %cst_93 = arith.constant dense<0.000000e+00> : vector<256x32xf32>
    %77 = tpu.matmul %15, %76, %cst_93 {dimension_numbers = #tpu.dot_dimension_numbers<[1], [0], [0], [1], [0, 0, 1, 1], [], []>} : vector<256x128xf32>, vector<128x32xf32>, vector<256x32xf32> -> vector<256x32xf32>
    %78 = arith.addf %74, %77 : vector<256x32xf32>
    %c2_94 = arith.constant 2 : index
    %c3_95 = arith.constant 3 : index
    %c0_96 = arith.constant 0 : index
    %c0_97 = arith.constant 0 : index
    %79 = vector.load %arg4[%c2_94, %c3_95, %c0_96, %c0_97] : memref<4x4x128x32xf32, #tpu.memory_space<vmem>>, vector<1x1x128x32xf32>
    %80 = vector.shape_cast %79 : vector<1x1x128x32xf32> to vector<128x32xf32>
    %cst_98 = arith.constant dense<0.000000e+00> : vector<256x32xf32>
    %81 = tpu.matmul %20, %80, %cst_98 {dimension_numbers = #tpu.dot_dimension_numbers<[1], [0], [0], [1], [0, 0, 1, 1], [], []>} : vector<256x128xf32>, vector<128x32xf32>, vector<256x32xf32> -> vector<256x32xf32>
    %82 = arith.addf %78, %81 : vector<256x32xf32>
    %83 = vector.broadcast %13 : vector<1x32xf32> to vector<256x32xf32>
    %84 = arith.addf %82, %83 : vector<256x32xf32>
    %cst_99 = arith.constant 0.000000e+00 : f32
    %85 = vector.broadcast %cst_99 : f32 to vector<256x32xf32>
    %86 = arith.maximumf %84, %85 : vector<256x32xf32>
    %c2_100 = arith.constant 2 : index
    %c2_101 = arith.constant 2 : index
    %c0_102 = arith.constant 0 : index
    %87 = vector.load %arg7[%c2_100, %c2_101, %c0_102] : memref<18x18x128xf32, #tpu.memory_space<vmem>>, vector<16x16x128xf32>
    %88 = vector.shape_cast %87 : vector<16x16x128xf32> to vector<256x128xf32>
    %c3_103 = arith.constant 3 : index
    %c0_104 = arith.constant 0 : index
    %c0_105 = arith.constant 0 : index
    %c0_106 = arith.constant 0 : index
    %89 = vector.load %arg4[%c3_103, %c0_104, %c0_105, %c0_106] : memref<4x4x128x32xf32, #tpu.memory_space<vmem>>, vector<1x1x128x32xf32>
    %90 = vector.shape_cast %89 : vector<1x1x128x32xf32> to vector<128x32xf32>
    %cst_107 = arith.constant dense<0.000000e+00> : vector<256x32xf32>
    %91 = tpu.matmul %88, %90, %cst_107 {dimension_numbers = #tpu.dot_dimension_numbers<[1], [0], [0], [1], [0, 0, 1, 1], [], []>} : vector<256x128xf32>, vector<128x32xf32>, vector<256x32xf32> -> vector<256x32xf32>
    %c3_108 = arith.constant 3 : index
    %c1_109 = arith.constant 1 : index
    %c0_110 = arith.constant 0 : index
    %c0_111 = arith.constant 0 : index
    %92 = vector.load %arg4[%c3_108, %c1_109, %c0_110, %c0_111] : memref<4x4x128x32xf32, #tpu.memory_space<vmem>>, vector<1x1x128x32xf32>
    %93 = vector.shape_cast %92 : vector<1x1x128x32xf32> to vector<128x32xf32>
    %cst_112 = arith.constant dense<0.000000e+00> : vector<256x32xf32>
    %94 = tpu.matmul %65, %93, %cst_112 {dimension_numbers = #tpu.dot_dimension_numbers<[1], [0], [0], [1], [0, 0, 1, 1], [], []>} : vector<256x128xf32>, vector<128x32xf32>, vector<256x32xf32> -> vector<256x32xf32>
    %95 = arith.addf %91, %94 : vector<256x32xf32>
    %c3_113 = arith.constant 3 : index
    %c2_114 = arith.constant 2 : index
    %c0_115 = arith.constant 0 : index
    %c0_116 = arith.constant 0 : index
    %96 = vector.load %arg4[%c3_113, %c2_114, %c0_115, %c0_116] : memref<4x4x128x32xf32, #tpu.memory_space<vmem>>, vector<1x1x128x32xf32>
    %97 = vector.shape_cast %96 : vector<1x1x128x32xf32> to vector<128x32xf32>
    %cst_117 = arith.constant dense<0.000000e+00> : vector<256x32xf32>
    %98 = tpu.matmul %42, %97, %cst_117 {dimension_numbers = #tpu.dot_dimension_numbers<[1], [0], [0], [1], [0, 0, 1, 1], [], []>} : vector<256x128xf32>, vector<128x32xf32>, vector<256x32xf32> -> vector<256x32xf32>
    %99 = arith.addf %95, %98 : vector<256x32xf32>
    %c3_118 = arith.constant 3 : index
    %c3_119 = arith.constant 3 : index
    %c0_120 = arith.constant 0 : index
    %c0_121 = arith.constant 0 : index
    %100 = vector.load %arg4[%c3_118, %c3_119, %c0_120, %c0_121] : memref<4x4x128x32xf32, #tpu.memory_space<vmem>>, vector<1x1x128x32xf32>
    %101 = vector.shape_cast %100 : vector<1x1x128x32xf32> to vector<128x32xf32>
    %cst_122 = arith.constant dense<0.000000e+00> : vector<256x32xf32>
    %102 = tpu.matmul %15, %101, %cst_122 {dimension_numbers = #tpu.dot_dimension_numbers<[1], [0], [0], [1], [0, 0, 1, 1], [], []>} : vector<256x128xf32>, vector<128x32xf32>, vector<256x32xf32> -> vector<256x32xf32>
    %103 = arith.addf %99, %102 : vector<256x32xf32>
    %104 = vector.broadcast %13 : vector<1x32xf32> to vector<256x32xf32>
    %105 = arith.addf %103, %104 : vector<256x32xf32>
    %cst_123 = arith.constant 0.000000e+00 : f32
    %106 = vector.broadcast %cst_123 : f32 to vector<256x32xf32>
    %107 = arith.maximumf %105, %106 : vector<256x32xf32>
    %108 = tpu.concatenate %40, %63, %86, %107 in 1 : vector<256x32xf32>, vector<256x32xf32>, vector<256x32xf32>, vector<256x32xf32> -> vector<256x128xf32>
    %c0_124 = arith.constant 0 : index
    %c0_125 = arith.constant 0 : index
    %c0_126 = arith.constant 0 : index
    %109 = vector.load %arg6[%c0_124, %c0_125, %c0_126] : memref<1x256x128xf32, #tpu.memory_space<vmem>>, vector<1x256x128xf32>
    %110 = vector.shape_cast %109 : vector<1x256x128xf32> to vector<256x128xf32>
    %111 = vector.shape_cast %108 : vector<256x128xf32> to vector<1x256x128xf32>
    tpu.vector_store %arg6[%c0_124, %c0_125, %c0_126], %111 {strides = array<i32>} : memref<1x256x128xf32, #tpu.memory_space<vmem>>, vector<1x256x128xf32>,
    return
  }
  func.func @transform_0(%arg0: i32) -> (i32, i32, i32) {
    %c0_i32 = arith.constant 0 : i32
    %c0_i32_0 = arith.constant 0 : i32
    %c0_i32_1 = arith.constant 0 : i32
    return %arg0, %c0_i32, %c0_i32_0 : i32, i32, i32
  }
  func.func @transform_1(%arg0: i32) -> (i32, i32) {
    %c0_i32 = arith.constant 0 : i32
    %c0_i32_0 = arith.constant 0 : i32
    %c0_i32_1 = arith.constant 0 : i32
    return %c0_i32, %c0_i32_0 : i32, i32
  }
  func.func @transform_2(%arg0: i32) -> (i32, i32) {
    %c0_i32 = arith.constant 0 : i32
    %c0_i32_0 = arith.constant 0 : i32
    %c0_i32_1 = arith.constant 0 : i32
    return %c0_i32, %c0_i32_0 : i32, i32
  }
  func.func @transform_3(%arg0: i32) -> (i32, i32, i32, i32) {
    %c0_i32 = arith.constant 0 : i32
    %c0_i32_0 = arith.constant 0 : i32
    %c0_i32_1 = arith.constant 0 : i32
    %c0_i32_2 = arith.constant 0 : i32
    %c0_i32_3 = arith.constant 0 : i32
    return %c0_i32, %c0_i32_0, %c0_i32_1, %c0_i32_2 : i32, i32, i32, i32
  }
  func.func @transform_4(%arg0: i32) -> (i32, i32) {
    %c0_i32 = arith.constant 0 : i32
    %c0_i32_0 = arith.constant 0 : i32
    %c0_i32_1 = arith.constant 0 : i32
    return %c0_i32, %c0_i32_0 : i32, i32
  }
  func.func @transform_5(%arg0: i32) -> (i32, i32, i32) {
    %c0_i32 = arith.constant 0 : i32
    %c0_i32_0 = arith.constant 0 : i32
    %c0_i32_1 = arith.constant 0 : i32
    return %arg0, %c0_i32, %c0_i32_0 : i32, i32, i32
  }
}

</mosaic_0001>

<llo_original>
// kernel: decoder_block_forward.1
$region0: #{decoder_block_forward.1}
  #allocation0 [shape = 'u32[]', space=smem, size = 0x4, offset = 0x4, fixed_abs, tag = 'smem constant byte address 0x4 - core index']
  #allocation1 [shape = 'u32[72,128]{1,0:T(1,128)}', space=vmem, size = 0x9000, scoped, tag = 'internal scratch']
  #allocation2 [shape = 'f32[18,18,128]{2,1,0:T(8,128)}', space=vmem, size = 0x36000, scoped, tag = 'scratch operand']
  %s0 = inlined_call_operand.vmem [shape: f32[2,256,32], index: 0, kind: input, shape index: {}]
  %s1 = inlined_call_operand.vmem [shape: f32[32,128], index: 1, kind: input, shape index: {}]
  %s2 = inlined_call_operand.vmem [shape: f32[1,128], index: 2, kind: input, shape index: {}]
  %s3 = inlined_call_operand.vmem [shape: f32[4,4,128,32], index: 3, kind: input, shape index: {}]
  %s4 = inlined_call_operand.vmem [shape: f32[1,32], index: 4, kind: input, shape index: {}]
  %s5 = inlined_call_operand.vmem [shape: f32[2,256,128], index: 5, kind: output, shape index: {}]
  %s6 = sld [smem:[#allocation0]]
  $region53: #{decoder_block_forward.1} parent=0
    _
  %s8 = ssub.s32 1, %s6
  %s9 = scalar_select 0, %s8, %s6
  loop: start=0, step=1, limit=4
  $region2: #{decoder_block_forward.1} parent=0 // loop_pre_header
    _
  $region3: #{decoder_block_forward.1} parent=0 // loop_header
    %s11 = sphi 0, %s15
    %p12 = scmp.ge.s32.totalorder %s11, 4
    %s21 = sphi 0, %s23
    %s24 = sphi 0, %s21
    %s25 = sphi 0, %s24
    %s41 = sphi 0, %s25
    %s45 = sphi 0, %s45
    %s47 = sphi 0, %s45
    %s48 = sphi 0, %s47
    %s62 = sphi 0, %s48
    %s66 = sphi 0, %s66
    %s68 = sphi 0, %s66
    %s69 = sphi 0, %s68
    %s83 = sphi 0, %s69
    %s87 = sphi 0, %s87
    %s89 = sphi 0, %s87
    %s90 = sphi 0, %s89
    %s104 = sphi 0, %s90
    %s108 = sphi 0, %s108
    %s110 = sphi 0, %s108
    %s111 = sphi 0, %s110
    %s125 = sphi 0, %s111
    %s131 = sphi 0, %s133
    %s134 = sphi 0, %s131
    %s135 = sphi 0, %s134
    %s151 = sphi 0, %s135
  $region4: #{decoder_block_forward.1} parent=0 // loop_header_branch
    %14 = sbr.rel (%p12) target = $region8
  $region5: #{decoder_block_forward.1} parent=0 // loop_body
    %s16 = ssub.s32 %s11, 1
    %s17 = ssub.s32 %s11, 2
    %s18 = sadd.s32 %s11, 1
    %s19 = ssub.s32 %s11, %s18
    %p20 = scmp.eq.s32.totalorder %s19, 0
    %s22 = sadd.s32 %s21, 1
    %s23 = scalar_select %p20, %s21, %s22
    %p26 = pneg %p20
    %p27 = scmp.eq.s32.totalorder %s11, 1
    %p28 = por %p26, %p27
    %p29 = scmp.ne.s32.totalorder %s21, %s24
    %p30 = scmp.eq.s32.totalorder %s11, 0
    %p31 = por %p29, %p30
    %p32 = scmp.ne.s32.totalorder %s21, %s24
    %p33 = scmp.eq.s32.totalorder %s16, 1
    %p34 = por %p32, %p33
    %p35 = scmp.ne.s32.totalorder %s24, %s25
    %p36 = scmp.eq.s32.totalorder %s16, 0
    %p37 = por %p35, %p36
    %p38 = scmp.ne.s32.totalorder %s24, %s25
    %p39 = scmp.eq.s32.totalorder %s17, 1
    %p40 = por %p38, %p39
    %p42 = scmp.ne.s32.totalorder %s25, %s41
    %p43 = scmp.eq.s32.totalorder %s17, 0
    %p44 = por %p42, %p43
    %s46 = sadd.s32 %s45, 1
    %p49 = scmp.eq.s32.totalorder %s11, 1
    %p50 = scmp.ne.s32.totalorder %s45, %s47
    %p51 = scmp.eq.s32.totalorder %s11, 0
    %p52 = por %p50, %p51
    %p53 = scmp.ne.s32.totalorder %s45, %s47
    %p54 = scmp.eq.s32.totalorder %s16, 1
    %p55 = por %p53, %p54
    %p56 = scmp.ne.s32.totalorder %s47, %s48
    %p57 = scmp.eq.s32.totalorder %s16, 0
    %p58 = por %p56, %p57
    %p59 = scmp.ne.s32.totalorder %s47, %s48
    %p60 = scmp.eq.s32.totalorder %s17, 1
    %p61 = por %p59, %p60
    %p63 = scmp.ne.s32.totalorder %s48, %s62
    %p64 = scmp.eq.s32.totalorder %s17, 0
    %p65 = por %p63, %p64
    %s67 = sadd.s32 %s66, 1
    %p70 = scmp.eq.s32.totalorder %s11, 1
    %p71 = scmp.ne.s32.totalorder %s66, %s68
    %p72 = scmp.eq.s32.totalorder %s11, 0
    %p73 = por %p71, %p72
    %p74 = scmp.ne.s32.totalorder %s66, %s68
    %p75 = scmp.eq.s32.totalorder %s16, 1
    %p76 = por %p74, %p75
    %p77 = scmp.ne.s32.totalorder %s68, %s69
    %p78 = scmp.eq.s32.totalorder %s16, 0
    %p79 = por %p77, %p78
    %p80 = scmp.ne.s32.totalorder %s68, %s69
    %p81 = scmp.eq.s32.totalorder %s17, 1
    %p82 = por %p80, %p81
    %p84 = scmp.ne.s32.totalorder %s69, %s83
    %p85 = scmp.eq.s32.totalorder %s17, 0
    %p86 = por %p84, %p85
    %s88 = sadd.s32 %s87, 1
    %p91 = scmp.eq.s32.totalorder %s11, 1
    %p92 = scmp.ne.s32.totalorder %s87, %s89
    %p93 = scmp.eq.s32.totalorder %s11, 0
    %p94 = por %p92, %p93
    %p95 = scmp.ne.s32.totalorder %s87, %s89
    %p96 = scmp.eq.s32.totalorder %s16, 1
    %p97 = por %p95, %p96
    %p98 = scmp.ne.s32.totalorder %s89, %s90
    %p99 = scmp.eq.s32.totalorder %s16, 0
    %p100 = por %p98, %p99
    %p101 = scmp.ne.s32.totalorder %s89, %s90
    %p102 = scmp.eq.s32.totalorder %s17, 1
    %p103 = por %p101, %p102
    %p105 = scmp.ne.s32.totalorder %s90, %s104
    %p106 = scmp.eq.s32.totalorder %s17, 0
    %p107 = por %p105, %p106
    %s109 = sadd.s32 %s108, 1
    %p112 = scmp.eq.s32.totalorder %s11, 1
    %p113 = scmp.ne.s32.totalorder %s108, %s110
    %p114 = scmp.eq.s32.totalorder %s11, 0
    %p115 = por %p113, %p114
    %p116 = scmp.ne.s32.totalorder %s108, %s110
    %p117 = scmp.eq.s32.totalorder %s16, 1
    %p118 = por %p116, %p117
    %p119 = scmp.ne.s32.totalorder %s110, %s111
    %p120 = scmp.eq.s32.totalorder %s16, 0
    %p121 = por %p119, %p120
    %p122 = scmp.ne.s32.totalorder %s110, %s111
    %p123 = scmp.eq.s32.totalorder %s17, 1
    %p124 = por %p122, %p123
    %p126 = scmp.ne.s32.totalorder %s111, %s125
    %p127 = scmp.eq.s32.totalorder %s17, 0
    %p128 = por %p126, %p127
    %s129 = ssub.s32 %s11, %s18
    %p130 = scmp.eq.s32.totalorder %s129, 0
    %s132 = sadd.s32 %s131, 1
    %s133 = scalar_select %p130, %s131, %s132
    %p136 = pneg %p130
    %p137 = scmp.eq.s32.totalorder %s11, 1
    %p138 = por %p136, %p137
    %p139 = scmp.ne.s32.totalorder %s131, %s134
    %p140 = scmp.eq.s32.totalorder %s11, 0
    %p141 = por %p139, %p140
    %p142 = scmp.ne.s32.totalorder %s131, %s134
    %p143 = scmp.eq.s32.totalorder %s16, 1
    %p144 = por %p142, %p143
    %p145 = scmp.ne.s32.totalorder %s134, %s135
    %p146 = scmp.eq.s32.totalorder %s16, 0
    %p147 = por %p145, %p146
    %p148 = scmp.ne.s32.totalorder %s134, %s135
    %p149 = scmp.eq.s32.totalorder %s17, 1
    %p150 = por %p148, %p149
    %p152 = scmp.ne.s32.totalorder %s135, %s151
    %p153 = scmp.eq.s32.totalorder %s17, 0
    %p154 = por %p152, %p153
    %p155 = scmp.le.s32.totalorder 1, %s11
    %p156 = scmp.lt.s32.totalorder %s11, 3
    %p157 = pnand %p155, %p156
    %p158 = pneg %p157
    // Predicated region
    $region9: #{decoder_block_forward.1} parent=5 // pred_check
      _
    $region10: #{decoder_block_forward.1} parent=5 // pred_check_branch
      %160 = sbr.rel (%p157) target = $region12
    $region11: #{decoder_block_forward.1} parent=5 // pred_region
      %s161 = ssub.s32 %s11, 1
      // Predicated region
      $region13: #{decoder_block_forward.1} parent=11 // pred_check
        %p162 = pneg %p58
      $region14: #{decoder_block_forward.1} parent=11 // pred_check_branch
        %164 = sbr.rel (%p162) target = $region16
      $region15: #{decoder_block_forward.1} parent=11 // pred_region
        _
      $region16: #{decoder_block_forward.1} parent=11 // pred_fallthru
        _
      // Predicated region
      $region17: #{decoder_block_forward.1} parent=11 // pred_check
        %p165 = pneg %p79
      $region18: #{decoder_block_forward.1} parent=11 // pred_check_branch
        %167 = sbr.rel (%p165) target = $region20
      $region19: #{decoder_block_forward.1} parent=11 // pred_region
        _
      $region20: #{decoder_block_forward.1} parent=11 // pred_fallthru
        _
      // Predicated region
      $region21: #{decoder_block_forward.1} parent=11 // pred_check
        %p168 = pneg %p100
      $region22: #{decoder_block_forward.1} parent=11 // pred_check_branch
        %170 = sbr.rel (%p168) target = $region24
      $region23: #{decoder_block_forward.1} parent=11 // pred_region
        _
      $region24: #{decoder_block_forward.1} parent=11 // pred_fallthru
        _
      // Predicated region
      $region25: #{decoder_block_forward.1} parent=11 // pred_check
        %p171 = pneg %p121
      $region26: #{decoder_block_forward.1} parent=11 // pred_check_branch
        %173 = sbr.rel (%p171) target = $region28
      $region27: #{decoder_block_forward.1} parent=11 // pred_region
        _
      $region28: #{decoder_block_forward.1} parent=11 // pred_fallthru
        _
    $region12: #{decoder_block_forward.1} parent=5 // pred_fallthru
      _
    %p174 = scmp.lt.s32.totalorder %s11, 2
    // Predicated region
    $region29: #{decoder_block_forward.1} parent=5 // pred_check
      %p175 = pneg %p174
    $region30: #{decoder_block_forward.1} parent=5 // pred_check_branch
      %177 = sbr.rel (%p175) target = $region32
    $region31: #{decoder_block_forward.1} parent=5 // pred_region
      // Predicated region
      $region33: #{decoder_block_forward.1} parent=31 // pred_check
        %p178 = pneg %p31
      $region34: #{decoder_block_forward.1} parent=31 // pred_check_branch
        %180 = sbr.rel (%p178) target = $region36
      $region35: #{decoder_block_forward.1} parent=31 // pred_region
        %p181 = scmp.lt.s32.totalorder %s11, 1
        %s182 = scalar_select %p181, %s11, 1
        %s183 = smul.addr %s182, 32
        %s184 = smul.addr %s183, 8
        %s185 = scalar_lea.vmem %s0, %s184
      $region36: #{decoder_block_forward.1} parent=31 // pred_fallthru
        _
    $region32: #{decoder_block_forward.1} parent=5 // pred_fallthru
      _
    %p186 = scmp.le.s32.totalorder 1, %s11
    %p187 = scmp.lt.s32.totalorder %s11, 3
    %p188 = pnand %p186, %p187
    %p189 = pneg %p188
    // Predicated region
    $region37: #{decoder_block_forward.1} parent=5 // pred_check
      _
    $region38: #{decoder_block_forward.1} parent=5 // pred_check_branch
      %191 = sbr.rel (%p188) target = $region40
    $region39: #{decoder_block_forward.1} parent=5 // pred_region
      %s192 = ssub.s32 %s11, 1
      %p193 = scmp.lt.s32.totalorder %s16, 1
      %s194 = scalar_select %p193, %s16, 1
      %s195 = smul.addr %s194, 32
      %s196 = smul.addr %s195, 8
      %s197 = scalar_lea.vmem %s0, %s196
      %p198 = pneg %p37
      %p199 = pneg %p34
      %p200 = pneg %p58
      %p201 = pneg %p55
      %p202 = pneg %p79
      %p203 = pneg %p76
      %p204 = pneg %p100
      %p205 = pneg %p97
      %p206 = pneg %p121
      %p207 = pneg %p118
      %p208 = pneg %p147
      %p209 = pneg %p144
      %p210 = scmp.lt.s32.totalorder %s16, 1
      %s211 = scalar_select %p210, %s16, 1
      %s212 = smul.addr %s211, 32
      %s213 = smul.addr %s212, 8
      %s214 = scalar_lea.vmem %s5, %s213
      %p215 = scmp.lt.s32.totalorder %s16, 1
      %s216 = scalar_select %p215, %s16, 1
      %s217 = smul.addr %s216, 32
      %s218 = smul.addr %s217, 8
      %s219 = scalar_lea.vmem %s0, %s218
      %p220 = scmp.lt.s32.totalorder %s16, 1
      %s221 = scalar_select %p220, %s16, 1
      %s222 = smul.addr %s221, 32
      %s223 = smul.addr %s222, 8
      %s224 = scalar_lea.vmem %s5, %s223
      %v225 = vld [vmem:[%s219] sm:$0xff]
      %v226 = vld [vmem:[%s219 + $0x8] sm:$0xff]
      %v227 = vld [vmem:[%s219 + $0x10] sm:$0xff]
      %v228 = vld [vmem:[%s219 + $0x18] sm:$0xff]
      %v229 = vld [vmem:[%s219 + $0x20] sm:$0xff]
      %v230 = vld [vmem:[%s219 + $0x28] sm:$0xff]
      %v231 = vld [vmem:[%s219 + $0x30] sm:$0xff]
      %v232 = vld [vmem:[%s219 + $0x38] sm:$0xff]
      %v233 = vld [vmem:[%s219 + $0x40] sm:$0xff]
      %v234 = vld [vmem:[%s219 + $0x48] sm:$0xff]
      %v235 = vld [vmem:[%s219 + $0x50] sm:$0xff]
      %v236 = vld [vmem:[%s219 + $0x58] sm:$0xff]
      %v237 = vld [vmem:[%s219 + $0x60] sm:$0xff]
      %v238 = vld [vmem:[%s219 + $0x68] sm:$0xff]
      %v239 = vld [vmem:[%s219 + $0x70] sm:$0xff]
      %v240 = vld [vmem:[%s219 + $0x78] sm:$0xff]
      %v241 = vld [vmem:[%s219 + $0x80] sm:$0xff]
      %v242 = vld [vmem:[%s219 + $0x88] sm:$0xff]
      %v243 = vld [vmem:[%s219 + $0x90] sm:$0xff]
      %v244 = vld [vmem:[%s219 + $0x98] sm:$0xff]
      %v245 = vld [vmem:[%s219 + $0xa0] sm:$0xff]
      %v246 = vld [vmem:[%s219 + $0xa8] sm:$0xff]
      %v247 = vld [vmem:[%s219 + $0xb0] sm:$0xff]
      %v248 = vld [vmem:[%s219 + $0xb8] sm:$0xff]
      %v249 = vld [vmem:[%s219 + $0xc0] sm:$0xff]
      %v250 = vld [vmem:[%s219 + $0xc8] sm:$0xff]
      %v251 = vld [vmem:[%s219 + $0xd0] sm:$0xff]
      %v252 = vld [vmem:[%s219 + $0xd8] sm:$0xff]
      %v253 = vld [vmem:[%s219 + $0xe0] sm:$0xff]
      %v254 = vld [vmem:[%s219 + $0xe8] sm:$0xff]
      %v255 = vld [vmem:[%s219 + $0xf0] sm:$0xff]
      %v256 = vld [vmem:[%s219 + $0xf8] sm:$0xff]
      %v257 = vld [vmem:[%s1] sm:$0xff]
      %v258 = vld [vmem:[%s1 + $0x8] sm:$0xff]
      %v259 = vld [vmem:[%s1 + $0x10] sm:$0xff]
      %v260 = vld [vmem:[%s1 + $0x18] sm:$0xff]
      %v261 = vld [vmem:[%s2] sm:$0x1]
      %v263 = vperm.slane %v261, 0
      %vm265 = vcmask 261120
      %v267 = vsel %vm265, %v225, 0
      %v270 = vsel %vm265, %v226, 0
      %v273 = vsel %vm265, %v227, 0
      %v276 = vsel %vm265, %v228, 0
      %v279 = vsel %vm265, %v229, 0
      %v282 = vsel %vm265, %v230, 0
      %v285 = vsel %vm265, %v231, 0
      %v288 = vsel %vm265, %v232, 0
      %v291 = vsel %vm265, %v233, 0
      %v294 = vsel %vm265, %v234, 0
      %v297 = vsel %vm265, %v235, 0
      %v300 = vsel %vm265, %v236, 0
      %v303 = vsel %vm265, %v237, 0
      %v306 = vsel %vm265, %v238, 0
      %v309 = vsel %vm265, %v239, 0
      %v312 = vsel %vm265, %v240, 0
      %v315 = vsel %vm265, %v241, 0
      %v318 = vsel %vm265, %v242, 0
      %v321 = vsel %vm265, %v243, 0
      %v324 = vsel %vm265, %v244, 0
      %v327 = vsel %vm265, %v245, 0
      %v330 = vsel %vm265, %v246, 0
      %v333 = vsel %vm265, %v247, 0
      %v336 = vsel %vm265, %v248, 0
      %v339 = vsel %vm265, %v249, 0
      %v342 = vsel %vm265, %v250, 0
      %v345 = vsel %vm265, %v251, 0
      %v348 = vsel %vm265, %v252, 0
      %v351 = vsel %vm265, %v253, 0
      %v354 = vsel %vm265, %v254, 0
      %v357 = vsel %vm265, %v255, 0
      %v360 = vsel %vm265, %v256, 0
      %362 = vmatpush.msra.mxu0 0.0
      %363 = vmatpush.msra.mxu0 0.0
      %364 = vmatpush.msra.mxu0 0.0
      %365 = vmatpush.msra.mxu0 0.0
      %366 = vmatpush.msra.mxu0 0.0
      %367 = vmatpush.msra.mxu0 0.0
      %368 = vmatpush.msra.mxu0 0.0
      %369 = vmatpush.msra.mxu0 0.0
      %370 = vmatpush.msra.mxu0 0.0
      %371 = vmatpush.msra.mxu0 0.0
      %372 = vmatpush.msra.mxu0 0.0
      %373 = vmatpush.msra.mxu0 0.0
      %374 = vmatpush.msra.mxu0 %v260
      %375 = vmatpush.msra.mxu0 %v259
      %376 = vmatpush.msra.mxu0 %v258
      %377 = vmatpush.msra.mxu0 %v257
      %378 = vmatmul.f32.gmra.mxu0 %v267
      %v379 = vpop.f32.mrf.mxu0
      %v380 = vadd.f32 %v263, %v379
      %381 = vmatmul.f32.gmra.mxu0 %v270
      %v382 = vpop.f32.mrf.mxu0
      %v383 = vadd.f32 %v263, %v382
      %384 = vmatmul.f32.gmra.mxu0 %v273
      %v385 = vpop.f32.mrf.mxu0
      %v386 = vadd.f32 %v263, %v385
      %387 = vmatmul.f32.gmra.mxu0 %v276
      %v388 = vpop.f32.mrf.mxu0
      %v389 = vadd.f32 %v263, %v388
      %390 = vmatmul.f32.gmra.mxu0 %v279
      %v391 = vpop.f32.mrf.mxu0
      %v392 = vadd.f32 %v263, %v391
      %393 = vmatmul.f32.gmra.mxu0 %v282
      %v394 = vpop.f32.mrf.mxu0
      %v395 = vadd.f32 %v263, %v394
      %396 = vmatmul.f32.gmra.mxu0 %v285
      %v397 = vpop.f32.mrf.mxu0
      %v398 = vadd.f32 %v263, %v397
      %399 = vmatmul.f32.gmra.mxu0 %v288
      %v400 = vpop.f32.mrf.mxu0
      %v401 = vadd.f32 %v263, %v400
      %402 = vmatmul.f32.gmra.mxu0 %v291
      %v403 = vpop.f32.mrf.mxu0
      %v404 = vadd.f32 %v263, %v403
      %405 = vmatmul.f32.gmra.mxu0 %v294
      %v406 = vpop.f32.mrf.mxu0
      %v407 = vadd.f32 %v263, %v406
      %408 = vmatmul.f32.gmra.mxu0 %v297
      %v409 = vpop.f32.mrf.mxu0
      %v410 = vadd.f32 %v263, %v409
      %411 = vmatmul.f32.gmra.mxu0 %v300
      %v412 = vpop.f32.mrf.mxu0
      %v413 = vadd.f32 %v263, %v412
      %414 = vmatmul.f32.gmra.mxu0 %v303
      %v415 = vpop.f32.mrf.mxu0
      %v416 = vadd.f32 %v263, %v415
      %417 = vmatmul.f32.gmra.mxu0 %v306
      %v418 = vpop.f32.mrf.mxu0
      %v419 = vadd.f32 %v263, %v418
      %420 = vmatmul.f32.gmra.mxu0 %v309
      %v421 = vpop.f32.mrf.mxu0
      %v422 = vadd.f32 %v263, %v421
      %423 = vmatmul.f32.gmra.mxu0 %v312
      %v424 = vpop.f32.mrf.mxu0
      %v425 = vadd.f32 %v263, %v424
      %426 = vmatmul.f32.gmra.mxu0 %v315
      %v427 = vpop.f32.mrf.mxu0
      %v428 = vadd.f32 %v263, %v427
      %429 = vmatmul.f32.gmra.mxu0 %v318
      %v430 = vpop.f32.mrf.mxu0
      %v431 = vadd.f32 %v263, %v430
      %432 = vmatmul.f32.gmra.mxu0 %v321
      %v433 = vpop.f32.mrf.mxu0
      %v434 = vadd.f32 %v263, %v433
      %435 = vmatmul.f32.gmra.mxu0 %v324
      %v436 = vpop.f32.mrf.mxu0
      %v437 = vadd.f32 %v263, %v436
      %438 = vmatmul.f32.gmra.mxu0 %v327
      %v439 = vpop.f32.mrf.mxu0
      %v440 = vadd.f32 %v263, %v439
      %441 = vmatmul.f32.gmra.mxu0 %v330
      %v442 = vpop.f32.mrf.mxu0
      %v443 = vadd.f32 %v263, %v442
      %444 = vmatmul.f32.gmra.mxu0 %v333
      %v445 = vpop.f32.mrf.mxu0
      %v446 = vadd.f32 %v263, %v445
      %447 = vmatmul.f32.gmra.mxu0 %v336
      %v448 = vpop.f32.mrf.mxu0
      %v449 = vadd.f32 %v263, %v448
      %450 = vmatmul.f32.gmra.mxu0 %v339
      %v451 = vpop.f32.mrf.mxu0
      %v452 = vadd.f32 %v263, %v451
      %453 = vmatmul.f32.gmra.mxu0 %v342
      %v454 = vpop.f32.mrf.mxu0
      %v455 = vadd.f32 %v263, %v454
      %456 = vmatmul.f32.gmra.mxu0 %v345
      %v457 = vpop.f32.mrf.mxu0
      %v458 = vadd.f32 %v263, %v457
      %459 = vmatmul.f32.gmra.mxu0 %v348
      %v460 = vpop.f32.mrf.mxu0
      %v461 = vadd.f32 %v263, %v460
      %462 = vmatmul.f32.gmra.mxu0 %v351
      %v463 = vpop.f32.mrf.mxu0
      %v464 = vadd.f32 %v263, %v463
      %465 = vmatmul.f32.gmra.mxu0 %v354
      %v466 = vpop.f32.mrf.mxu0
      %v467 = vadd.f32 %v263, %v466
      %468 = vmatmul.f32.gmra.mxu0 %v357
      %v469 = vpop.f32.mrf.mxu0
      %v470 = vadd.f32 %v263, %v469
      %471 = vmatmul.f32.gmra.mxu0 %v360
      %v472 = vpop.f32.mrf.mxu0
      %v473 = vadd.f32 %v263, %v472
      %474 = vdwg.mxu0
      %v475 = vmax.f32 %v380, 0.0
      %v476 = vmax.f32 %v383, 0.0
      %v477 = vmax.f32 %v386, 0.0
      %v478 = vmax.f32 %v389, 0.0
      %v479 = vmax.f32 %v392, 0.0
      %v480 = vmax.f32 %v395, 0.0
      %v481 = vmax.f32 %v398, 0.0
      %v482 = vmax.f32 %v401, 0.0
      %v483 = vmax.f32 %v404, 0.0
      %v484 = vmax.f32 %v407, 0.0
      %v485 = vmax.f32 %v410, 0.0
      %v486 = vmax.f32 %v413, 0.0
      %v487 = vmax.f32 %v416, 0.0
      %v488 = vmax.f32 %v419, 0.0
      %v489 = vmax.f32 %v422, 0.0
      %v490 = vmax.f32 %v425, 0.0
      %v491 = vmax.f32 %v428, 0.0
      %v492 = vmax.f32 %v431, 0.0
      %v493 = vmax.f32 %v434, 0.0
      %v494 = vmax.f32 %v437, 0.0
      %v495 = vmax.f32 %v440, 0.0
      %v496 = vmax.f32 %v443, 0.0
      %v497 = vmax.f32 %v446, 0.0
      %v498 = vmax.f32 %v449, 0.0
      %v499 = vmax.f32 %v452, 0.0
      %v500 = vmax.f32 %v455, 0.0
      %v501 = vmax.f32 %v458, 0.0
      %v502 = vmax.f32 %v461, 0.0
      %v503 = vmax.f32 %v464, 0.0
      %v504 = vmax.f32 %v467, 0.0
      %v505 = vmax.f32 %v470, 0.0
      %v506 = vmax.f32 %v473, 0.0
      %507 = vst [vmem:[#allocation2] sm:$0xff] 0.0
      %508 = vst [vmem:[#allocation2 + $0x8] sm:$0xff] 0.0
      %509 = vst [vmem:[#allocation2 + $0x10] sm:$0x3] 0.0
      %510 = vst [vmem:[#allocation2 + $0x18] sm:$0xff] 0.0
      %511 = vst [vmem:[#allocation2 + $0x20] sm:$0xff] 0.0
      %512 = vst [vmem:[#allocation2 + $0x28] sm:$0x3] 0.0
      %513 = vst [vmem:[#allocation2 + $0x30] sm:$0xff] 0.0
      %514 = vst [vmem:[#allocation2 + $0x38] sm:$0xff] 0.0
      %515 = vst [vmem:[#allocation2 + $0x40] sm:$0x3] 0.0
      %516 = vst [vmem:[#allocation2 + $0x48] sm:$0xff] 0.0
      %517 = vst [vmem:[#allocation2 + $0x50] sm:$0xff] 0.0
      %518 = vst [vmem:[#allocation2 + $0x58] sm:$0x3] 0.0
      %519 = vst [vmem:[#allocation2 + $0x60] sm:$0xff] 0.0
      %520 = vst [vmem:[#allocation2 + $0x68] sm:$0xff] 0.0
      %521 = vst [vmem:[#allocation2 + $0x70] sm:$0x3] 0.0
      %522 = vst [vmem:[#allocation2 + $0x78] sm:$0xff] 0.0
      %523 = vst [vmem:[#allocation2 + $0x80] sm:$0xff] 0.0
      %524 = vst [vmem:[#allocation2 + $0x88] sm:$0x3] 0.0
      %525 = vst [vmem:[#allocation2 + $0x90] sm:$0xff] 0.0
      %526 = vst [vmem:[#allocation2 + $0x98] sm:$0xff] 0.0
      %527 = vst [vmem:[#allocation2 + $0xa0] sm:$0x3] 0.0
      %528 = vst [vmem:[#allocation2 + $0xa8] sm:$0xff] 0.0
      %529 = vst [vmem:[#allocation2 + $0xb0] sm:$0xff] 0.0
      %530 = vst [vmem:[#allocation2 + $0xb8] sm:$0x3] 0.0
      %531 = vst [vmem:[#allocation2 + $0xc0] sm:$0xff] 0.0
      %532 = vst [vmem:[#allocation2 + $0xc8] sm:$0xff] 0.0
      %533 = vst [vmem:[#allocation2 + $0xd0] sm:$0x3] 0.0
      %534 = vst [vmem:[#allocation2 + $0xd8] sm:$0xff] 0.0
      %535 = vst [vmem:[#allocation2 + $0xe0] sm:$0xff] 0.0
      %536 = vst [vmem:[#allocation2 + $0xe8] sm:$0x3] 0.0
      %537 = vst [vmem:[#allocation2 + $0xf0] sm:$0xff] 0.0
      %538 = vst [vmem:[#allocation2 + $0xf8] sm:$0xff] 0.0
      %539 = vst [vmem:[#allocation2 + $0x100] sm:$0x3] 0.0
      %540 = vst [vmem:[#allocation2 + $0x108] sm:$0xff] 0.0
      %541 = vst [vmem:[#allocation2 + $0x110] sm:$0xff] 0.0
      %542 = vst [vmem:[#allocation2 + $0x118] sm:$0x3] 0.0
      %543 = vst [vmem:[#allocation2 + $0x120] sm:$0xff] 0.0
      %544 = vst [vmem:[#allocation2 + $0x128] sm:$0xff] 0.0
      %545 = vst [vmem:[#allocation2 + $0x130] sm:$0x3] 0.0
      %546 = vst [vmem:[#allocation2 + $0x138] sm:$0xff] 0.0
      %547 = vst [vmem:[#allocation2 + $0x140] sm:$0xff] 0.0
      %548 = vst [vmem:[#allocation2 + $0x148] sm:$0x3] 0.0
      %549 = vst [vmem:[#allocation2 + $0x150] sm:$0xff] 0.0
      %550 = vst [vmem:[#allocation2 + $0x158] sm:$0xff] 0.0
      %551 = vst [vmem:[#allocation2 + $0x160] sm:$0x3] 0.0
      %552 = vst [vmem:[#allocation2 + $0x168] sm:$0xff] 0.0
      %553 = vst [vmem:[#allocation2 + $0x170] sm:$0xff] 0.0
      %554 = vst [vmem:[#allocation2 + $0x178] sm:$0x3] 0.0
      %555 = vst [vmem:[#allocation2 + $0x180] sm:$0xff] 0.0
      %556 = vst [vmem:[#allocation2 + $0x188] sm:$0xff] 0.0
      %557 = vst [vmem:[#allocation2 + $0x190] sm:$0x3] 0.0
      %558 = vst [vmem:[#allocation2 + $0x198] sm:$0xff] 0.0
      %559 = vst [vmem:[#allocation2 + $0x1a0] sm:$0xff] 0.0
      %560 = vst [vmem:[#allocation2 + $0x1a8] sm:$0x3] 0.0
      %s561 = scalar_lea.vmem [#allocation2], 24
      %562 = vst [vmem:[%s561 + $0x1] sm:$0xff] %v475
      %563 = vst [vmem:[%s561 + $0x9] sm:$0xff] %v476
      %564 = vst [vmem:[%s561 + $0x19] sm:$0xff] %v477
      %565 = vst [vmem:[%s561 + $0x21] sm:$0xff] %v478
      %566 = vst [vmem:[%s561 + $0x31] sm:$0xff] %v479
      %567 = vst [vmem:[%s561 + $0x39] sm:$0xff] %v480
      %568 = vst [vmem:[%s561 + $0x49] sm:$0xff] %v481
      %569 = vst [vmem:[%s561 + $0x51] sm:$0xff] %v482
      %570 = vst [vmem:[%s561 + $0x61] sm:$0xff] %v483
      %571 = vst [vmem:[%s561 + $0x69] sm:$0xff] %v484
      %572 = vst [vmem:[%s561 + $0x79] sm:$0xff] %v485
      %573 = vst [vmem:[%s561 + $0x81] sm:$0xff] %v486
      %574 = vst [vmem:[%s561 + $0x91] sm:$0xff] %v487
      %575 = vst [vmem:[%s561 + $0x99] sm:$0xff] %v488
      %576 = vst [vmem:[%s561 + $0xa9] sm:$0xff] %v489
      %577 = vst [vmem:[%s561 + $0xb1] sm:$0xff] %v490
      %578 = vst [vmem:[%s561 + $0xc1] sm:$0xff] %v491
      %579 = vst [vmem:[%s561 + $0xc9] sm:$0xff] %v492
      %580 = vst [vmem:[%s561 + $0xd9] sm:$0xff] %v493
      %581 = vst [vmem:[%s561 + $0xe1] sm:$0xff] %v494
      %582 = vst [vmem:[%s561 + $0xf1] sm:$0xff] %v495
      %583 = vst [vmem:[%s561 + $0xf9] sm:$0xff] %v496
      %584 = vst [vmem:[%s561 + $0x109] sm:$0xff] %v497
      %585 = vst [vmem:[%s561 + $0x111] sm:$0xff] %v498
      %586 = vst [vmem:[%s561 + $0x121] sm:$0xff] %v499
      %587 = vst [vmem:[%s561 + $0x129] sm:$0xff] %v500
      %588 = vst [vmem:[%s561 + $0x139] sm:$0xff] %v501
      %589 = vst [vmem:[%s561 + $0x141] sm:$0xff] %v502
      %590 = vst [vmem:[%s561 + $0x151] sm:$0xff] %v503
      %591 = vst [vmem:[%s561 + $0x159] sm:$0xff] %v504
      %592 = vst [vmem:[%s561 + $0x169] sm:$0xff] %v505
      %593 = vst [vmem:[%s561 + $0x171] sm:$0xff] %v506
      %v594 = vld [vmem:[%s4] sm:$0x1]
      %v595 = vld [vmem:[%s561 + $0x1] sm:$0xff]
      %v596 = vld [vmem:[%s561 + $0x9] sm:$0xff]
      %v597 = vld [vmem:[%s561 + $0x19] sm:$0xff]
      %v598 = vld [vmem:[%s561 + $0x21] sm:$0xff]
      %v599 = vld [vmem:[%s561 + $0x31] sm:$0xff]
      %v600 = vld [vmem:[%s561 + $0x39] sm:$0xff]
      %v601 = vld [vmem:[%s561 + $0x49] sm:$0xff]
      %v602 = vld [vmem:[%s561 + $0x51] sm:$0xff]
      %v603 = vld [vmem:[%s561 + $0x61] sm:$0xff]
      %v604 = vld [vmem:[%s561 + $0x69] sm:$0xff]
      %v605 = vld [vmem:[%s561 + $0x79] sm:$0xff]
      %v606 = vld [vmem:[%s561 + $0x81] sm:$0xff]
      %v607 = vld [vmem:[%s561 + $0x91] sm:$0xff]
      %v608 = vld [vmem:[%s561 + $0x99] sm:$0xff]
      %v609 = vld [vmem:[%s561 + $0xa9] sm:$0xff]
      %v610 = vld [vmem:[%s561 + $0xb1] sm:$0xff]
      %v611 = vld [vmem:[%s561 + $0xc1] sm:$0xff]
      %v612 = vld [vmem:[%s561 + $0xc9] sm:$0xff]
      %v613 = vld [vmem:[%s561 + $0xd9] sm:$0xff]
      %v614 = vld [vmem:[%s561 + $0xe1] sm:$0xff]
      %v615 = vld [vmem:[%s561 + $0xf1] sm:$0xff]
      %v616 = vld [vmem:[%s561 + $0xf9] sm:$0xff]
      %v617 = vld [vmem:[%s561 + $0x109] sm:$0xff]
      %v618 = vld [vmem:[%s561 + $0x111] sm:$0xff]
      %v619 = vld [vmem:[%s561 + $0x121] sm:$0xff]
      %v620 = vld [vmem:[%s561 + $0x129] sm:$0xff]
      %v621 = vld [vmem:[%s561 + $0x139] sm:$0xff]
      %v622 = vld [vmem:[%s561 + $0x141] sm:$0xff]
      %v623 = vld [vmem:[%s561 + $0x151] sm:$0xff]
      %v624 = vld [vmem:[%s561 + $0x159] sm:$0xff]
      %v625 = vld [vmem:[%s561 + $0x169] sm:$0xff]
      %v626 = vld [vmem:[%s561 + $0x171] sm:$0xff]
      %v627 = vld [vmem:[%s3] sm:$0xff]
      %v628 = vld [vmem:[%s3 + $0x8] sm:$0xff]
      %v629 = vld [vmem:[%s3 + $0x10] sm:$0xff]
      %v630 = vld [vmem:[%s3 + $0x18] sm:$0xff]
      %v631 = vld [vmem:[%s3 + $0x20] sm:$0xff]
      %v632 = vld [vmem:[%s3 + $0x28] sm:$0xff]
      %v633 = vld [vmem:[%s3 + $0x30] sm:$0xff]
      %v634 = vld [vmem:[%s3 + $0x38] sm:$0xff]
      %v635 = vld [vmem:[%s3 + $0x40] sm:$0xff]
      %v636 = vld [vmem:[%s3 + $0x48] sm:$0xff]
      %v637 = vld [vmem:[%s3 + $0x50] sm:$0xff]
      %v638 = vld [vmem:[%s3 + $0x58] sm:$0xff]
      %v639 = vld [vmem:[%s3 + $0x60] sm:$0xff]
      %v640 = vld [vmem:[%s3 + $0x68] sm:$0xff]
      %v641 = vld [vmem:[%s3 + $0x70] sm:$0xff]
      %v642 = vld [vmem:[%s3 + $0x78] sm:$0xff]
      %v643 = vld [vmem:[%s561] sm:$0xff]
      %v644 = vld [vmem:[%s561 + $0x8] sm:$0xff]
      %v645 = vld [vmem:[%s561 + $0x18] sm:$0xff]
      %v646 = vld [vmem:[%s561 + $0x20] sm:$0xff]
      %v647 = vld [vmem:[%s561 + $0x30] sm:$0xff]
      %v648 = vld [vmem:[%s561 + $0x38] sm:$0xff]
      %v649 = vld [vmem:[%s561 + $0x48] sm:$0xff]
      %v650 = vld [vmem:[%s561 + $0x50] sm:$0xff]
      %v651 = vld [vmem:[%s561 + $0x60] sm:$0xff]
      %v652 = vld [vmem:[%s561 + $0x68] sm:$0xff]
      %v653 = vld [vmem:[%s561 + $0x78] sm:$0xff]
      %v654 = vld [vmem:[%s561 + $0x80] sm:$0xff]
      %v655 = vld [vmem:[%s561 + $0x90] sm:$0xff]
      %v656 = vld [vmem:[%s561 + $0x98] sm:$0xff]
      %v657 = vld [vmem:[%s561 + $0xa8] sm:$0xff]
      %v658 = vld [vmem:[%s561 + $0xb0] sm:$0xff]
      %v659 = vld [vmem:[%s561 + $0xc0] sm:$0xff]
      %v660 = vld [vmem:[%s561 + $0xc8] sm:$0xff]
      %v661 = vld [vmem:[%s561 + $0xd8] sm:$0xff]
      %v662 = vld [vmem:[%s561 + $0xe0] sm:$0xff]
      %v663 = vld [vmem:[%s561 + $0xf0] sm:$0xff]
      %v664 = vld [vmem:[%s561 + $0xf8] sm:$0xff]
      %v665 = vld [vmem:[%s561 + $0x108] sm:$0xff]
      %v666 = vld [vmem:[%s561 + $0x110] sm:$0xff]
      %v667 = vld [vmem:[%s561 + $0x120] sm:$0xff]
      %v668 = vld [vmem:[%s561 + $0x128] sm:$0xff]
      %v669 = vld [vmem:[%s561 + $0x138] sm:$0xff]
      %v670 = vld [vmem:[%s561 + $0x140] sm:$0xff]
      %v671 = vld [vmem:[%s561 + $0x150] sm:$0xff]
      %v672 = vld [vmem:[%s561 + $0x158] sm:$0xff]
      %v673 = vld [vmem:[%s561 + $0x168] sm:$0xff]
      %v674 = vld [vmem:[%s561 + $0x170] sm:$0xff]
      %s675 = scalar_lea.vmem %s3, 128
      %v676 = vld [vmem:[%s675] sm:$0xff]
      %v677 = vld [vmem:[%s675 + $0x8] sm:$0xff]
      %v678 = vld [vmem:[%s675 + $0x10] sm:$0xff]
      %v679 = vld [vmem:[%s675 + $0x18] sm:$0xff]
      %v680 = vld [vmem:[%s675 + $0x20] sm:$0xff]
      %v681 = vld [vmem:[%s675 + $0x28] sm:$0xff]
      %v682 = vld [vmem:[%s675 + $0x30] sm:$0xff]
      %v683 = vld [vmem:[%s675 + $0x38] sm:$0xff]
      %v684 = vld [vmem:[%s675 + $0x40] sm:$0xff]
      %v685 = vld [vmem:[%s675 + $0x48] sm:$0xff]
      %v686 = vld [vmem:[%s675 + $0x50] sm:$0xff]
      %v687 = vld [vmem:[%s675 + $0x58] sm:$0xff]
      %v688 = vld [vmem:[%s675 + $0x60] sm:$0xff]
      %v689 = vld [vmem:[%s675 + $0x68] sm:$0xff]
      %v690 = vld [vmem:[%s675 + $0x70] sm:$0xff]
      %v691 = vld [vmem:[%s675 + $0x78] sm:$0xff]
      %692 = vmatpush.msra.mxu0 %v691
      %693 = vmatpush.msra.mxu0 %v690
      %694 = vmatpush.msra.mxu0 %v689
      %695 = vmatpush.msra.mxu0 %v688
      %696 = vmatpush.msra.mxu0 %v687
      %697 = vmatpush.msra.mxu0 %v686
      %698 = vmatpush.msra.mxu0 %v685
      %699 = vmatpush.msra.mxu0 %v684
      %700 = vmatpush.msra.mxu0 %v683
      %701 = vmatpush.msra.mxu0 %v682
      %702 = vmatpush.msra.mxu0 %v681
      %703 = vmatpush.msra.mxu0 %v680
      %704 = vmatpush.msra.mxu0 %v679
      %705 = vmatpush.msra.mxu0 %v678
      %706 = vmatpush.msra.mxu0 %v677
      %707 = vmatpush.msra.mxu0 %v676
      %708 = vmatmul.f32.gmra.mxu0 %v643
      %v709 = vpop.f32.mrf.mxu0
      %v710 = vadd.f32 0.0, %v709
      %711 = vmatmul.f32.gmra.mxu0 %v644
      %v712 = vpop.f32.mrf.mxu0
      %v713 = vadd.f32 0.0, %v712
      %714 = vmatmul.f32.gmra.mxu0 %v645
      %v715 = vpop.f32.mrf.mxu0
      %v716 = vadd.f32 0.0, %v715
      %717 = vmatmul.f32.gmra.mxu0 %v646
      %v718 = vpop.f32.mrf.mxu0
      %v719 = vadd.f32 0.0, %v718
      %720 = vmatmul.f32.gmra.mxu0 %v647
      %v721 = vpop.f32.mrf.mxu0
      %v722 = vadd.f32 0.0, %v721
      %723 = vmatmul.f32.gmra.mxu0 %v648
      %v724 = vpop.f32.mrf.mxu0
      %v725 = vadd.f32 0.0, %v724
      %726 = vmatmul.f32.gmra.mxu0 %v649
      %v727 = vpop.f32.mrf.mxu0
      %v728 = vadd.f32 0.0, %v727
      %729 = vmatmul.f32.gmra.mxu0 %v650
      %v730 = vpop.f32.mrf.mxu0
      %v731 = vadd.f32 0.0, %v730
      %732 = vmatmul.f32.gmra.mxu0 %v651
      %v733 = vpop.f32.mrf.mxu0
      %v734 = vadd.f32 0.0, %v733
      %735 = vmatmul.f32.gmra.mxu0 %v652
      %v736 = vpop.f32.mrf.mxu0
      %v737 = vadd.f32 0.0, %v736
      %738 = vmatmul.f32.gmra.mxu0 %v653
      %v739 = vpop.f32.mrf.mxu0
      %v740 = vadd.f32 0.0, %v739
      %741 = vmatmul.f32.gmra.mxu0 %v654
      %v742 = vpop.f32.mrf.mxu0
      %v743 = vadd.f32 0.0, %v742
      %744 = vmatmul.f32.gmra.mxu0 %v655
      %v745 = vpop.f32.mrf.mxu0
      %v746 = vadd.f32 0.0, %v745
      %747 = vmatmul.f32.gmra.mxu0 %v656
      %v748 = vpop.f32.mrf.mxu0
      %v749 = vadd.f32 0.0, %v748
      %750 = vmatmul.f32.gmra.mxu0 %v657
      %v751 = vpop.f32.mrf.mxu0
      %v752 = vadd.f32 0.0, %v751
      %753 = vmatmul.f32.gmra.mxu0 %v658
      %v754 = vpop.f32.mrf.mxu0
      %v755 = vadd.f32 0.0, %v754
      %756 = vmatmul.f32.gmra.mxu0 %v659
      %v757 = vpop.f32.mrf.mxu0
      %v758 = vadd.f32 0.0, %v757
      %759 = vmatmul.f32.gmra.mxu0 %v660
      %v760 = vpop.f32.mrf.mxu0
      %v761 = vadd.f32 0.0, %v760
      %762 = vmatmul.f32.gmra.mxu0 %v661
      %v763 = vpop.f32.mrf.mxu0
      %v764 = vadd.f32 0.0, %v763
      %765 = vmatmul.f32.gmra.mxu0 %v662
      %v766 = vpop.f32.mrf.mxu0
      %v767 = vadd.f32 0.0, %v766
      %768 = vmatmul.f32.gmra.mxu0 %v663
      %v769 = vpop.f32.mrf.mxu0
      %v770 = vadd.f32 0.0, %v769
      %771 = vmatmul.f32.gmra.mxu0 %v664
      %v772 = vpop.f32.mrf.mxu0
      %v773 = vadd.f32 0.0, %v772
      %774 = vmatmul.f32.gmra.mxu0 %v665
      %v775 = vpop.f32.mrf.mxu0
      %v776 = vadd.f32 0.0, %v775
      %777 = vmatmul.f32.gmra.mxu0 %v666
      %v778 = vpop.f32.mrf.mxu0
      %v779 = vadd.f32 0.0, %v778
      %780 = vmatmul.f32.gmra.mxu0 %v667
      %v781 = vpop.f32.mrf.mxu0
      %v782 = vadd.f32 0.0, %v781
      %783 = vmatmul.f32.gmra.mxu0 %v668
      %v784 = vpop.f32.mrf.mxu0
      %v785 = vadd.f32 0.0, %v784
      %786 = vmatmul.f32.gmra.mxu0 %v669
      %v787 = vpop.f32.mrf.mxu0
      %v788 = vadd.f32 0.0, %v787
      %789 = vmatmul.f32.gmra.mxu0 %v670
      %v790 = vpop.f32.mrf.mxu0
      %v791 = vadd.f32 0.0, %v790
      %792 = vmatmul.f32.gmra.mxu0 %v671
      %v793 = vpop.f32.mrf.mxu0
      %v794 = vadd.f32 0.0, %v793
      %795 = vmatmul.f32.gmra.mxu0 %v672
      %v796 = vpop.f32.mrf.mxu0
      %v797 = vadd.f32 0.0, %v796
      %798 = vmatmul.f32.gmra.mxu0 %v673
      %v799 = vpop.f32.mrf.mxu0
      %v800 = vadd.f32 0.0, %v799
      %801 = vmatmul.f32.gmra.mxu0 %v674
      %v802 = vpop.f32.mrf.mxu0
      %v803 = vadd.f32 0.0, %v802
      %804 = vdwg.mxu0
      %805 = vmatpush.msra.mxu0 %v642
      %806 = vmatpush.msra.mxu0 %v641
      %807 = vmatpush.msra.mxu0 %v640
      %808 = vmatpush.msra.mxu0 %v639
      %809 = vmatpush.msra.mxu0 %v638
      %810 = vmatpush.msra.mxu0 %v637
      %811 = vmatpush.msra.mxu0 %v636
      %812 = vmatpush.msra.mxu0 %v635
      %813 = vmatpush.msra.mxu0 %v634
      %814 = vmatpush.msra.mxu0 %v633
      %815 = vmatpush.msra.mxu0 %v632
      %816 = vmatpush.msra.mxu0 %v631
      %817 = vmatpush.msra.mxu0 %v630
      %818 = vmatpush.msra.mxu0 %v629
      %819 = vmatpush.msra.mxu0 %v628
      %820 = vmatpush.msra.mxu0 %v627
      %821 = vmatmul.f32.gmra.mxu0 %v595
      %v822 = vpop.f32.mrf.mxu0
      %v823 = vadd.f32 %v710, %v822
      %824 = vmatmul.f32.gmra.mxu0 %v596
      %v825 = vpop.f32.mrf.mxu0
      %v826 = vadd.f32 %v713, %v825
      %827 = vmatmul.f32.gmra.mxu0 %v597
      %v828 = vpop.f32.mrf.mxu0
      %v829 = vadd.f32 %v716, %v828
      %830 = vmatmul.f32.gmra.mxu0 %v598
      %v831 = vpop.f32.mrf.mxu0
      %v832 = vadd.f32 %v719, %v831
      %833 = vmatmul.f32.gmra.mxu0 %v599
      %v834 = vpop.f32.mrf.mxu0
      %v835 = vadd.f32 %v722, %v834
      %836 = vmatmul.f32.gmra.mxu0 %v600
      %v837 = vpop.f32.mrf.mxu0
      %v838 = vadd.f32 %v725, %v837
      %839 = vmatmul.f32.gmra.mxu0 %v601
      %v840 = vpop.f32.mrf.mxu0
      %v841 = vadd.f32 %v728, %v840
      %842 = vmatmul.f32.gmra.mxu0 %v602
      %v843 = vpop.f32.mrf.mxu0
      %v844 = vadd.f32 %v731, %v843
      %845 = vmatmul.f32.gmra.mxu0 %v603
      %v846 = vpop.f32.mrf.mxu0
      %v847 = vadd.f32 %v734, %v846
      %848 = vmatmul.f32.gmra.mxu0 %v604
      %v849 = vpop.f32.mrf.mxu0
      %v850 = vadd.f32 %v737, %v849
      %851 = vmatmul.f32.gmra.mxu0 %v605
      %v852 = vpop.f32.mrf.mxu0
      %v853 = vadd.f32 %v740, %v852
      %854 = vmatmul.f32.gmra.mxu0 %v606
      %v855 = vpop.f32.mrf.mxu0
      %v856 = vadd.f32 %v743, %v855
      %857 = vmatmul.f32.gmra.mxu0 %v607
      %v858 = vpop.f32.mrf.mxu0
      %v859 = vadd.f32 %v746, %v858
      %860 = vmatmul.f32.gmra.mxu0 %v608
      %v861 = vpop.f32.mrf.mxu0
      %v862 = vadd.f32 %v749, %v861
      %863 = vmatmul.f32.gmra.mxu0 %v609
      %v864 = vpop.f32.mrf.mxu0
      %v865 = vadd.f32 %v752, %v864
      %866 = vmatmul.f32.gmra.mxu0 %v610
      %v867 = vpop.f32.mrf.mxu0
      %v868 = vadd.f32 %v755, %v867
      %869 = vmatmul.f32.gmra.mxu0 %v611
      %v870 = vpop.f32.mrf.mxu0
      %v871 = vadd.f32 %v758, %v870
      %872 = vmatmul.f32.gmra.mxu0 %v612
      %v873 = vpop.f32.mrf.mxu0
      %v874 = vadd.f32 %v761, %v873
      %875 = vmatmul.f32.gmra.mxu0 %v613
      %v876 = vpop.f32.mrf.mxu0
      %v877 = vadd.f32 %v764, %v876
      %878 = vmatmul.f32.gmra.mxu0 %v614
      %v879 = vpop.f32.mrf.mxu0
      %v880 = vadd.f32 %v767, %v879
      %881 = vmatmul.f32.gmra.mxu0 %v615
      %v882 = vpop.f32.mrf.mxu0
      %v883 = vadd.f32 %v770, %v882
      %884 = vmatmul.f32.gmra.mxu0 %v616
      %v885 = vpop.f32.mrf.mxu0
      %v886 = vadd.f32 %v773, %v885
      %887 = vmatmul.f32.gmra.mxu0 %v617
      %v888 = vpop.f32.mrf.mxu0
      %v889 = vadd.f32 %v776, %v888
      %890 = vmatmul.f32.gmra.mxu0 %v618
      %v891 = vpop.f32.mrf.mxu0
      %v892 = vadd.f32 %v779, %v891
      %893 = vmatmul.f32.gmra.mxu0 %v619
      %v894 = vpop.f32.mrf.mxu0
      %v895 = vadd.f32 %v782, %v894
      %896 = vmatmul.f32.gmra.mxu0 %v620
      %v897 = vpop.f32.mrf.mxu0
      %v898 = vadd.f32 %v785, %v897
      %899 = vmatmul.f32.gmra.mxu0 %v621
      %v900 = vpop.f32.mrf.mxu0
      %v901 = vadd.f32 %v788, %v900
      %902 = vmatmul.f32.gmra.mxu0 %v622
      %v903 = vpop.f32.mrf.mxu0
      %v904 = vadd.f32 %v791, %v903
      %905 = vmatmul.f32.gmra.mxu0 %v623
      %v906 = vpop.f32.mrf.mxu0
      %v907 = vadd.f32 %v794, %v906
      %908 = vmatmul.f32.gmra.mxu0 %v624
      %v909 = vpop.f32.mrf.mxu0
      %v910 = vadd.f32 %v797, %v909
      %911 = vmatmul.f32.gmra.mxu0 %v625
      %v912 = vpop.f32.mrf.mxu0
      %v913 = vadd.f32 %v800, %v912
      %914 = vmatmul.f32.gmra.mxu0 %v626
      %v915 = vpop.f32.mrf.mxu0
      %v916 = vadd.f32 %v803, %v915
      %917 = vdwg.mxu0
      %v918 = vld [vmem:[#allocation2 + $0x1] sm:$0xff]
      %v919 = vld [vmem:[#allocation2 + $0x9] sm:$0xff]
      %v920 = vld [vmem:[#allocation2 + $0x19] sm:$0xff]
      %v921 = vld [vmem:[#allocation2 + $0x21] sm:$0xff]
      %v922 = vld [vmem:[#allocation2 + $0x31] sm:$0xff]
      %v923 = vld [vmem:[#allocation2 + $0x39] sm:$0xff]
      %v924 = vld [vmem:[#allocation2 + $0x49] sm:$0xff]
      %v925 = vld [vmem:[#allocation2 + $0x51] sm:$0xff]
      %v926 = vld [vmem:[#allocation2 + $0x61] sm:$0xff]
      %v927 = vld [vmem:[#allocation2 + $0x69] sm:$0xff]
      %v928 = vld [vmem:[#allocation2 + $0x79] sm:$0xff]
      %v929 = vld [vmem:[#allocation2 + $0x81] sm:$0xff]
      %v930 = vld [vmem:[#allocation2 + $0x91] sm:$0xff]
      %v931 = vld [vmem:[#allocation2 + $0x99] sm:$0xff]
      %v932 = vld [vmem:[#allocation2 + $0xa9] sm:$0xff]
      %v933 = vld [vmem:[#allocation2 + $0xb1] sm:$0xff]
      %v934 = vld [vmem:[#allocation2 + $0xc1] sm:$0xff]
      %v935 = vld [vmem:[#allocation2 + $0xc9] sm:$0xff]
      %v936 = vld [vmem:[#allocation2 + $0xd9] sm:$0xff]
      %v937 = vld [vmem:[#allocation2 + $0xe1] sm:$0xff]
      %v938 = vld [vmem:[#allocation2 + $0xf1] sm:$0xff]
      %v939 = vld [vmem:[#allocation2 + $0xf9] sm:$0xff]
      %v940 = vld [vmem:[#allocation2 + $0x109] sm:$0xff]
      %v941 = vld [vmem:[#allocation2 + $0x111] sm:$0xff]
      %v942 = vld [vmem:[#allocation2 + $0x121] sm:$0xff]
      %v943 = vld [vmem:[#allocation2 + $0x129] sm:$0xff]
      %v944 = vld [vmem:[#allocation2 + $0x139] sm:$0xff]
      %v945 = vld [vmem:[#allocation2 + $0x141] sm:$0xff]
      %v946 = vld [vmem:[#allocation2 + $0x151] sm:$0xff]
      %v947 = vld [vmem:[#allocation2 + $0x159] sm:$0xff]
      %v948 = vld [vmem:[#allocation2 + $0x169] sm:$0xff]
      %v949 = vld [vmem:[#allocation2 + $0x171] sm:$0xff]
      %s950 = scalar_lea.vmem %s3, 256
      %v951 = vld [vmem:[%s950] sm:$0xff]
      %v952 = vld [vmem:[%s950 + $0x8] sm:$0xff]
      %v953 = vld [vmem:[%s950 + $0x10] sm:$0xff]
      %v954 = vld [vmem:[%s950 + $0x18] sm:$0xff]
      %v955 = vld [vmem:[%s950 + $0x20] sm:$0xff]
      %v956 = vld [vmem:[%s950 + $0x28] sm:$0xff]
      %v957 = vld [vmem:[%s950 + $0x30] sm:$0xff]
      %v958 = vld [vmem:[%s950 + $0x38] sm:$0xff]
      %v959 = vld [vmem:[%s950 + $0x40] sm:$0xff]
      %v960 = vld [vmem:[%s950 + $0x48] sm:$0xff]
      %v961 = vld [vmem:[%s950 + $0x50] sm:$0xff]
      %v962 = vld [vmem:[%s950 + $0x58] sm:$0xff]
      %v963 = vld [vmem:[%s950 + $0x60] sm:$0xff]
      %v964 = vld [vmem:[%s950 + $0x68] sm:$0xff]
      %v965 = vld [vmem:[%s950 + $0x70] sm:$0xff]
      %v966 = vld [vmem:[%s950 + $0x78] sm:$0xff]
      %967 = vmatpush.msra.mxu0 %v966
      %968 = vmatpush.msra.mxu0 %v965
      %969 = vmatpush.msra.mxu0 %v964
      %970 = vmatpush.msra.mxu0 %v963
      %971 = vmatpush.msra.mxu0 %v962
      %972 = vmatpush.msra.mxu0 %v961
      %973 = vmatpush.msra.mxu0 %v960
      %974 = vmatpush.msra.mxu0 %v959
      %975 = vmatpush.msra.mxu0 %v958
      %976 = vmatpush.msra.mxu0 %v957
      %977 = vmatpush.msra.mxu0 %v956
      %978 = vmatpush.msra.mxu0 %v955
      %979 = vmatpush.msra.mxu0 %v954
      %980 = vmatpush.msra.mxu0 %v953
      %981 = vmatpush.msra.mxu0 %v952
      %982 = vmatpush.msra.mxu0 %v951
      %983 = vmatmul.f32.gmra.mxu0 %v918
      %v984 = vpop.f32.mrf.mxu0
      %v985 = vadd.f32 0.0, %v984
      %986 = vmatmul.f32.gmra.mxu0 %v919
      %v987 = vpop.f32.mrf.mxu0
      %v988 = vadd.f32 0.0, %v987
      %989 = vmatmul.f32.gmra.mxu0 %v920
      %v990 = vpop.f32.mrf.mxu0
      %v991 = vadd.f32 0.0, %v990
      %992 = vmatmul.f32.gmra.mxu0 %v921
      %v993 = vpop.f32.mrf.mxu0
      %v994 = vadd.f32 0.0, %v993
      %995 = vmatmul.f32.gmra.mxu0 %v922
      %v996 = vpop.f32.mrf.mxu0
      %v997 = vadd.f32 0.0, %v996
      %998 = vmatmul.f32.gmra.mxu0 %v923
      %v999 = vpop.f32.mrf.mxu0
      %v1000 = vadd.f32 0.0, %v999
      %1001 = vmatmul.f32.gmra.mxu0 %v924
      %v1002 = vpop.f32.mrf.mxu0
      %v1003 = vadd.f32 0.0, %v1002
      %1004 = vmatmul.f32.gmra.mxu0 %v925
      %v1005 = vpop.f32.mrf.mxu0
      %v1006 = vadd.f32 0.0, %v1005
      %1007 = vmatmul.f32.gmra.mxu0 %v926
      %v1008 = vpop.f32.mrf.mxu0
      %v1009 = vadd.f32 0.0, %v1008
      %1010 = vmatmul.f32.gmra.mxu0 %v927
      %v1011 = vpop.f32.mrf.mxu0
      %v1012 = vadd.f32 0.0, %v1011
      %1013 = vmatmul.f32.gmra.mxu0 %v928
      %v1014 = vpop.f32.mrf.mxu0
      %v1015 = vadd.f32 0.0, %v1014
      %1016 = vmatmul.f32.gmra.mxu0 %v929
      %v1017 = vpop.f32.mrf.mxu0
      %v1018 = vadd.f32 0.0, %v1017
      %1019 = vmatmul.f32.gmra.mxu0 %v930
      %v1020 = vpop.f32.mrf.mxu0
      %v1021 = vadd.f32 0.0, %v1020
      %1022 = vmatmul.f32.gmra.mxu0 %v931
      %v1023 = vpop.f32.mrf.mxu0
      %v1024 = vadd.f32 0.0, %v1023
      %1025 = vmatmul.f32.gmra.mxu0 %v932
      %v1026 = vpop.f32.mrf.mxu0
      %v1027 = vadd.f32 0.0, %v1026
      %1028 = vmatmul.f32.gmra.mxu0 %v933
      %v1029 = vpop.f32.mrf.mxu0
      %v1030 = vadd.f32 0.0, %v1029
      %1031 = vmatmul.f32.gmra.mxu0 %v934
      %v1032 = vpop.f32.mrf.mxu0
      %v1033 = vadd.f32 0.0, %v1032
      %1034 = vmatmul.f32.gmra.mxu0 %v935
      %v1035 = vpop.f32.mrf.mxu0
      %v1036 = vadd.f32 0.0, %v1035
      %1037 = vmatmul.f32.gmra.mxu0 %v936
      %v1038 = vpop.f32.mrf.mxu0
      %v1039 = vadd.f32 0.0, %v1038
      %1040 = vmatmul.f32.gmra.mxu0 %v937
      %v1041 = vpop.f32.mrf.mxu0
      %v1042 = vadd.f32 0.0, %v1041
      %1043 = vmatmul.f32.gmra.mxu0 %v938
      %v1044 = vpop.f32.mrf.mxu0
      %v1045 = vadd.f32 0.0, %v1044
      %1046 = vmatmul.f32.gmra.mxu0 %v939
      %v1047 = vpop.f32.mrf.mxu0
      %v1048 = vadd.f32 0.0, %v1047
      %1049 = vmatmul.f32.gmra.mxu0 %v940
      %v1050 = vpop.f32.mrf.mxu0
      %v1051 = vadd.f32 0.0, %v1050
      %1052 = vmatmul.f32.gmra.mxu0 %v941
      %v1053 = vpop.f32.mrf.mxu0
      %v1054 = vadd.f32 0.0, %v1053
      %1055 = vmatmul.f32.gmra.mxu0 %v942
      %v1056 = vpop.f32.mrf.mxu0
      %v1057 = vadd.f32 0.0, %v1056
      %1058 = vmatmul.f32.gmra.mxu0 %v943
      %v1059 = vpop.f32.mrf.mxu0
      %v1060 = vadd.f32 0.0, %v1059
      %1061 = vmatmul.f32.gmra.mxu0 %v944
      %v1062 = vpop.f32.mrf.mxu0
      %v1063 = vadd.f32 0.0, %v1062
      %1064 = vmatmul.f32.gmra.mxu0 %v945
      %v1065 = vpop.f32.mrf.mxu0
      %v1066 = vadd.f32 0.0, %v1065
      %1067 = vmatmul.f32.gmra.mxu0 %v946
      %v1068 = vpop.f32.mrf.mxu0
      %v1069 = vadd.f32 0.0, %v1068
      %1070 = vmatmul.f32.gmra.mxu0 %v947
      %v1071 = vpop.f32.mrf.mxu0
      %v1072 = vadd.f32 0.0, %v1071
      %1073 = vmatmul.f32.gmra.mxu0 %v948
      %v1074 = vpop.f32.mrf.mxu0
      %v1075 = vadd.f32 0.0, %v1074
      %1076 = vmatmul.f32.gmra.mxu0 %v949
      %v1077 = vpop.f32.mrf.mxu0
      %v1078 = vadd.f32 0.0, %v1077
      %1079 = vdwg.mxu0
      %v1080 = vadd.f32 %v823, %v985
      %v1081 = vadd.f32 %v826, %v988
      %v1082 = vadd.f32 %v829, %v991
      %v1083 = vadd.f32 %v832, %v994
      %v1084 = vadd.f32 %v835, %v997
      %v1085 = vadd.f32 %v838, %v1000
      %v1086 = vadd.f32 %v841, %v1003
      %v1087 = vadd.f32 %v844, %v1006
      %v1088 = vadd.f32 %v847, %v1009
      %v1089 = vadd.f32 %v850, %v1012
      %v1090 = vadd.f32 %v853, %v1015
      %v1091 = vadd.f32 %v856, %v1018
      %v1092 = vadd.f32 %v859, %v1021
      %v1093 = vadd.f32 %v862, %v1024
      %v1094 = vadd.f32 %v865, %v1027
      %v1095 = vadd.f32 %v868, %v1030
      %v1096 = vadd.f32 %v871, %v1033
      %v1097 = vadd.f32 %v874, %v1036
      %v1098 = vadd.f32 %v877, %v1039
      %v1099 = vadd.f32 %v880, %v1042
      %v1100 = vadd.f32 %v883, %v1045
      %v1101 = vadd.f32 %v886, %v1048
      %v1102 = vadd.f32 %v889, %v1051
      %v1103 = vadd.f32 %v892, %v1054
      %v1104 = vadd.f32 %v895, %v1057
      %v1105 = vadd.f32 %v898, %v1060
      %v1106 = vadd.f32 %v901, %v1063
      %v1107 = vadd.f32 %v904, %v1066
      %v1108 = vadd.f32 %v907, %v1069
      %v1109 = vadd.f32 %v910, %v1072
      %v1110 = vadd.f32 %v913, %v1075
      %v1111 = vadd.f32 %v916, %v1078
      %v1112 = vld [vmem:[#allocation2] sm:$0xff]
      %v1113 = vld [vmem:[#allocation2 + $0x8] sm:$0xff]
      %v1114 = vld [vmem:[#allocation2 + $0x18] sm:$0xff]
      %v1115 = vld [vmem:[#allocation2 + $0x20] sm:$0xff]
      %v1116 = vld [vmem:[#allocation2 + $0x30] sm:$0xff]
      %v1117 = vld [vmem:[#allocation2 + $0x38] sm:$0xff]
      %v1118 = vld [vmem:[#allocation2 + $0x48] sm:$0xff]
      %v1119 = vld [vmem:[#allocation2 + $0x50] sm:$0xff]
      %v1120 = vld [vmem:[#allocation2 + $0x60] sm:$0xff]
      %v1121 = vld [vmem:[#allocation2 + $0x68] sm:$0xff]
      %v1122 = vld [vmem:[#allocation2 + $0x78] sm:$0xff]
      %v1123 = vld [vmem:[#allocation2 + $0x80] sm:$0xff]
      %v1124 = vld [vmem:[#allocation2 + $0x90] sm:$0xff]
      %v1125 = vld [vmem:[#allocation2 + $0x98] sm:$0xff]
      %v1126 = vld [vmem:[#allocation2 + $0xa8] sm:$0xff]
      %v1127 = vld [vmem:[#allocation2 + $0xb0] sm:$0xff]
      %v1128 = vld [vmem:[#allocation2 + $0xc0] sm:$0xff]
      %v1129 = vld [vmem:[#allocation2 + $0xc8] sm:$0xff]
      %v1130 = vld [vmem:[#allocation2 + $0xd8] sm:$0xff]
      %v1131 = vld [vmem:[#allocation2 + $0xe0] sm:$0xff]
      %v1132 = vld [vmem:[#allocation2 + $0xf0] sm:$0xff]
      %v1133 = vld [vmem:[#allocation2 + $0xf8] sm:$0xff]
      %v1134 = vld [vmem:[#allocation2 + $0x108] sm:$0xff]
      %v1135 = vld [vmem:[#allocation2 + $0x110] sm:$0xff]
      %v1136 = vld [vmem:[#allocation2 + $0x120] sm:$0xff]
      %v1137 = vld [vmem:[#allocation2 + $0x128] sm:$0xff]
      %v1138 = vld [vmem:[#allocation2 + $0x138] sm:$0xff]
      %v1139 = vld [vmem:[#allocation2 + $0x140] sm:$0xff]
      %v1140 = vld [vmem:[#allocation2 + $0x150] sm:$0xff]
      %v1141 = vld [vmem:[#allocation2 + $0x158] sm:$0xff]
      %v1142 = vld [vmem:[#allocation2 + $0x168] sm:$0xff]
      %v1143 = vld [vmem:[#allocation2 + $0x170] sm:$0xff]
      %s1144 = scalar_lea.vmem %s3, 384
      %v1145 = vld [vmem:[%s1144] sm:$0xff]
      %v1146 = vld [vmem:[%s1144 + $0x8] sm:$0xff]
      %v1147 = vld [vmem:[%s1144 + $0x10] sm:$0xff]
      %v1148 = vld [vmem:[%s1144 + $0x18] sm:$0xff]
      %v1149 = vld [vmem:[%s1144 + $0x20] sm:$0xff]
      %v1150 = vld [vmem:[%s1144 + $0x28] sm:$0xff]
      %v1151 = vld [vmem:[%s1144 + $0x30] sm:$0xff]
      %v1152 = vld [vmem:[%s1144 + $0x38] sm:$0xff]
      %v1153 = vld [vmem:[%s1144 + $0x40] sm:$0xff]
      %v1154 = vld [vmem:[%s1144 + $0x48] sm:$0xff]
      %v1155 = vld [vmem:[%s1144 + $0x50] sm:$0xff]
      %v1156 = vld [vmem:[%s1144 + $0x58] sm:$0xff]
      %v1157 = vld [vmem:[%s1144 + $0x60] sm:$0xff]
      %v1158 = vld [vmem:[%s1144 + $0x68] sm:$0xff]
      %v1159 = vld [vmem:[%s1144 + $0x70] sm:$0xff]
      %v1160 = vld [vmem:[%s1144 + $0x78] sm:$0xff]
      %1161 = vmatpush.msra.mxu0 %v1160
      %1162 = vmatpush.msra.mxu0 %v1159
      %1163 = vmatpush.msra.mxu0 %v1158
      %1164 = vmatpush.msra.mxu0 %v1157
      %1165 = vmatpush.msra.mxu0 %v1156
      %1166 = vmatpush.msra.mxu0 %v1155
      %1167 = vmatpush.msra.mxu0 %v1154
      %1168 = vmatpush.msra.mxu0 %v1153
      %1169 = vmatpush.msra.mxu0 %v1152
      %1170 = vmatpush.msra.mxu0 %v1151
      %1171 = vmatpush.msra.mxu0 %v1150
      %1172 = vmatpush.msra.mxu0 %v1149
      %1173 = vmatpush.msra.mxu0 %v1148
      %1174 = vmatpush.msra.mxu0 %v1147
      %1175 = vmatpush.msra.mxu0 %v1146
      %1176 = vmatpush.msra.mxu0 %v1145
      %1177 = vmatmul.f32.gmra.mxu0 %v1112
      %v1178 = vpop.f32.mrf.mxu0
      %v1179 = vadd.f32 0.0, %v1178
      %1180 = vmatmul.f32.gmra.mxu0 %v1113
      %v1181 = vpop.f32.mrf.mxu0
      %v1182 = vadd.f32 0.0, %v1181
      %1183 = vmatmul.f32.gmra.mxu0 %v1114
      %v1184 = vpop.f32.mrf.mxu0
      %v1185 = vadd.f32 0.0, %v1184
      %1186 = vmatmul.f32.gmra.mxu0 %v1115
      %v1187 = vpop.f32.mrf.mxu0
      %v1188 = vadd.f32 0.0, %v1187
      %1189 = vmatmul.f32.gmra.mxu0 %v1116
      %v1190 = vpop.f32.mrf.mxu0
      %v1191 = vadd.f32 0.0, %v1190
      %1192 = vmatmul.f32.gmra.mxu0 %v1117
      %v1193 = vpop.f32.mrf.mxu0
      %v1194 = vadd.f32 0.0, %v1193
      %1195 = vmatmul.f32.gmra.mxu0 %v1118
      %v1196 = vpop.f32.mrf.mxu0
      %v1197 = vadd.f32 0.0, %v1196
      %1198 = vmatmul.f32.gmra.mxu0 %v1119
      %v1199 = vpop.f32.mrf.mxu0
      %v1200 = vadd.f32 0.0, %v1199
      %1201 = vmatmul.f32.gmra.mxu0 %v1120
      %v1202 = vpop.f32.mrf.mxu0
      %v1203 = vadd.f32 0.0, %v1202
      %1204 = vmatmul.f32.gmra.mxu0 %v1121
      %v1205 = vpop.f32.mrf.mxu0
      %v1206 = vadd.f32 0.0, %v1205
      %1207 = vmatmul.f32.gmra.mxu0 %v1122
      %v1208 = vpop.f32.mrf.mxu0
      %v1209 = vadd.f32 0.0, %v1208
      %1210 = vmatmul.f32.gmra.mxu0 %v1123
      %v1211 = vpop.f32.mrf.mxu0
      %v1212 = vadd.f32 0.0, %v1211
      %1213 = vmatmul.f32.gmra.mxu0 %v1124
      %v1214 = vpop.f32.mrf.mxu0
      %v1215 = vadd.f32 0.0, %v1214
      %1216 = vmatmul.f32.gmra.mxu0 %v1125
      %v1217 = vpop.f32.mrf.mxu0
      %v1218 = vadd.f32 0.0, %v1217
      %1219 = vmatmul.f32.gmra.mxu0 %v1126
      %v1220 = vpop.f32.mrf.mxu0
      %v1221 = vadd.f32 0.0, %v1220
      %1222 = vmatmul.f32.gmra.mxu0 %v1127
      %v1223 = vpop.f32.mrf.mxu0
      %v1224 = vadd.f32 0.0, %v1223
      %1225 = vmatmul.f32.gmra.mxu0 %v1128
      %v1226 = vpop.f32.mrf.mxu0
      %v1227 = vadd.f32 0.0, %v1226
      %1228 = vmatmul.f32.gmra.mxu0 %v1129
      %v1229 = vpop.f32.mrf.mxu0
      %v1230 = vadd.f32 0.0, %v1229
      %1231 = vmatmul.f32.gmra.mxu0 %v1130
      %v1232 = vpop.f32.mrf.mxu0
      %v1233 = vadd.f32 0.0, %v1232
      %1234 = vmatmul.f32.gmra.mxu0 %v1131
      %v1235 = vpop.f32.mrf.mxu0
      %v1236 = vadd.f32 0.0, %v1235
      %1237 = vmatmul.f32.gmra.mxu0 %v1132
      %v1238 = vpop.f32.mrf.mxu0
      %v1239 = vadd.f32 0.0, %v1238
      %1240 = vmatmul.f32.gmra.mxu0 %v1133
      %v1241 = vpop.f32.mrf.mxu0
      %v1242 = vadd.f32 0.0, %v1241
      %1243 = vmatmul.f32.gmra.mxu0 %v1134
      %v1244 = vpop.f32.mrf.mxu0
      %v1245 = vadd.f32 0.0, %v1244
      %1246 = vmatmul.f32.gmra.mxu0 %v1135
      %v1247 = vpop.f32.mrf.mxu0
      %v1248 = vadd.f32 0.0, %v1247
      %1249 = vmatmul.f32.gmra.mxu0 %v1136
      %v1250 = vpop.f32.mrf.mxu0
      %v1251 = vadd.f32 0.0, %v1250
      %1252 = vmatmul.f32.gmra.mxu0 %v1137
      %v1253 = vpop.f32.mrf.mxu0
      %v1254 = vadd.f32 0.0, %v1253
      %1255 = vmatmul.f32.gmra.mxu0 %v1138
      %v1256 = vpop.f32.mrf.mxu0
      %v1257 = vadd.f32 0.0, %v1256
      %1258 = vmatmul.f32.gmra.mxu0 %v1139
      %v1259 = vpop.f32.mrf.mxu0
      %v1260 = vadd.f32 0.0, %v1259
      %1261 = vmatmul.f32.gmra.mxu0 %v1140
      %v1262 = vpop.f32.mrf.mxu0
      %v1263 = vadd.f32 0.0, %v1262
      %1264 = vmatmul.f32.gmra.mxu0 %v1141
      %v1265 = vpop.f32.mrf.mxu0
      %v1266 = vadd.f32 0.0, %v1265
      %1267 = vmatmul.f32.gmra.mxu0 %v1142
      %v1268 = vpop.f32.mrf.mxu0
      %v1269 = vadd.f32 0.0, %v1268
      %1270 = vmatmul.f32.gmra.mxu0 %v1143
      %v1271 = vpop.f32.mrf.mxu0
      %v1272 = vadd.f32 0.0, %v1271
      %1273 = vdwg.mxu0
      %v1274 = vadd.f32 %v1080, %v1179
      %v1275 = vadd.f32 %v1081, %v1182
      %v1276 = vadd.f32 %v1082, %v1185
      %v1277 = vadd.f32 %v1083, %v1188
      %v1278 = vadd.f32 %v1084, %v1191
      %v1279 = vadd.f32 %v1085, %v1194
      %v1280 = vadd.f32 %v1086, %v1197
      %v1281 = vadd.f32 %v1087, %v1200
      %v1282 = vadd.f32 %v1088, %v1203
      %v1283 = vadd.f32 %v1089, %v1206
      %v1284 = vadd.f32 %v1090, %v1209
      %v1285 = vadd.f32 %v1091, %v1212
      %v1286 = vadd.f32 %v1092, %v1215
      %v1287 = vadd.f32 %v1093, %v1218
      %v1288 = vadd.f32 %v1094, %v1221
      %v1289 = vadd.f32 %v1095, %v1224
      %v1290 = vadd.f32 %v1096, %v1227
      %v1291 = vadd.f32 %v1097, %v1230
      %v1292 = vadd.f32 %v1098, %v1233
      %v1293 = vadd.f32 %v1099, %v1236
      %v1294 = vadd.f32 %v1100, %v1239
      %v1295 = vadd.f32 %v1101, %v1242
      %v1296 = vadd.f32 %v1102, %v1245
      %v1297 = vadd.f32 %v1103, %v1248
      %v1298 = vadd.f32 %v1104, %v1251
      %v1299 = vadd.f32 %v1105, %v1254
      %v1300 = vadd.f32 %v1106, %v1257
      %v1301 = vadd.f32 %v1107, %v1260
      %v1302 = vadd.f32 %v1108, %v1263
      %v1303 = vadd.f32 %v1109, %v1266
      %v1304 = vadd.f32 %v1110, %v1269
      %v1305 = vadd.f32 %v1111, %v1272
      %v1307 = vperm.slane %v594, 0
      %v1309 = vadd.f32 %v1274, %v1307
      %v1310 = vadd.f32 %v1275, %v1307
      %v1311 = vadd.f32 %v1276, %v1307
      %v1312 = vadd.f32 %v1277, %v1307
      %v1313 = vadd.f32 %v1278, %v1307
      %v1314 = vadd.f32 %v1279, %v1307
      %v1315 = vadd.f32 %v1280, %v1307
      %v1316 = vadd.f32 %v1281, %v1307
      %v1317 = vadd.f32 %v1282, %v1307
      %v1318 = vadd.f32 %v1283, %v1307
      %v1319 = vadd.f32 %v1284, %v1307
      %v1320 = vadd.f32 %v1285, %v1307
      %v1321 = vadd.f32 %v1286, %v1307
      %v1322 = vadd.f32 %v1287, %v1307
      %v1323 = vadd.f32 %v1288, %v1307
      %v1324 = vadd.f32 %v1289, %v1307
      %v1325 = vadd.f32 %v1290, %v1307
      %v1326 = vadd.f32 %v1291, %v1307
      %v1327 = vadd.f32 %v1292, %v1307
      %v1328 = vadd.f32 %v1293, %v1307
      %v1329 = vadd.f32 %v1294, %v1307
      %v1330 = vadd.f32 %v1295, %v1307
      %v1331 = vadd.f32 %v1296, %v1307
      %v1332 = vadd.f32 %v1297, %v1307
      %v1333 = vadd.f32 %v1298, %v1307
      %v1334 = vadd.f32 %v1299, %v1307
      %v1335 = vadd.f32 %v1300, %v1307
      %v1336 = vadd.f32 %v1301, %v1307
      %v1337 = vadd.f32 %v1302, %v1307
      %v1338 = vadd.f32 %v1303, %v1307
      %v1339 = vadd.f32 %v1304, %v1307
      %v1340 = vadd.f32 %v1305, %v1307
      %v1341 = vmax.f32 %v1309, 0.0
      %v1342 = vmax.f32 %v1310, 0.0
      %v1343 = vmax.f32 %v1311, 0.0
      %v1344 = vmax.f32 %v1312, 0.0
      %v1345 = vmax.f32 %v1313, 0.0
      %v1346 = vmax.f32 %v1314, 0.0
      %v1347 = vmax.f32 %v1315, 0.0
      %v1348 = vmax.f32 %v1316, 0.0
      %v1349 = vmax.f32 %v1317, 0.0
      %v1350 = vmax.f32 %v1318, 0.0
      %v1351 = vmax.f32 %v1319, 0.0
      %v1352 = vmax.f32 %v1320, 0.0
      %v1353 = vmax.f32 %v1321, 0.0
      %v1354 = vmax.f32 %v1322, 0.0
      %v1355 = vmax.f32 %v1323, 0.0
      %v1356 = vmax.f32 %v1324, 0.0
      %v1357 = vmax.f32 %v1325, 0.0
      %v1358 = vmax.f32 %v1326, 0.0
      %v1359 = vmax.f32 %v1327, 0.0
      %v1360 = vmax.f32 %v1328, 0.0
      %v1361 = vmax.f32 %v1329, 0.0
      %v1362 = vmax.f32 %v1330, 0.0
      %v1363 = vmax.f32 %v1331, 0.0
      %v1364 = vmax.f32 %v1332, 0.0
      %v1365 = vmax.f32 %v1333, 0.0
      %v1366 = vmax.f32 %v1334, 0.0
      %v1367 = vmax.f32 %v1335, 0.0
      %v1368 = vmax.f32 %v1336, 0.0
      %v1369 = vmax.f32 %v1337, 0.0
      %v1370 = vmax.f32 %v1338, 0.0
      %v1371 = vmax.f32 %v1339, 0.0
      %v1372 = vmax.f32 %v1340, 0.0
      %v1373 = vld [vmem:[%s561 + $0x2] sm:$0xff]
      %v1374 = vld [vmem:[%s561 + $0xa] sm:$0xff]
      %v1375 = vld [vmem:[%s561 + $0x1a] sm:$0xff]
      %v1376 = vld [vmem:[%s561 + $0x22] sm:$0xff]
      %v1377 = vld [vmem:[%s561 + $0x32] sm:$0xff]
      %v1378 = vld [vmem:[%s561 + $0x3a] sm:$0xff]
      %v1379 = vld [vmem:[%s561 + $0x4a] sm:$0xff]
      %v1380 = vld [vmem:[%s561 + $0x52] sm:$0xff]
      %v1381 = vld [vmem:[%s561 + $0x62] sm:$0xff]
      %v1382 = vld [vmem:[%s561 + $0x6a] sm:$0xff]
      %v1383 = vld [vmem:[%s561 + $0x7a] sm:$0xff]
      %v1384 = vld [vmem:[%s561 + $0x82] sm:$0xff]
      %v1385 = vld [vmem:[%s561 + $0x92] sm:$0xff]
      %v1386 = vld [vmem:[%s561 + $0x9a] sm:$0xff]
      %v1387 = vld [vmem:[%s561 + $0xaa] sm:$0xff]
      %v1388 = vld [vmem:[%s561 + $0xb2] sm:$0xff]
      %v1389 = vld [vmem:[%s561 + $0xc2] sm:$0xff]
      %v1390 = vld [vmem:[%s561 + $0xca] sm:$0xff]
      %v1391 = vld [vmem:[%s561 + $0xda] sm:$0xff]
      %v1392 = vld [vmem:[%s561 + $0xe2] sm:$0xff]
      %v1393 = vld [vmem:[%s561 + $0xf2] sm:$0xff]
      %v1394 = vld [vmem:[%s561 + $0xfa] sm:$0xff]
      %v1395 = vld [vmem:[%s561 + $0x10a] sm:$0xff]
      %v1396 = vld [vmem:[%s561 + $0x112] sm:$0xff]
      %v1397 = vld [vmem:[%s561 + $0x122] sm:$0xff]
      %v1398 = vld [vmem:[%s561 + $0x12a] sm:$0xff]
      %v1399 = vld [vmem:[%s561 + $0x13a] sm:$0xff]
      %v1400 = vld [vmem:[%s561 + $0x142] sm:$0xff]
      %v1401 = vld [vmem:[%s561 + $0x152] sm:$0xff]
      %v1402 = vld [vmem:[%s561 + $0x15a] sm:$0xff]
      %v1403 = vld [vmem:[%s561 + $0x16a] sm:$0xff]
      %v1404 = vld [vmem:[%s561 + $0x172] sm:$0xff]
      %s1405 = scalar_lea.vmem %s3, 512
      %v1406 = vld [vmem:[%s1405] sm:$0xff]
      %v1407 = vld [vmem:[%s1405 + $0x8] sm:$0xff]
      %v1408 = vld [vmem:[%s1405 + $0x10] sm:$0xff]
      %v1409 = vld [vmem:[%s1405 + $0x18] sm:$0xff]
      %v1410 = vld [vmem:[%s1405 + $0x20] sm:$0xff]
      %v1411 = vld [vmem:[%s1405 + $0x28] sm:$0xff]
      %v1412 = vld [vmem:[%s1405 + $0x30] sm:$0xff]
      %v1413 = vld [vmem:[%s1405 + $0x38] sm:$0xff]
      %v1414 = vld [vmem:[%s1405 + $0x40] sm:$0xff]
      %v1415 = vld [vmem:[%s1405 + $0x48] sm:$0xff]
      %v1416 = vld [vmem:[%s1405 + $0x50] sm:$0xff]
      %v1417 = vld [vmem:[%s1405 + $0x58] sm:$0xff]
      %v1418 = vld [vmem:[%s1405 + $0x60] sm:$0xff]
      %v1419 = vld [vmem:[%s1405 + $0x68] sm:$0xff]
      %v1420 = vld [vmem:[%s1405 + $0x70] sm:$0xff]
      %v1421 = vld [vmem:[%s1405 + $0x78] sm:$0xff]
      %s1422 = scalar_lea.vmem %s3, 640
      %v1423 = vld [vmem:[%s1422] sm:$0xff]
      %v1424 = vld [vmem:[%s1422 + $0x8] sm:$0xff]
      %v1425 = vld [vmem:[%s1422 + $0x10] sm:$0xff]
      %v1426 = vld [vmem:[%s1422 + $0x18] sm:$0xff]
      %v1427 = vld [vmem:[%s1422 + $0x20] sm:$0xff]
      %v1428 = vld [vmem:[%s1422 + $0x28] sm:$0xff]
      %v1429 = vld [vmem:[%s1422 + $0x30] sm:$0xff]
      %v1430 = vld [vmem:[%s1422 + $0x38] sm:$0xff]
      %v1431 = vld [vmem:[%s1422 + $0x40] sm:$0xff]
      %v1432 = vld [vmem:[%s1422 + $0x48] sm:$0xff]
      %v1433 = vld [vmem:[%s1422 + $0x50] sm:$0xff]
      %v1434 = vld [vmem:[%s1422 + $0x58] sm:$0xff]
      %v1435 = vld [vmem:[%s1422 + $0x60] sm:$0xff]
      %v1436 = vld [vmem:[%s1422 + $0x68] sm:$0xff]
      %v1437 = vld [vmem:[%s1422 + $0x70] sm:$0xff]
      %v1438 = vld [vmem:[%s1422 + $0x78] sm:$0xff]
      %1439 = vmatpush.msra.mxu0 %v1438
      %1440 = vmatpush.msra.mxu0 %v1437
      %1441 = vmatpush.msra.mxu0 %v1436
      %1442 = vmatpush.msra.mxu0 %v1435
      %1443 = vmatpush.msra.mxu0 %v1434
      %1444 = vmatpush.msra.mxu0 %v1433
      %1445 = vmatpush.msra.mxu0 %v1432
      %1446 = vmatpush.msra.mxu0 %v1431
      %1447 = vmatpush.msra.mxu0 %v1430
      %1448 = vmatpush.msra.mxu0 %v1429
      %1449 = vmatpush.msra.mxu0 %v1428
      %1450 = vmatpush.msra.mxu0 %v1427
      %1451 = vmatpush.msra.mxu0 %v1426
      %1452 = vmatpush.msra.mxu0 %v1425
      %1453 = vmatpush.msra.mxu0 %v1424
      %1454 = vmatpush.msra.mxu0 %v1423
      %1455 = vmatmul.f32.gmra.mxu0 %v595
      %v1456 = vpop.f32.mrf.mxu0
      %v1457 = vadd.f32 0.0, %v1456
      %1458 = vmatmul.f32.gmra.mxu0 %v596
      %v1459 = vpop.f32.mrf.mxu0
      %v1460 = vadd.f32 0.0, %v1459
      %1461 = vmatmul.f32.gmra.mxu0 %v597
      %v1462 = vpop.f32.mrf.mxu0
      %v1463 = vadd.f32 0.0, %v1462
      %1464 = vmatmul.f32.gmra.mxu0 %v598
      %v1465 = vpop.f32.mrf.mxu0
      %v1466 = vadd.f32 0.0, %v1465
      %1467 = vmatmul.f32.gmra.mxu0 %v599
      %v1468 = vpop.f32.mrf.mxu0
      %v1469 = vadd.f32 0.0, %v1468
      %1470 = vmatmul.f32.gmra.mxu0 %v600
      %v1471 = vpop.f32.mrf.mxu0
      %v1472 = vadd.f32 0.0, %v1471
      %1473 = vmatmul.f32.gmra.mxu0 %v601
      %v1474 = vpop.f32.mrf.mxu0
      %v1475 = vadd.f32 0.0, %v1474
      %1476 = vmatmul.f32.gmra.mxu0 %v602
      %v1477 = vpop.f32.mrf.mxu0
      %v1478 = vadd.f32 0.0, %v1477
      %1479 = vmatmul.f32.gmra.mxu0 %v603
      %v1480 = vpop.f32.mrf.mxu0
      %v1481 = vadd.f32 0.0, %v1480
      %1482 = vmatmul.f32.gmra.mxu0 %v604
      %v1483 = vpop.f32.mrf.mxu0
      %v1484 = vadd.f32 0.0, %v1483
      %1485 = vmatmul.f32.gmra.mxu0 %v605
      %v1486 = vpop.f32.mrf.mxu0
      %v1487 = vadd.f32 0.0, %v1486
      %1488 = vmatmul.f32.gmra.mxu0 %v606
      %v1489 = vpop.f32.mrf.mxu0
      %v1490 = vadd.f32 0.0, %v1489
      %1491 = vmatmul.f32.gmra.mxu0 %v607
      %v1492 = vpop.f32.mrf.mxu0
      %v1493 = vadd.f32 0.0, %v1492
      %1494 = vmatmul.f32.gmra.mxu0 %v608
      %v1495 = vpop.f32.mrf.mxu0
      %v1496 = vadd.f32 0.0, %v1495
      %1497 = vmatmul.f32.gmra.mxu0 %v609
      %v1498 = vpop.f32.mrf.mxu0
      %v1499 = vadd.f32 0.0, %v1498
      %1500 = vmatmul.f32.gmra.mxu0 %v610
      %v1501 = vpop.f32.mrf.mxu0
      %v1502 = vadd.f32 0.0, %v1501
      %1503 = vmatmul.f32.gmra.mxu0 %v611
      %v1504 = vpop.f32.mrf.mxu0
      %v1505 = vadd.f32 0.0, %v1504
      %1506 = vmatmul.f32.gmra.mxu0 %v612
      %v1507 = vpop.f32.mrf.mxu0
      %v1508 = vadd.f32 0.0, %v1507
      %1509 = vmatmul.f32.gmra.mxu0 %v613
      %v1510 = vpop.f32.mrf.mxu0
      %v1511 = vadd.f32 0.0, %v1510
      %1512 = vmatmul.f32.gmra.mxu0 %v614
      %v1513 = vpop.f32.mrf.mxu0
      %v1514 = vadd.f32 0.0, %v1513
      %1515 = vmatmul.f32.gmra.mxu0 %v615
      %v1516 = vpop.f32.mrf.mxu0
      %v1517 = vadd.f32 0.0, %v1516
      %1518 = vmatmul.f32.gmra.mxu0 %v616
      %v1519 = vpop.f32.mrf.mxu0
      %v1520 = vadd.f32 0.0, %v1519
      %1521 = vmatmul.f32.gmra.mxu0 %v617
      %v1522 = vpop.f32.mrf.mxu0
      %v1523 = vadd.f32 0.0, %v1522
      %1524 = vmatmul.f32.gmra.mxu0 %v618
      %v1525 = vpop.f32.mrf.mxu0
      %v1526 = vadd.f32 0.0, %v1525
      %1527 = vmatmul.f32.gmra.mxu0 %v619
      %v1528 = vpop.f32.mrf.mxu0
      %v1529 = vadd.f32 0.0, %v1528
      %1530 = vmatmul.f32.gmra.mxu0 %v620
      %v1531 = vpop.f32.mrf.mxu0
      %v1532 = vadd.f32 0.0, %v1531
      %1533 = vmatmul.f32.gmra.mxu0 %v621
      %v1534 = vpop.f32.mrf.mxu0
      %v1535 = vadd.f32 0.0, %v1534
      %1536 = vmatmul.f32.gmra.mxu0 %v622
      %v1537 = vpop.f32.mrf.mxu0
      %v1538 = vadd.f32 0.0, %v1537
      %1539 = vmatmul.f32.gmra.mxu0 %v623
      %v1540 = vpop.f32.mrf.mxu0
      %v1541 = vadd.f32 0.0, %v1540
      %1542 = vmatmul.f32.gmra.mxu0 %v624
      %v1543 = vpop.f32.mrf.mxu0
      %v1544 = vadd.f32 0.0, %v1543
      %1545 = vmatmul.f32.gmra.mxu0 %v625
      %v1546 = vpop.f32.mrf.mxu0
      %v1547 = vadd.f32 0.0, %v1546
      %1548 = vmatmul.f32.gmra.mxu0 %v626
      %v1549 = vpop.f32.mrf.mxu0
      %v1550 = vadd.f32 0.0, %v1549
      %1551 = vdwg.mxu0
      %1552 = vmatpush.msra.mxu0 %v1421
      %1553 = vmatpush.msra.mxu0 %v1420
      %1554 = vmatpush.msra.mxu0 %v1419
      %1555 = vmatpush.msra.mxu0 %v1418
      %1556 = vmatpush.msra.mxu0 %v1417
      %1557 = vmatpush.msra.mxu0 %v1416
      %1558 = vmatpush.msra.mxu0 %v1415
      %1559 = vmatpush.msra.mxu0 %v1414
      %1560 = vmatpush.msra.mxu0 %v1413
      %1561 = vmatpush.msra.mxu0 %v1412
      %1562 = vmatpush.msra.mxu0 %v1411
      %1563 = vmatpush.msra.mxu0 %v1410
      %1564 = vmatpush.msra.mxu0 %v1409
      %1565 = vmatpush.msra.mxu0 %v1408
      %1566 = vmatpush.msra.mxu0 %v1407
      %1567 = vmatpush.msra.mxu0 %v1406
      %1568 = vmatmul.f32.gmra.mxu0 %v1373
      %v1569 = vpop.f32.mrf.mxu0
      %v1570 = vadd.f32 %v1457, %v1569
      %1571 = vmatmul.f32.gmra.mxu0 %v1374
      %v1572 = vpop.f32.mrf.mxu0
      %v1573 = vadd.f32 %v1460, %v1572
      %1574 = vmatmul.f32.gmra.mxu0 %v1375
      %v1575 = vpop.f32.mrf.mxu0
      %v1576 = vadd.f32 %v1463, %v1575
      %1577 = vmatmul.f32.gmra.mxu0 %v1376
      %v1578 = vpop.f32.mrf.mxu0
      %v1579 = vadd.f32 %v1466, %v1578
      %1580 = vmatmul.f32.gmra.mxu0 %v1377
      %v1581 = vpop.f32.mrf.mxu0
      %v1582 = vadd.f32 %v1469, %v1581
      %1583 = vmatmul.f32.gmra.mxu0 %v1378
      %v1584 = vpop.f32.mrf.mxu0
      %v1585 = vadd.f32 %v1472, %v1584
      %1586 = vmatmul.f32.gmra.mxu0 %v1379
      %v1587 = vpop.f32.mrf.mxu0
      %v1588 = vadd.f32 %v1475, %v1587
      %1589 = vmatmul.f32.gmra.mxu0 %v1380
      %v1590 = vpop.f32.mrf.mxu0
      %v1591 = vadd.f32 %v1478, %v1590
      %1592 = vmatmul.f32.gmra.mxu0 %v1381
      %v1593 = vpop.f32.mrf.mxu0
      %v1594 = vadd.f32 %v1481, %v1593
      %1595 = vmatmul.f32.gmra.mxu0 %v1382
      %v1596 = vpop.f32.mrf.mxu0
      %v1597 = vadd.f32 %v1484, %v1596
      %1598 = vmatmul.f32.gmra.mxu0 %v1383
      %v1599 = vpop.f32.mrf.mxu0
      %v1600 = vadd.f32 %v1487, %v1599
      %1601 = vmatmul.f32.gmra.mxu0 %v1384
      %v1602 = vpop.f32.mrf.mxu0
      %v1603 = vadd.f32 %v1490, %v1602
      %1604 = vmatmul.f32.gmra.mxu0 %v1385
      %v1605 = vpop.f32.mrf.mxu0
      %v1606 = vadd.f32 %v1493, %v1605
      %1607 = vmatmul.f32.gmra.mxu0 %v1386
      %v1608 = vpop.f32.mrf.mxu0
      %v1609 = vadd.f32 %v1496, %v1608
      %1610 = vmatmul.f32.gmra.mxu0 %v1387
      %v1611 = vpop.f32.mrf.mxu0
      %v1612 = vadd.f32 %v1499, %v1611
      %1613 = vmatmul.f32.gmra.mxu0 %v1388
      %v1614 = vpop.f32.mrf.mxu0
      %v1615 = vadd.f32 %v1502, %v1614
      %1616 = vmatmul.f32.gmra.mxu0 %v1389
      %v1617 = vpop.f32.mrf.mxu0
      %v1618 = vadd.f32 %v1505, %v1617
      %1619 = vmatmul.f32.gmra.mxu0 %v1390
      %v1620 = vpop.f32.mrf.mxu0
      %v1621 = vadd.f32 %v1508, %v1620
      %1622 = vmatmul.f32.gmra.mxu0 %v1391
      %v1623 = vpop.f32.mrf.mxu0
      %v1624 = vadd.f32 %v1511, %v1623
      %1625 = vmatmul.f32.gmra.mxu0 %v1392
      %v1626 = vpop.f32.mrf.mxu0
      %v1627 = vadd.f32 %v1514, %v1626
      %1628 = vmatmul.f32.gmra.mxu0 %v1393
      %v1629 = vpop.f32.mrf.mxu0
      %v1630 = vadd.f32 %v1517, %v1629
      %1631 = vmatmul.f32.gmra.mxu0 %v1394
      %v1632 = vpop.f32.mrf.mxu0
      %v1633 = vadd.f32 %v1520, %v1632
      %1634 = vmatmul.f32.gmra.mxu0 %v1395
      %v1635 = vpop.f32.mrf.mxu0
      %v1636 = vadd.f32 %v1523, %v1635
      %1637 = vmatmul.f32.gmra.mxu0 %v1396
      %v1638 = vpop.f32.mrf.mxu0
      %v1639 = vadd.f32 %v1526, %v1638
      %1640 = vmatmul.f32.gmra.mxu0 %v1397
      %v1641 = vpop.f32.mrf.mxu0
      %v1642 = vadd.f32 %v1529, %v1641
      %1643 = vmatmul.f32.gmra.mxu0 %v1398
      %v1644 = vpop.f32.mrf.mxu0
      %v1645 = vadd.f32 %v1532, %v1644
      %1646 = vmatmul.f32.gmra.mxu0 %v1399
      %v1647 = vpop.f32.mrf.mxu0
      %v1648 = vadd.f32 %v1535, %v1647
      %1649 = vmatmul.f32.gmra.mxu0 %v1400
      %v1650 = vpop.f32.mrf.mxu0
      %v1651 = vadd.f32 %v1538, %v1650
      %1652 = vmatmul.f32.gmra.mxu0 %v1401
      %v1653 = vpop.f32.mrf.mxu0
      %v1654 = vadd.f32 %v1541, %v1653
      %1655 = vmatmul.f32.gmra.mxu0 %v1402
      %v1656 = vpop.f32.mrf.mxu0
      %v1657 = vadd.f32 %v1544, %v1656
      %1658 = vmatmul.f32.gmra.mxu0 %v1403
      %v1659 = vpop.f32.mrf.mxu0
      %v1660 = vadd.f32 %v1547, %v1659
      %1661 = vmatmul.f32.gmra.mxu0 %v1404
      %v1662 = vpop.f32.mrf.mxu0
      %v1663 = vadd.f32 %v1550, %v1662
      %1664 = vdwg.mxu0
      %v1665 = vld [vmem:[#allocation2 + $0x2] sm:$0xff]
      %v1666 = vld [vmem:[#allocation2 + $0xa] sm:$0xff]
      %v1667 = vld [vmem:[#allocation2 + $0x1a] sm:$0xff]
      %v1668 = vld [vmem:[#allocation2 + $0x22] sm:$0xff]
      %v1669 = vld [vmem:[#allocation2 + $0x32] sm:$0xff]
      %v1670 = vld [vmem:[#allocation2 + $0x3a] sm:$0xff]
      %v1671 = vld [vmem:[#allocation2 + $0x4a] sm:$0xff]
      %v1672 = vld [vmem:[#allocation2 + $0x52] sm:$0xff]
      %v1673 = vld [vmem:[#allocation2 + $0x62] sm:$0xff]
      %v1674 = vld [vmem:[#allocation2 + $0x6a] sm:$0xff]
      %v1675 = vld [vmem:[#allocation2 + $0x7a] sm:$0xff]
      %v1676 = vld [vmem:[#allocation2 + $0x82] sm:$0xff]
      %v1677 = vld [vmem:[#allocation2 + $0x92] sm:$0xff]
      %v1678 = vld [vmem:[#allocation2 + $0x9a] sm:$0xff]
      %v1679 = vld [vmem:[#allocation2 + $0xaa] sm:$0xff]
      %v1680 = vld [vmem:[#allocation2 + $0xb2] sm:$0xff]
      %v1681 = vld [vmem:[#allocation2 + $0xc2] sm:$0xff]
      %v1682 = vld [vmem:[#allocation2 + $0xca] sm:$0xff]
      %v1683 = vld [vmem:[#allocation2 + $0xda] sm:$0xff]
      %v1684 = vld [vmem:[#allocation2 + $0xe2] sm:$0xff]
      %v1685 = vld [vmem:[#allocation2 + $0xf2] sm:$0xff]
      %v1686 = vld [vmem:[#allocation2 + $0xfa] sm:$0xff]
      %v1687 = vld [vmem:[#allocation2 + $0x10a] sm:$0xff]
      %v1688 = vld [vmem:[#allocation2 + $0x112] sm:$0xff]
      %v1689 = vld [vmem:[#allocation2 + $0x122] sm:$0xff]
      %v1690 = vld [vmem:[#allocation2 + $0x12a] sm:$0xff]
      %v1691 = vld [vmem:[#allocation2 + $0x13a] sm:$0xff]
      %v1692 = vld [vmem:[#allocation2 + $0x142] sm:$0xff]
      %v1693 = vld [vmem:[#allocation2 + $0x152] sm:$0xff]
      %v1694 = vld [vmem:[#allocation2 + $0x15a] sm:$0xff]
      %v1695 = vld [vmem:[#allocation2 + $0x16a] sm:$0xff]
      %v1696 = vld [vmem:[#allocation2 + $0x172] sm:$0xff]
      %s1697 = scalar_lea.vmem %s3, 768
      %v1698 = vld [vmem:[%s1697] sm:$0xff]
      %v1699 = vld [vmem:[%s1697 + $0x8] sm:$0xff]
      %v1700 = vld [vmem:[%s1697 + $0x10] sm:$0xff]
      %v1701 = vld [vmem:[%s1697 + $0x18] sm:$0xff]
      %v1702 = vld [vmem:[%s1697 + $0x20] sm:$0xff]
      %v1703 = vld [vmem:[%s1697 + $0x28] sm:$0xff]
      %v1704 = vld [vmem:[%s1697 + $0x30] sm:$0xff]
      %v1705 = vld [vmem:[%s1697 + $0x38] sm:$0xff]
      %v1706 = vld [vmem:[%s1697 + $0x40] sm:$0xff]
      %v1707 = vld [vmem:[%s1697 + $0x48] sm:$0xff]
      %v1708 = vld [vmem:[%s1697 + $0x50] sm:$0xff]
      %v1709 = vld [vmem:[%s1697 + $0x58] sm:$0xff]
      %v1710 = vld [vmem:[%s1697 + $0x60] sm:$0xff]
      %v1711 = vld [vmem:[%s1697 + $0x68] sm:$0xff]
      %v1712 = vld [vmem:[%s1697 + $0x70] sm:$0xff]
      %v1713 = vld [vmem:[%s1697 + $0x78] sm:$0xff]
      %1714 = vmatpush.msra.mxu0 %v1713
      %1715 = vmatpush.msra.mxu0 %v1712
      %1716 = vmatpush.msra.mxu0 %v1711
      %1717 = vmatpush.msra.mxu0 %v1710
      %1718 = vmatpush.msra.mxu0 %v1709
      %1719 = vmatpush.msra.mxu0 %v1708
      %1720 = vmatpush.msra.mxu0 %v1707
      %1721 = vmatpush.msra.mxu0 %v1706
      %1722 = vmatpush.msra.mxu0 %v1705
      %1723 = vmatpush.msra.mxu0 %v1704
      %1724 = vmatpush.msra.mxu0 %v1703
      %1725 = vmatpush.msra.mxu0 %v1702
      %1726 = vmatpush.msra.mxu0 %v1701
      %1727 = vmatpush.msra.mxu0 %v1700
      %1728 = vmatpush.msra.mxu0 %v1699
      %1729 = vmatpush.msra.mxu0 %v1698
      %1730 = vmatmul.f32.gmra.mxu0 %v1665
      %v1731 = vpop.f32.mrf.mxu0
      %v1732 = vadd.f32 0.0, %v1731
      %1733 = vmatmul.f32.gmra.mxu0 %v1666
      %v1734 = vpop.f32.mrf.mxu0
      %v1735 = vadd.f32 0.0, %v1734
      %1736 = vmatmul.f32.gmra.mxu0 %v1667
      %v1737 = vpop.f32.mrf.mxu0
      %v1738 = vadd.f32 0.0, %v1737
      %1739 = vmatmul.f32.gmra.mxu0 %v1668
      %v1740 = vpop.f32.mrf.mxu0
      %v1741 = vadd.f32 0.0, %v1740
      %1742 = vmatmul.f32.gmra.mxu0 %v1669
      %v1743 = vpop.f32.mrf.mxu0
      %v1744 = vadd.f32 0.0, %v1743
      %1745 = vmatmul.f32.gmra.mxu0 %v1670
      %v1746 = vpop.f32.mrf.mxu0
      %v1747 = vadd.f32 0.0, %v1746
      %1748 = vmatmul.f32.gmra.mxu0 %v1671
      %v1749 = vpop.f32.mrf.mxu0
      %v1750 = vadd.f32 0.0, %v1749
      %1751 = vmatmul.f32.gmra.mxu0 %v1672
      %v1752 = vpop.f32.mrf.mxu0
      %v1753 = vadd.f32 0.0, %v1752
      %1754 = vmatmul.f32.gmra.mxu0 %v1673
      %v1755 = vpop.f32.mrf.mxu0
      %v1756 = vadd.f32 0.0, %v1755
      %1757 = vmatmul.f32.gmra.mxu0 %v1674
      %v1758 = vpop.f32.mrf.mxu0
      %v1759 = vadd.f32 0.0, %v1758
      %1760 = vmatmul.f32.gmra.mxu0 %v1675
      %v1761 = vpop.f32.mrf.mxu0
      %v1762 = vadd.f32 0.0, %v1761
      %1763 = vmatmul.f32.gmra.mxu0 %v1676
      %v1764 = vpop.f32.mrf.mxu0
      %v1765 = vadd.f32 0.0, %v1764
      %1766 = vmatmul.f32.gmra.mxu0 %v1677
      %v1767 = vpop.f32.mrf.mxu0
      %v1768 = vadd.f32 0.0, %v1767
      %1769 = vmatmul.f32.gmra.mxu0 %v1678
      %v1770 = vpop.f32.mrf.mxu0
      %v1771 = vadd.f32 0.0, %v1770
      %1772 = vmatmul.f32.gmra.mxu0 %v1679
      %v1773 = vpop.f32.mrf.mxu0
      %v1774 = vadd.f32 0.0, %v1773
      %1775 = vmatmul.f32.gmra.mxu0 %v1680
      %v1776 = vpop.f32.mrf.mxu0
      %v1777 = vadd.f32 0.0, %v1776
      %1778 = vmatmul.f32.gmra.mxu0 %v1681
      %v1779 = vpop.f32.mrf.mxu0
      %v1780 = vadd.f32 0.0, %v1779
      %1781 = vmatmul.f32.gmra.mxu0 %v1682
      %v1782 = vpop.f32.mrf.mxu0
      %v1783 = vadd.f32 0.0, %v1782
      %1784 = vmatmul.f32.gmra.mxu0 %v1683
      %v1785 = vpop.f32.mrf.mxu0
      %v1786 = vadd.f32 0.0, %v1785
      %1787 = vmatmul.f32.gmra.mxu0 %v1684
      %v1788 = vpop.f32.mrf.mxu0
      %v1789 = vadd.f32 0.0, %v1788
      %1790 = vmatmul.f32.gmra.mxu0 %v1685
      %v1791 = vpop.f32.mrf.mxu0
      %v1792 = vadd.f32 0.0, %v1791
      %1793 = vmatmul.f32.gmra.mxu0 %v1686
      %v1794 = vpop.f32.mrf.mxu0
      %v1795 = vadd.f32 0.0, %v1794
      %1796 = vmatmul.f32.gmra.mxu0 %v1687
      %v1797 = vpop.f32.mrf.mxu0
      %v1798 = vadd.f32 0.0, %v1797
      %1799 = vmatmul.f32.gmra.mxu0 %v1688
      %v1800 = vpop.f32.mrf.mxu0
      %v1801 = vadd.f32 0.0, %v1800
      %1802 = vmatmul.f32.gmra.mxu0 %v1689
      %v1803 = vpop.f32.mrf.mxu0
      %v1804 = vadd.f32 0.0, %v1803
      %1805 = vmatmul.f32.gmra.mxu0 %v1690
      %v1806 = vpop.f32.mrf.mxu0
      %v1807 = vadd.f32 0.0, %v1806
      %1808 = vmatmul.f32.gmra.mxu0 %v1691
      %v1809 = vpop.f32.mrf.mxu0
      %v1810 = vadd.f32 0.0, %v1809
      %1811 = vmatmul.f32.gmra.mxu0 %v1692
      %v1812 = vpop.f32.mrf.mxu0
      %v1813 = vadd.f32 0.0, %v1812
      %1814 = vmatmul.f32.gmra.mxu0 %v1693
      %v1815 = vpop.f32.mrf.mxu0
      %v1816 = vadd.f32 0.0, %v1815
      %1817 = vmatmul.f32.gmra.mxu0 %v1694
      %v1818 = vpop.f32.mrf.mxu0
      %v1819 = vadd.f32 0.0, %v1818
      %1820 = vmatmul.f32.gmra.mxu0 %v1695
      %v1821 = vpop.f32.mrf.mxu0
      %v1822 = vadd.f32 0.0, %v1821
      %1823 = vmatmul.f32.gmra.mxu0 %v1696
      %v1824 = vpop.f32.mrf.mxu0
      %v1825 = vadd.f32 0.0, %v1824
      %1826 = vdwg.mxu0
      %v1827 = vadd.f32 %v1570, %v1732
      %v1828 = vadd.f32 %v1573, %v1735
      %v1829 = vadd.f32 %v1576, %v1738
      %v1830 = vadd.f32 %v1579, %v1741
      %v1831 = vadd.f32 %v1582, %v1744
      %v1832 = vadd.f32 %v1585, %v1747
      %v1833 = vadd.f32 %v1588, %v1750
      %v1834 = vadd.f32 %v1591, %v1753
      %v1835 = vadd.f32 %v1594, %v1756
      %v1836 = vadd.f32 %v1597, %v1759
      %v1837 = vadd.f32 %v1600, %v1762
      %v1838 = vadd.f32 %v1603, %v1765
      %v1839 = vadd.f32 %v1606, %v1768
      %v1840 = vadd.f32 %v1609, %v1771
      %v1841 = vadd.f32 %v1612, %v1774
      %v1842 = vadd.f32 %v1615, %v1777
      %v1843 = vadd.f32 %v1618, %v1780
      %v1844 = vadd.f32 %v1621, %v1783
      %v1845 = vadd.f32 %v1624, %v1786
      %v1846 = vadd.f32 %v1627, %v1789
      %v1847 = vadd.f32 %v1630, %v1792
      %v1848 = vadd.f32 %v1633, %v1795
      %v1849 = vadd.f32 %v1636, %v1798
      %v1850 = vadd.f32 %v1639, %v1801
      %v1851 = vadd.f32 %v1642, %v1804
      %v1852 = vadd.f32 %v1645, %v1807
      %v1853 = vadd.f32 %v1648, %v1810
      %v1854 = vadd.f32 %v1651, %v1813
      %v1855 = vadd.f32 %v1654, %v1816
      %v1856 = vadd.f32 %v1657, %v1819
      %v1857 = vadd.f32 %v1660, %v1822
      %v1858 = vadd.f32 %v1663, %v1825
      %s1859 = scalar_lea.vmem %s3, 896
      %v1860 = vld [vmem:[%s1859] sm:$0xff]
      %v1861 = vld [vmem:[%s1859 + $0x8] sm:$0xff]
      %v1862 = vld [vmem:[%s1859 + $0x10] sm:$0xff]
      %v1863 = vld [vmem:[%s1859 + $0x18] sm:$0xff]
      %v1864 = vld [vmem:[%s1859 + $0x20] sm:$0xff]
      %v1865 = vld [vmem:[%s1859 + $0x28] sm:$0xff]
      %v1866 = vld [vmem:[%s1859 + $0x30] sm:$0xff]
      %v1867 = vld [vmem:[%s1859 + $0x38] sm:$0xff]
      %v1868 = vld [vmem:[%s1859 + $0x40] sm:$0xff]
      %v1869 = vld [vmem:[%s1859 + $0x48] sm:$0xff]
      %v1870 = vld [vmem:[%s1859 + $0x50] sm:$0xff]
      %v1871 = vld [vmem:[%s1859 + $0x58] sm:$0xff]
      %v1872 = vld [vmem:[%s1859 + $0x60] sm:$0xff]
      %v1873 = vld [vmem:[%s1859 + $0x68] sm:$0xff]
      %v1874 = vld [vmem:[%s1859 + $0x70] sm:$0xff]
      %v1875 = vld [vmem:[%s1859 + $0x78] sm:$0xff]
      %1876 = vmatpush.msra.mxu0 %v1875
      %1877 = vmatpush.msra.mxu0 %v1874
      %1878 = vmatpush.msra.mxu0 %v1873
      %1879 = vmatpush.msra.mxu0 %v1872
      %1880 = vmatpush.msra.mxu0 %v1871
      %1881 = vmatpush.msra.mxu0 %v1870
      %1882 = vmatpush.msra.mxu0 %v1869
      %1883 = vmatpush.msra.mxu0 %v1868
      %1884 = vmatpush.msra.mxu0 %v1867
      %1885 = vmatpush.msra.mxu0 %v1866
      %1886 = vmatpush.msra.mxu0 %v1865
      %1887 = vmatpush.msra.mxu0 %v1864
      %1888 = vmatpush.msra.mxu0 %v1863
      %1889 = vmatpush.msra.mxu0 %v1862
      %1890 = vmatpush.msra.mxu0 %v1861
      %1891 = vmatpush.msra.mxu0 %v1860
      %1892 = vmatmul.f32.gmra.mxu0 %v918
      %v1893 = vpop.f32.mrf.mxu0
      %v1894 = vadd.f32 0.0, %v1893
      %1895 = vmatmul.f32.gmra.mxu0 %v919
      %v1896 = vpop.f32.mrf.mxu0
      %v1897 = vadd.f32 0.0, %v1896
      %1898 = vmatmul.f32.gmra.mxu0 %v920
      %v1899 = vpop.f32.mrf.mxu0
      %v1900 = vadd.f32 0.0, %v1899
      %1901 = vmatmul.f32.gmra.mxu0 %v921
      %v1902 = vpop.f32.mrf.mxu0
      %v1903 = vadd.f32 0.0, %v1902
      %1904 = vmatmul.f32.gmra.mxu0 %v922
      %v1905 = vpop.f32.mrf.mxu0
      %v1906 = vadd.f32 0.0, %v1905
      %1907 = vmatmul.f32.gmra.mxu0 %v923
      %v1908 = vpop.f32.mrf.mxu0
      %v1909 = vadd.f32 0.0, %v1908
      %1910 = vmatmul.f32.gmra.mxu0 %v924
      %v1911 = vpop.f32.mrf.mxu0
      %v1912 = vadd.f32 0.0, %v1911
      %1913 = vmatmul.f32.gmra.mxu0 %v925
      %v1914 = vpop.f32.mrf.mxu0
      %v1915 = vadd.f32 0.0, %v1914
      %1916 = vmatmul.f32.gmra.mxu0 %v926
      %v1917 = vpop.f32.mrf.mxu0
      %v1918 = vadd.f32 0.0, %v1917
      %1919 = vmatmul.f32.gmra.mxu0 %v927
      %v1920 = vpop.f32.mrf.mxu0
      %v1921 = vadd.f32 0.0, %v1920
      %1922 = vmatmul.f32.gmra.mxu0 %v928
      %v1923 = vpop.f32.mrf.mxu0
      %v1924 = vadd.f32 0.0, %v1923
      %1925 = vmatmul.f32.gmra.mxu0 %v929
      %v1926 = vpop.f32.mrf.mxu0
      %v1927 = vadd.f32 0.0, %v1926
      %1928 = vmatmul.f32.gmra.mxu0 %v930
      %v1929 = vpop.f32.mrf.mxu0
      %v1930 = vadd.f32 0.0, %v1929
      %1931 = vmatmul.f32.gmra.mxu0 %v931
      %v1932 = vpop.f32.mrf.mxu0
      %v1933 = vadd.f32 0.0, %v1932
      %1934 = vmatmul.f32.gmra.mxu0 %v932
      %v1935 = vpop.f32.mrf.mxu0
      %v1936 = vadd.f32 0.0, %v1935
      %1937 = vmatmul.f32.gmra.mxu0 %v933
      %v1938 = vpop.f32.mrf.mxu0
      %v1939 = vadd.f32 0.0, %v1938
      %1940 = vmatmul.f32.gmra.mxu0 %v934
      %v1941 = vpop.f32.mrf.mxu0
      %v1942 = vadd.f32 0.0, %v1941
      %1943 = vmatmul.f32.gmra.mxu0 %v935
      %v1944 = vpop.f32.mrf.mxu0
      %v1945 = vadd.f32 0.0, %v1944
      %1946 = vmatmul.f32.gmra.mxu0 %v936
      %v1947 = vpop.f32.mrf.mxu0
      %v1948 = vadd.f32 0.0, %v1947
      %1949 = vmatmul.f32.gmra.mxu0 %v937
      %v1950 = vpop.f32.mrf.mxu0
      %v1951 = vadd.f32 0.0, %v1950
      %1952 = vmatmul.f32.gmra.mxu0 %v938
      %v1953 = vpop.f32.mrf.mxu0
      %v1954 = vadd.f32 0.0, %v1953
      %1955 = vmatmul.f32.gmra.mxu0 %v939
      %v1956 = vpop.f32.mrf.mxu0
      %v1957 = vadd.f32 0.0, %v1956
      %1958 = vmatmul.f32.gmra.mxu0 %v940
      %v1959 = vpop.f32.mrf.mxu0
      %v1960 = vadd.f32 0.0, %v1959
      %1961 = vmatmul.f32.gmra.mxu0 %v941
      %v1962 = vpop.f32.mrf.mxu0
      %v1963 = vadd.f32 0.0, %v1962
      %1964 = vmatmul.f32.gmra.mxu0 %v942
      %v1965 = vpop.f32.mrf.mxu0
      %v1966 = vadd.f32 0.0, %v1965
      %1967 = vmatmul.f32.gmra.mxu0 %v943
      %v1968 = vpop.f32.mrf.mxu0
      %v1969 = vadd.f32 0.0, %v1968
      %1970 = vmatmul.f32.gmra.mxu0 %v944
      %v1971 = vpop.f32.mrf.mxu0
      %v1972 = vadd.f32 0.0, %v1971
      %1973 = vmatmul.f32.gmra.mxu0 %v945
      %v1974 = vpop.f32.mrf.mxu0
      %v1975 = vadd.f32 0.0, %v1974
      %1976 = vmatmul.f32.gmra.mxu0 %v946
      %v1977 = vpop.f32.mrf.mxu0
      %v1978 = vadd.f32 0.0, %v1977
      %1979 = vmatmul.f32.gmra.mxu0 %v947
      %v1980 = vpop.f32.mrf.mxu0
      %v1981 = vadd.f32 0.0, %v1980
      %1982 = vmatmul.f32.gmra.mxu0 %v948
      %v1983 = vpop.f32.mrf.mxu0
      %v1984 = vadd.f32 0.0, %v1983
      %1985 = vmatmul.f32.gmra.mxu0 %v949
      %v1986 = vpop.f32.mrf.mxu0
      %v1987 = vadd.f32 0.0, %v1986
      %1988 = vdwg.mxu0
      %v1989 = vadd.f32 %v1827, %v1894
      %v1990 = vadd.f32 %v1828, %v1897
      %v1991 = vadd.f32 %v1829, %v1900
      %v1992 = vadd.f32 %v1830, %v1903
      %v1993 = vadd.f32 %v1831, %v1906
      %v1994 = vadd.f32 %v1832, %v1909
      %v1995 = vadd.f32 %v1833, %v1912
      %v1996 = vadd.f32 %v1834, %v1915
      %v1997 = vadd.f32 %v1835, %v1918
      %v1998 = vadd.f32 %v1836, %v1921
      %v1999 = vadd.f32 %v1837, %v1924
      %v2000 = vadd.f32 %v1838, %v1927
      %v2001 = vadd.f32 %v1839, %v1930
      %v2002 = vadd.f32 %v1840, %v1933
      %v2003 = vadd.f32 %v1841, %v1936
      %v2004 = vadd.f32 %v1842, %v1939
      %v2005 = vadd.f32 %v1843, %v1942
      %v2006 = vadd.f32 %v1844, %v1945
      %v2007 = vadd.f32 %v1845, %v1948
      %v2008 = vadd.f32 %v1846, %v1951
      %v2009 = vadd.f32 %v1847, %v1954
      %v2010 = vadd.f32 %v1848, %v1957
      %v2011 = vadd.f32 %v1849, %v1960
      %v2012 = vadd.f32 %v1850, %v1963
      %v2013 = vadd.f32 %v1851, %v1966
      %v2014 = vadd.f32 %v1852, %v1969
      %v2015 = vadd.f32 %v1853, %v1972
      %v2016 = vadd.f32 %v1854, %v1975
      %v2017 = vadd.f32 %v1855, %v1978
      %v2018 = vadd.f32 %v1856, %v1981
      %v2019 = vadd.f32 %v1857, %v1984
      %v2020 = vadd.f32 %v1858, %v1987
      %v2021 = vadd.f32 %v1989, %v1307
      %v2022 = vadd.f32 %v1990, %v1307
      %v2023 = vadd.f32 %v1991, %v1307
      %v2024 = vadd.f32 %v1992, %v1307
      %v2025 = vadd.f32 %v1993, %v1307
      %v2026 = vadd.f32 %v1994, %v1307
      %v2027 = vadd.f32 %v1995, %v1307
      %v2028 = vadd.f32 %v1996, %v1307
      %v2029 = vadd.f32 %v1997, %v1307
      %v2030 = vadd.f32 %v1998, %v1307
      %v2031 = vadd.f32 %v1999, %v1307
      %v2032 = vadd.f32 %v2000, %v1307
      %v2033 = vadd.f32 %v2001, %v1307
      %v2034 = vadd.f32 %v2002, %v1307
      %v2035 = vadd.f32 %v2003, %v1307
      %v2036 = vadd.f32 %v2004, %v1307
      %v2037 = vadd.f32 %v2005, %v1307
      %v2038 = vadd.f32 %v2006, %v1307
      %v2039 = vadd.f32 %v2007, %v1307
      %v2040 = vadd.f32 %v2008, %v1307
      %v2041 = vadd.f32 %v2009, %v1307
      %v2042 = vadd.f32 %v2010, %v1307
      %v2043 = vadd.f32 %v2011, %v1307
      %v2044 = vadd.f32 %v2012, %v1307
      %v2045 = vadd.f32 %v2013, %v1307
      %v2046 = vadd.f32 %v2014, %v1307
      %v2047 = vadd.f32 %v2015, %v1307
      %v2048 = vadd.f32 %v2016, %v1307
      %v2049 = vadd.f32 %v2017, %v1307
      %v2050 = vadd.f32 %v2018, %v1307
      %v2051 = vadd.f32 %v2019, %v1307
      %v2052 = vadd.f32 %v2020, %v1307
      %v2053 = vmax.f32 %v2021, 0.0
      %v2054 = vmax.f32 %v2022, 0.0
      %v2055 = vmax.f32 %v2023, 0.0
      %v2056 = vmax.f32 %v2024, 0.0
      %v2057 = vmax.f32 %v2025, 0.0
      %v2058 = vmax.f32 %v2026, 0.0
      %v2059 = vmax.f32 %v2027, 0.0
      %v2060 = vmax.f32 %v2028, 0.0
      %v2061 = vmax.f32 %v2029, 0.0
      %v2062 = vmax.f32 %v2030, 0.0
      %v2063 = vmax.f32 %v2031, 0.0
      %v2064 = vmax.f32 %v2032, 0.0
      %v2065 = vmax.f32 %v2033, 0.0
      %v2066 = vmax.f32 %v2034, 0.0
      %v2067 = vmax.f32 %v2035, 0.0
      %v2068 = vmax.f32 %v2036, 0.0
      %v2069 = vmax.f32 %v2037, 0.0
      %v2070 = vmax.f32 %v2038, 0.0
      %v2071 = vmax.f32 %v2039, 0.0
      %v2072 = vmax.f32 %v2040, 0.0
      %v2073 = vmax.f32 %v2041, 0.0
      %v2074 = vmax.f32 %v2042, 0.0
      %v2075 = vmax.f32 %v2043, 0.0
      %v2076 = vmax.f32 %v2044, 0.0
      %v2077 = vmax.f32 %v2045, 0.0
      %v2078 = vmax.f32 %v2046, 0.0
      %v2079 = vmax.f32 %v2047, 0.0
      %v2080 = vmax.f32 %v2048, 0.0
      %v2081 = vmax.f32 %v2049, 0.0
      %v2082 = vmax.f32 %v2050, 0.0
      %v2083 = vmax.f32 %v2051, 0.0
      %v2084 = vmax.f32 %v2052, 0.0
      %s2085 = scalar_lea.vmem [#allocation2], 48
      %v2086 = vld [vmem:[%s2085 + $0x1] sm:$0xff]
      %v2087 = vld [vmem:[%s2085 + $0x9] sm:$0xff]
      %v2088 = vld [vmem:[%s2085 + $0x19] sm:$0xff]
      %v2089 = vld [vmem:[%s2085 + $0x21] sm:$0xff]
      %v2090 = vld [vmem:[%s2085 + $0x31] sm:$0xff]
      %v2091 = vld [vmem:[%s2085 + $0x39] sm:$0xff]
      %v2092 = vld [vmem:[%s2085 + $0x49] sm:$0xff]
      %v2093 = vld [vmem:[%s2085 + $0x51] sm:$0xff]
      %v2094 = vld [vmem:[%s2085 + $0x61] sm:$0xff]
      %v2095 = vld [vmem:[%s2085 + $0x69] sm:$0xff]
      %v2096 = vld [vmem:[%s2085 + $0x79] sm:$0xff]
      %v2097 = vld [vmem:[%s2085 + $0x81] sm:$0xff]
      %v2098 = vld [vmem:[%s2085 + $0x91] sm:$0xff]
      %v2099 = vld [vmem:[%s2085 + $0x99] sm:$0xff]
      %v2100 = vld [vmem:[%s2085 + $0xa9] sm:$0xff]
      %v2101 = vld [vmem:[%s2085 + $0xb1] sm:$0xff]
      %v2102 = vld [vmem:[%s2085 + $0xc1] sm:$0xff]
      %v2103 = vld [vmem:[%s2085 + $0xc9] sm:$0xff]
      %v2104 = vld [vmem:[%s2085 + $0xd9] sm:$0xff]
      %v2105 = vld [vmem:[%s2085 + $0xe1] sm:$0xff]
      %v2106 = vld [vmem:[%s2085 + $0xf1] sm:$0xff]
      %v2107 = vld [vmem:[%s2085 + $0xf9] sm:$0xff]
      %v2108 = vld [vmem:[%s2085 + $0x109] sm:$0xff]
      %v2109 = vld [vmem:[%s2085 + $0x111] sm:$0xff]
      %v2110 = vld [vmem:[%s2085 + $0x121] sm:$0xff]
      %v2111 = vld [vmem:[%s2085 + $0x129] sm:$0xff]
      %v2112 = vld [vmem:[%s2085 + $0x139] sm:$0xff]
      %v2113 = vld [vmem:[%s2085 + $0x141] sm:$0xff]
      %v2114 = vld [vmem:[%s2085 + $0x151] sm:$0xff]
      %v2115 = vld [vmem:[%s2085 + $0x159] sm:$0xff]
      %v2116 = vld [vmem:[%s2085 + $0x169] sm:$0xff]
      %v2117 = vld [vmem:[%s2085 + $0x171] sm:$0xff]
      %s2118 = scalar_lea.vmem %s3, 1024
      %v2119 = vld [vmem:[%s2118] sm:$0xff]
      %v2120 = vld [vmem:[%s2118 + $0x8] sm:$0xff]
      %v2121 = vld [vmem:[%s2118 + $0x10] sm:$0xff]
      %v2122 = vld [vmem:[%s2118 + $0x18] sm:$0xff]
      %v2123 = vld [vmem:[%s2118 + $0x20] sm:$0xff]
      %v2124 = vld [vmem:[%s2118 + $0x28] sm:$0xff]
      %v2125 = vld [vmem:[%s2118 + $0x30] sm:$0xff]
      %v2126 = vld [vmem:[%s2118 + $0x38] sm:$0xff]
      %v2127 = vld [vmem:[%s2118 + $0x40] sm:$0xff]
      %v2128 = vld [vmem:[%s2118 + $0x48] sm:$0xff]
      %v2129 = vld [vmem:[%s2118 + $0x50] sm:$0xff]
      %v2130 = vld [vmem:[%s2118 + $0x58] sm:$0xff]
      %v2131 = vld [vmem:[%s2118 + $0x60] sm:$0xff]
      %v2132 = vld [vmem:[%s2118 + $0x68] sm:$0xff]
      %v2133 = vld [vmem:[%s2118 + $0x70] sm:$0xff]
      %v2134 = vld [vmem:[%s2118 + $0x78] sm:$0xff]
      %v2135 = vld [vmem:[%s2085] sm:$0xff]
      %v2136 = vld [vmem:[%s2085 + $0x8] sm:$0xff]
      %v2137 = vld [vmem:[%s2085 + $0x18] sm:$0xff]
      %v2138 = vld [vmem:[%s2085 + $0x20] sm:$0xff]
      %v2139 = vld [vmem:[%s2085 + $0x30] sm:$0xff]
      %v2140 = vld [vmem:[%s2085 + $0x38] sm:$0xff]
      %v2141 = vld [vmem:[%s2085 + $0x48] sm:$0xff]
      %v2142 = vld [vmem:[%s2085 + $0x50] sm:$0xff]
      %v2143 = vld [vmem:[%s2085 + $0x60] sm:$0xff]
      %v2144 = vld [vmem:[%s2085 + $0x68] sm:$0xff]
      %v2145 = vld [vmem:[%s2085 + $0x78] sm:$0xff]
      %v2146 = vld [vmem:[%s2085 + $0x80] sm:$0xff]
      %v2147 = vld [vmem:[%s2085 + $0x90] sm:$0xff]
      %v2148 = vld [vmem:[%s2085 + $0x98] sm:$0xff]
      %v2149 = vld [vmem:[%s2085 + $0xa8] sm:$0xff]
      %v2150 = vld [vmem:[%s2085 + $0xb0] sm:$0xff]
      %v2151 = vld [vmem:[%s2085 + $0xc0] sm:$0xff]
      %v2152 = vld [vmem:[%s2085 + $0xc8] sm:$0xff]
      %v2153 = vld [vmem:[%s2085 + $0xd8] sm:$0xff]
      %v2154 = vld [vmem:[%s2085 + $0xe0] sm:$0xff]
      %v2155 = vld [vmem:[%s2085 + $0xf0] sm:$0xff]
      %v2156 = vld [vmem:[%s2085 + $0xf8] sm:$0xff]
      %v2157 = vld [vmem:[%s2085 + $0x108] sm:$0xff]
      %v2158 = vld [vmem:[%s2085 + $0x110] sm:$0xff]
      %v2159 = vld [vmem:[%s2085 + $0x120] sm:$0xff]
      %v2160 = vld [vmem:[%s2085 + $0x128] sm:$0xff]
      %v2161 = vld [vmem:[%s2085 + $0x138] sm:$0xff]
      %v2162 = vld [vmem:[%s2085 + $0x140] sm:$0xff]
      %v2163 = vld [vmem:[%s2085 + $0x150] sm:$0xff]
      %v2164 = vld [vmem:[%s2085 + $0x158] sm:$0xff]
      %v2165 = vld [vmem:[%s2085 + $0x168] sm:$0xff]
      %v2166 = vld [vmem:[%s2085 + $0x170] sm:$0xff]
      %s2167 = scalar_lea.vmem %s3, 1152
      %v2168 = vld [vmem:[%s2167] sm:$0xff]
      %v2169 = vld [vmem:[%s2167 + $0x8] sm:$0xff]
      %v2170 = vld [vmem:[%s2167 + $0x10] sm:$0xff]
      %v2171 = vld [vmem:[%s2167 + $0x18] sm:$0xff]
      %v2172 = vld [vmem:[%s2167 + $0x20] sm:$0xff]
      %v2173 = vld [vmem:[%s2167 + $0x28] sm:$0xff]
      %v2174 = vld [vmem:[%s2167 + $0x30] sm:$0xff]
      %v2175 = vld [vmem:[%s2167 + $0x38] sm:$0xff]
      %v2176 = vld [vmem:[%s2167 + $0x40] sm:$0xff]
      %v2177 = vld [vmem:[%s2167 + $0x48] sm:$0xff]
      %v2178 = vld [vmem:[%s2167 + $0x50] sm:$0xff]
      %v2179 = vld [vmem:[%s2167 + $0x58] sm:$0xff]
      %v2180 = vld [vmem:[%s2167 + $0x60] sm:$0xff]
      %v2181 = vld [vmem:[%s2167 + $0x68] sm:$0xff]
      %v2182 = vld [vmem:[%s2167 + $0x70] sm:$0xff]
      %v2183 = vld [vmem:[%s2167 + $0x78] sm:$0xff]
      %2184 = vmatpush.msra.mxu0 %v2183
      %2185 = vmatpush.msra.mxu0 %v2182
      %2186 = vmatpush.msra.mxu0 %v2181
      %2187 = vmatpush.msra.mxu0 %v2180
      %2188 = vmatpush.msra.mxu0 %v2179
      %2189 = vmatpush.msra.mxu0 %v2178
      %2190 = vmatpush.msra.mxu0 %v2177
      %2191 = vmatpush.msra.mxu0 %v2176
      %2192 = vmatpush.msra.mxu0 %v2175
      %2193 = vmatpush.msra.mxu0 %v2174
      %2194 = vmatpush.msra.mxu0 %v2173
      %2195 = vmatpush.msra.mxu0 %v2172
      %2196 = vmatpush.msra.mxu0 %v2171
      %2197 = vmatpush.msra.mxu0 %v2170
      %2198 = vmatpush.msra.mxu0 %v2169
      %2199 = vmatpush.msra.mxu0 %v2168
      %2200 = vmatmul.f32.gmra.mxu0 %v2135
      %v2201 = vpop.f32.mrf.mxu0
      %v2202 = vadd.f32 0.0, %v2201
      %2203 = vmatmul.f32.gmra.mxu0 %v2136
      %v2204 = vpop.f32.mrf.mxu0
      %v2205 = vadd.f32 0.0, %v2204
      %2206 = vmatmul.f32.gmra.mxu0 %v2137
      %v2207 = vpop.f32.mrf.mxu0
      %v2208 = vadd.f32 0.0, %v2207
      %2209 = vmatmul.f32.gmra.mxu0 %v2138
      %v2210 = vpop.f32.mrf.mxu0
      %v2211 = vadd.f32 0.0, %v2210
      %2212 = vmatmul.f32.gmra.mxu0 %v2139
      %v2213 = vpop.f32.mrf.mxu0
      %v2214 = vadd.f32 0.0, %v2213
      %2215 = vmatmul.f32.gmra.mxu0 %v2140
      %v2216 = vpop.f32.mrf.mxu0
      %v2217 = vadd.f32 0.0, %v2216
      %2218 = vmatmul.f32.gmra.mxu0 %v2141
      %v2219 = vpop.f32.mrf.mxu0
      %v2220 = vadd.f32 0.0, %v2219
      %2221 = vmatmul.f32.gmra.mxu0 %v2142
      %v2222 = vpop.f32.mrf.mxu0
      %v2223 = vadd.f32 0.0, %v2222
      %2224 = vmatmul.f32.gmra.mxu0 %v2143
      %v2225 = vpop.f32.mrf.mxu0
      %v2226 = vadd.f32 0.0, %v2225
      %2227 = vmatmul.f32.gmra.mxu0 %v2144
      %v2228 = vpop.f32.mrf.mxu0
      %v2229 = vadd.f32 0.0, %v2228
      %2230 = vmatmul.f32.gmra.mxu0 %v2145
      %v2231 = vpop.f32.mrf.mxu0
      %v2232 = vadd.f32 0.0, %v2231
      %2233 = vmatmul.f32.gmra.mxu0 %v2146
      %v2234 = vpop.f32.mrf.mxu0
      %v2235 = vadd.f32 0.0, %v2234
      %2236 = vmatmul.f32.gmra.mxu0 %v2147
      %v2237 = vpop.f32.mrf.mxu0
      %v2238 = vadd.f32 0.0, %v2237
      %2239 = vmatmul.f32.gmra.mxu0 %v2148
      %v2240 = vpop.f32.mrf.mxu0
      %v2241 = vadd.f32 0.0, %v2240
      %2242 = vmatmul.f32.gmra.mxu0 %v2149
      %v2243 = vpop.f32.mrf.mxu0
      %v2244 = vadd.f32 0.0, %v2243
      %2245 = vmatmul.f32.gmra.mxu0 %v2150
      %v2246 = vpop.f32.mrf.mxu0
      %v2247 = vadd.f32 0.0, %v2246
      %2248 = vmatmul.f32.gmra.mxu0 %v2151
      %v2249 = vpop.f32.mrf.mxu0
      %v2250 = vadd.f32 0.0, %v2249
      %2251 = vmatmul.f32.gmra.mxu0 %v2152
      %v2252 = vpop.f32.mrf.mxu0
      %v2253 = vadd.f32 0.0, %v2252
      %2254 = vmatmul.f32.gmra.mxu0 %v2153
      %v2255 = vpop.f32.mrf.mxu0
      %v2256 = vadd.f32 0.0, %v2255
      %2257 = vmatmul.f32.gmra.mxu0 %v2154
      %v2258 = vpop.f32.mrf.mxu0
      %v2259 = vadd.f32 0.0, %v2258
      %2260 = vmatmul.f32.gmra.mxu0 %v2155
      %v2261 = vpop.f32.mrf.mxu0
      %v2262 = vadd.f32 0.0, %v2261
      %2263 = vmatmul.f32.gmra.mxu0 %v2156
      %v2264 = vpop.f32.mrf.mxu0
      %v2265 = vadd.f32 0.0, %v2264
      %2266 = vmatmul.f32.gmra.mxu0 %v2157
      %v2267 = vpop.f32.mrf.mxu0
      %v2268 = vadd.f32 0.0, %v2267
      %2269 = vmatmul.f32.gmra.mxu0 %v2158
      %v2270 = vpop.f32.mrf.mxu0
      %v2271 = vadd.f32 0.0, %v2270
      %2272 = vmatmul.f32.gmra.mxu0 %v2159
      %v2273 = vpop.f32.mrf.mxu0
      %v2274 = vadd.f32 0.0, %v2273
      %2275 = vmatmul.f32.gmra.mxu0 %v2160
      %v2276 = vpop.f32.mrf.mxu0
      %v2277 = vadd.f32 0.0, %v2276
      %2278 = vmatmul.f32.gmra.mxu0 %v2161
      %v2279 = vpop.f32.mrf.mxu0
      %v2280 = vadd.f32 0.0, %v2279
      %2281 = vmatmul.f32.gmra.mxu0 %v2162
      %v2282 = vpop.f32.mrf.mxu0
      %v2283 = vadd.f32 0.0, %v2282
      %2284 = vmatmul.f32.gmra.mxu0 %v2163
      %v2285 = vpop.f32.mrf.mxu0
      %v2286 = vadd.f32 0.0, %v2285
      %2287 = vmatmul.f32.gmra.mxu0 %v2164
      %v2288 = vpop.f32.mrf.mxu0
      %v2289 = vadd.f32 0.0, %v2288
      %2290 = vmatmul.f32.gmra.mxu0 %v2165
      %v2291 = vpop.f32.mrf.mxu0
      %v2292 = vadd.f32 0.0, %v2291
      %2293 = vmatmul.f32.gmra.mxu0 %v2166
      %v2294 = vpop.f32.mrf.mxu0
      %v2295 = vadd.f32 0.0, %v2294
      %2296 = vdwg.mxu0
      %2297 = vmatpush.msra.mxu0 %v2134
      %2298 = vmatpush.msra.mxu0 %v2133
      %2299 = vmatpush.msra.mxu0 %v2132
      %2300 = vmatpush.msra.mxu0 %v2131
      %2301 = vmatpush.msra.mxu0 %v2130
      %2302 = vmatpush.msra.mxu0 %v2129
      %2303 = vmatpush.msra.mxu0 %v2128
      %2304 = vmatpush.msra.mxu0 %v2127
      %2305 = vmatpush.msra.mxu0 %v2126
      %2306 = vmatpush.msra.mxu0 %v2125
      %2307 = vmatpush.msra.mxu0 %v2124
      %2308 = vmatpush.msra.mxu0 %v2123
      %2309 = vmatpush.msra.mxu0 %v2122
      %2310 = vmatpush.msra.mxu0 %v2121
      %2311 = vmatpush.msra.mxu0 %v2120
      %2312 = vmatpush.msra.mxu0 %v2119
      %2313 = vmatmul.f32.gmra.mxu0 %v2086
      %v2314 = vpop.f32.mrf.mxu0
      %v2315 = vadd.f32 %v2202, %v2314
      %2316 = vmatmul.f32.gmra.mxu0 %v2087
      %v2317 = vpop.f32.mrf.mxu0
      %v2318 = vadd.f32 %v2205, %v2317
      %2319 = vmatmul.f32.gmra.mxu0 %v2088
      %v2320 = vpop.f32.mrf.mxu0
      %v2321 = vadd.f32 %v2208, %v2320
      %2322 = vmatmul.f32.gmra.mxu0 %v2089
      %v2323 = vpop.f32.mrf.mxu0
      %v2324 = vadd.f32 %v2211, %v2323
      %2325 = vmatmul.f32.gmra.mxu0 %v2090
      %v2326 = vpop.f32.mrf.mxu0
      %v2327 = vadd.f32 %v2214, %v2326
      %2328 = vmatmul.f32.gmra.mxu0 %v2091
      %v2329 = vpop.f32.mrf.mxu0
      %v2330 = vadd.f32 %v2217, %v2329
      %2331 = vmatmul.f32.gmra.mxu0 %v2092
      %v2332 = vpop.f32.mrf.mxu0
      %v2333 = vadd.f32 %v2220, %v2332
      %2334 = vmatmul.f32.gmra.mxu0 %v2093
      %v2335 = vpop.f32.mrf.mxu0
      %v2336 = vadd.f32 %v2223, %v2335
      %2337 = vmatmul.f32.gmra.mxu0 %v2094
      %v2338 = vpop.f32.mrf.mxu0
      %v2339 = vadd.f32 %v2226, %v2338
      %2340 = vmatmul.f32.gmra.mxu0 %v2095
      %v2341 = vpop.f32.mrf.mxu0
      %v2342 = vadd.f32 %v2229, %v2341
      %2343 = vmatmul.f32.gmra.mxu0 %v2096
      %v2344 = vpop.f32.mrf.mxu0
      %v2345 = vadd.f32 %v2232, %v2344
      %2346 = vmatmul.f32.gmra.mxu0 %v2097
      %v2347 = vpop.f32.mrf.mxu0
      %v2348 = vadd.f32 %v2235, %v2347
      %2349 = vmatmul.f32.gmra.mxu0 %v2098
      %v2350 = vpop.f32.mrf.mxu0
      %v2351 = vadd.f32 %v2238, %v2350
      %2352 = vmatmul.f32.gmra.mxu0 %v2099
      %v2353 = vpop.f32.mrf.mxu0
      %v2354 = vadd.f32 %v2241, %v2353
      %2355 = vmatmul.f32.gmra.mxu0 %v2100
      %v2356 = vpop.f32.mrf.mxu0
      %v2357 = vadd.f32 %v2244, %v2356
      %2358 = vmatmul.f32.gmra.mxu0 %v2101
      %v2359 = vpop.f32.mrf.mxu0
      %v2360 = vadd.f32 %v2247, %v2359
      %2361 = vmatmul.f32.gmra.mxu0 %v2102
      %v2362 = vpop.f32.mrf.mxu0
      %v2363 = vadd.f32 %v2250, %v2362
      %2364 = vmatmul.f32.gmra.mxu0 %v2103
      %v2365 = vpop.f32.mrf.mxu0
      %v2366 = vadd.f32 %v2253, %v2365
      %2367 = vmatmul.f32.gmra.mxu0 %v2104
      %v2368 = vpop.f32.mrf.mxu0
      %v2369 = vadd.f32 %v2256, %v2368
      %2370 = vmatmul.f32.gmra.mxu0 %v2105
      %v2371 = vpop.f32.mrf.mxu0
      %v2372 = vadd.f32 %v2259, %v2371
      %2373 = vmatmul.f32.gmra.mxu0 %v2106
      %v2374 = vpop.f32.mrf.mxu0
      %v2375 = vadd.f32 %v2262, %v2374
      %2376 = vmatmul.f32.gmra.mxu0 %v2107
      %v2377 = vpop.f32.mrf.mxu0
      %v2378 = vadd.f32 %v2265, %v2377
      %2379 = vmatmul.f32.gmra.mxu0 %v2108
      %v2380 = vpop.f32.mrf.mxu0
      %v2381 = vadd.f32 %v2268, %v2380
      %2382 = vmatmul.f32.gmra.mxu0 %v2109
      %v2383 = vpop.f32.mrf.mxu0
      %v2384 = vadd.f32 %v2271, %v2383
      %2385 = vmatmul.f32.gmra.mxu0 %v2110
      %v2386 = vpop.f32.mrf.mxu0
      %v2387 = vadd.f32 %v2274, %v2386
      %2388 = vmatmul.f32.gmra.mxu0 %v2111
      %v2389 = vpop.f32.mrf.mxu0
      %v2390 = vadd.f32 %v2277, %v2389
      %2391 = vmatmul.f32.gmra.mxu0 %v2112
      %v2392 = vpop.f32.mrf.mxu0
      %v2393 = vadd.f32 %v2280, %v2392
      %2394 = vmatmul.f32.gmra.mxu0 %v2113
      %v2395 = vpop.f32.mrf.mxu0
      %v2396 = vadd.f32 %v2283, %v2395
      %2397 = vmatmul.f32.gmra.mxu0 %v2114
      %v2398 = vpop.f32.mrf.mxu0
      %v2399 = vadd.f32 %v2286, %v2398
      %2400 = vmatmul.f32.gmra.mxu0 %v2115
      %v2401 = vpop.f32.mrf.mxu0
      %v2402 = vadd.f32 %v2289, %v2401
      %2403 = vmatmul.f32.gmra.mxu0 %v2116
      %v2404 = vpop.f32.mrf.mxu0
      %v2405 = vadd.f32 %v2292, %v2404
      %2406 = vmatmul.f32.gmra.mxu0 %v2117
      %v2407 = vpop.f32.mrf.mxu0
      %v2408 = vadd.f32 %v2295, %v2407
      %2409 = vdwg.mxu0
      %s2410 = scalar_lea.vmem %s3, 1280
      %v2411 = vld [vmem:[%s2410] sm:$0xff]
      %v2412 = vld [vmem:[%s2410 + $0x8] sm:$0xff]
      %v2413 = vld [vmem:[%s2410 + $0x10] sm:$0xff]
      %v2414 = vld [vmem:[%s2410 + $0x18] sm:$0xff]
      %v2415 = vld [vmem:[%s2410 + $0x20] sm:$0xff]
      %v2416 = vld [vmem:[%s2410 + $0x28] sm:$0xff]
      %v2417 = vld [vmem:[%s2410 + $0x30] sm:$0xff]
      %v2418 = vld [vmem:[%s2410 + $0x38] sm:$0xff]
      %v2419 = vld [vmem:[%s2410 + $0x40] sm:$0xff]
      %v2420 = vld [vmem:[%s2410 + $0x48] sm:$0xff]
      %v2421 = vld [vmem:[%s2410 + $0x50] sm:$0xff]
      %v2422 = vld [vmem:[%s2410 + $0x58] sm:$0xff]
      %v2423 = vld [vmem:[%s2410 + $0x60] sm:$0xff]
      %v2424 = vld [vmem:[%s2410 + $0x68] sm:$0xff]
      %v2425 = vld [vmem:[%s2410 + $0x70] sm:$0xff]
      %v2426 = vld [vmem:[%s2410 + $0x78] sm:$0xff]
      %2427 = vmatpush.msra.mxu0 %v2426
      %2428 = vmatpush.msra.mxu0 %v2425
      %2429 = vmatpush.msra.mxu0 %v2424
      %2430 = vmatpush.msra.mxu0 %v2423
      %2431 = vmatpush.msra.mxu0 %v2422
      %2432 = vmatpush.msra.mxu0 %v2421
      %2433 = vmatpush.msra.mxu0 %v2420
      %2434 = vmatpush.msra.mxu0 %v2419
      %2435 = vmatpush.msra.mxu0 %v2418
      %2436 = vmatpush.msra.mxu0 %v2417
      %2437 = vmatpush.msra.mxu0 %v2416
      %2438 = vmatpush.msra.mxu0 %v2415
      %2439 = vmatpush.msra.mxu0 %v2414
      %2440 = vmatpush.msra.mxu0 %v2413
      %2441 = vmatpush.msra.mxu0 %v2412
      %2442 = vmatpush.msra.mxu0 %v2411
      %2443 = vmatmul.f32.gmra.mxu0 %v595
      %v2444 = vpop.f32.mrf.mxu0
      %v2445 = vadd.f32 0.0, %v2444
      %2446 = vmatmul.f32.gmra.mxu0 %v596
      %v2447 = vpop.f32.mrf.mxu0
      %v2448 = vadd.f32 0.0, %v2447
      %2449 = vmatmul.f32.gmra.mxu0 %v597
      %v2450 = vpop.f32.mrf.mxu0
      %v2451 = vadd.f32 0.0, %v2450
      %2452 = vmatmul.f32.gmra.mxu0 %v598
      %v2453 = vpop.f32.mrf.mxu0
      %v2454 = vadd.f32 0.0, %v2453
      %2455 = vmatmul.f32.gmra.mxu0 %v599
      %v2456 = vpop.f32.mrf.mxu0
      %v2457 = vadd.f32 0.0, %v2456
      %2458 = vmatmul.f32.gmra.mxu0 %v600
      %v2459 = vpop.f32.mrf.mxu0
      %v2460 = vadd.f32 0.0, %v2459
      %2461 = vmatmul.f32.gmra.mxu0 %v601
      %v2462 = vpop.f32.mrf.mxu0
      %v2463 = vadd.f32 0.0, %v2462
      %2464 = vmatmul.f32.gmra.mxu0 %v602
      %v2465 = vpop.f32.mrf.mxu0
      %v2466 = vadd.f32 0.0, %v2465
      %2467 = vmatmul.f32.gmra.mxu0 %v603
      %v2468 = vpop.f32.mrf.mxu0
      %v2469 = vadd.f32 0.0, %v2468
      %2470 = vmatmul.f32.gmra.mxu0 %v604
      %v2471 = vpop.f32.mrf.mxu0
      %v2472 = vadd.f32 0.0, %v2471
      %2473 = vmatmul.f32.gmra.mxu0 %v605
      %v2474 = vpop.f32.mrf.mxu0
      %v2475 = vadd.f32 0.0, %v2474
      %2476 = vmatmul.f32.gmra.mxu0 %v606
      %v2477 = vpop.f32.mrf.mxu0
      %v2478 = vadd.f32 0.0, %v2477
      %2479 = vmatmul.f32.gmra.mxu0 %v607
      %v2480 = vpop.f32.mrf.mxu0
      %v2481 = vadd.f32 0.0, %v2480
      %2482 = vmatmul.f32.gmra.mxu0 %v608
      %v2483 = vpop.f32.mrf.mxu0
      %v2484 = vadd.f32 0.0, %v2483
      %2485 = vmatmul.f32.gmra.mxu0 %v609
      %v2486 = vpop.f32.mrf.mxu0
      %v2487 = vadd.f32 0.0, %v2486
      %2488 = vmatmul.f32.gmra.mxu0 %v610
      %v2489 = vpop.f32.mrf.mxu0
      %v2490 = vadd.f32 0.0, %v2489
      %2491 = vmatmul.f32.gmra.mxu0 %v611
      %v2492 = vpop.f32.mrf.mxu0
      %v2493 = vadd.f32 0.0, %v2492
      %2494 = vmatmul.f32.gmra.mxu0 %v612
      %v2495 = vpop.f32.mrf.mxu0
      %v2496 = vadd.f32 0.0, %v2495
      %2497 = vmatmul.f32.gmra.mxu0 %v613
      %v2498 = vpop.f32.mrf.mxu0
      %v2499 = vadd.f32 0.0, %v2498
      %2500 = vmatmul.f32.gmra.mxu0 %v614
      %v2501 = vpop.f32.mrf.mxu0
      %v2502 = vadd.f32 0.0, %v2501
      %2503 = vmatmul.f32.gmra.mxu0 %v615
      %v2504 = vpop.f32.mrf.mxu0
      %v2505 = vadd.f32 0.0, %v2504
      %2506 = vmatmul.f32.gmra.mxu0 %v616
      %v2507 = vpop.f32.mrf.mxu0
      %v2508 = vadd.f32 0.0, %v2507
      %2509 = vmatmul.f32.gmra.mxu0 %v617
      %v2510 = vpop.f32.mrf.mxu0
      %v2511 = vadd.f32 0.0, %v2510
      %2512 = vmatmul.f32.gmra.mxu0 %v618
      %v2513 = vpop.f32.mrf.mxu0
      %v2514 = vadd.f32 0.0, %v2513
      %2515 = vmatmul.f32.gmra.mxu0 %v619
      %v2516 = vpop.f32.mrf.mxu0
      %v2517 = vadd.f32 0.0, %v2516
      %2518 = vmatmul.f32.gmra.mxu0 %v620
      %v2519 = vpop.f32.mrf.mxu0
      %v2520 = vadd.f32 0.0, %v2519
      %2521 = vmatmul.f32.gmra.mxu0 %v621
      %v2522 = vpop.f32.mrf.mxu0
      %v2523 = vadd.f32 0.0, %v2522
      %2524 = vmatmul.f32.gmra.mxu0 %v622
      %v2525 = vpop.f32.mrf.mxu0
      %v2526 = vadd.f32 0.0, %v2525
      %2527 = vmatmul.f32.gmra.mxu0 %v623
      %v2528 = vpop.f32.mrf.mxu0
      %v2529 = vadd.f32 0.0, %v2528
      %2530 = vmatmul.f32.gmra.mxu0 %v624
      %v2531 = vpop.f32.mrf.mxu0
      %v2532 = vadd.f32 0.0, %v2531
      %2533 = vmatmul.f32.gmra.mxu0 %v625
      %v2534 = vpop.f32.mrf.mxu0
      %v2535 = vadd.f32 0.0, %v2534
      %2536 = vmatmul.f32.gmra.mxu0 %v626
      %v2537 = vpop.f32.mrf.mxu0
      %v2538 = vadd.f32 0.0, %v2537
      %2539 = vdwg.mxu0
      %v2540 = vadd.f32 %v2315, %v2445
      %v2541 = vadd.f32 %v2318, %v2448
      %v2542 = vadd.f32 %v2321, %v2451
      %v2543 = vadd.f32 %v2324, %v2454
      %v2544 = vadd.f32 %v2327, %v2457
      %v2545 = vadd.f32 %v2330, %v2460
      %v2546 = vadd.f32 %v2333, %v2463
      %v2547 = vadd.f32 %v2336, %v2466
      %v2548 = vadd.f32 %v2339, %v2469
      %v2549 = vadd.f32 %v2342, %v2472
      %v2550 = vadd.f32 %v2345, %v2475
      %v2551 = vadd.f32 %v2348, %v2478
      %v2552 = vadd.f32 %v2351, %v2481
      %v2553 = vadd.f32 %v2354, %v2484
      %v2554 = vadd.f32 %v2357, %v2487
      %v2555 = vadd.f32 %v2360, %v2490
      %v2556 = vadd.f32 %v2363, %v2493
      %v2557 = vadd.f32 %v2366, %v2496
      %v2558 = vadd.f32 %v2369, %v2499
      %v2559 = vadd.f32 %v2372, %v2502
      %v2560 = vadd.f32 %v2375, %v2505
      %v2561 = vadd.f32 %v2378, %v2508
      %v2562 = vadd.f32 %v2381, %v2511
      %v2563 = vadd.f32 %v2384, %v2514
      %v2564 = vadd.f32 %v2387, %v2517
      %v2565 = vadd.f32 %v2390, %v2520
      %v2566 = vadd.f32 %v2393, %v2523
      %v2567 = vadd.f32 %v2396, %v2526
      %v2568 = vadd.f32 %v2399, %v2529
      %v2569 = vadd.f32 %v2402, %v2532
      %v2570 = vadd.f32 %v2405, %v2535
      %v2571 = vadd.f32 %v2408, %v2538
      %s2572 = scalar_lea.vmem %s3, 1408
      %v2573 = vld [vmem:[%s2572] sm:$0xff]
      %v2574 = vld [vmem:[%s2572 + $0x8] sm:$0xff]
      %v2575 = vld [vmem:[%s2572 + $0x10] sm:$0xff]
      %v2576 = vld [vmem:[%s2572 + $0x18] sm:$0xff]
      %v2577 = vld [vmem:[%s2572 + $0x20] sm:$0xff]
      %v2578 = vld [vmem:[%s2572 + $0x28] sm:$0xff]
      %v2579 = vld [vmem:[%s2572 + $0x30] sm:$0xff]
      %v2580 = vld [vmem:[%s2572 + $0x38] sm:$0xff]
      %v2581 = vld [vmem:[%s2572 + $0x40] sm:$0xff]
      %v2582 = vld [vmem:[%s2572 + $0x48] sm:$0xff]
      %v2583 = vld [vmem:[%s2572 + $0x50] sm:$0xff]
      %v2584 = vld [vmem:[%s2572 + $0x58] sm:$0xff]
      %v2585 = vld [vmem:[%s2572 + $0x60] sm:$0xff]
      %v2586 = vld [vmem:[%s2572 + $0x68] sm:$0xff]
      %v2587 = vld [vmem:[%s2572 + $0x70] sm:$0xff]
      %v2588 = vld [vmem:[%s2572 + $0x78] sm:$0xff]
      %2589 = vmatpush.msra.mxu0 %v2588
      %2590 = vmatpush.msra.mxu0 %v2587
      %2591 = vmatpush.msra.mxu0 %v2586
      %2592 = vmatpush.msra.mxu0 %v2585
      %2593 = vmatpush.msra.mxu0 %v2584
      %2594 = vmatpush.msra.mxu0 %v2583
      %2595 = vmatpush.msra.mxu0 %v2582
      %2596 = vmatpush.msra.mxu0 %v2581
      %2597 = vmatpush.msra.mxu0 %v2580
      %2598 = vmatpush.msra.mxu0 %v2579
      %2599 = vmatpush.msra.mxu0 %v2578
      %2600 = vmatpush.msra.mxu0 %v2577
      %2601 = vmatpush.msra.mxu0 %v2576
      %2602 = vmatpush.msra.mxu0 %v2575
      %2603 = vmatpush.msra.mxu0 %v2574
      %2604 = vmatpush.msra.mxu0 %v2573
      %2605 = vmatmul.f32.gmra.mxu0 %v643
      %v2606 = vpop.f32.mrf.mxu0
      %v2607 = vadd.f32 0.0, %v2606
      %2608 = vmatmul.f32.gmra.mxu0 %v644
      %v2609 = vpop.f32.mrf.mxu0
      %v2610 = vadd.f32 0.0, %v2609
      %2611 = vmatmul.f32.gmra.mxu0 %v645
      %v2612 = vpop.f32.mrf.mxu0
      %v2613 = vadd.f32 0.0, %v2612
      %2614 = vmatmul.f32.gmra.mxu0 %v646
      %v2615 = vpop.f32.mrf.mxu0
      %v2616 = vadd.f32 0.0, %v2615
      %2617 = vmatmul.f32.gmra.mxu0 %v647
      %v2618 = vpop.f32.mrf.mxu0
      %v2619 = vadd.f32 0.0, %v2618
      %2620 = vmatmul.f32.gmra.mxu0 %v648
      %v2621 = vpop.f32.mrf.mxu0
      %v2622 = vadd.f32 0.0, %v2621
      %2623 = vmatmul.f32.gmra.mxu0 %v649
      %v2624 = vpop.f32.mrf.mxu0
      %v2625 = vadd.f32 0.0, %v2624
      %2626 = vmatmul.f32.gmra.mxu0 %v650
      %v2627 = vpop.f32.mrf.mxu0
      %v2628 = vadd.f32 0.0, %v2627
      %2629 = vmatmul.f32.gmra.mxu0 %v651
      %v2630 = vpop.f32.mrf.mxu0
      %v2631 = vadd.f32 0.0, %v2630
      %2632 = vmatmul.f32.gmra.mxu0 %v652
      %v2633 = vpop.f32.mrf.mxu0
      %v2634 = vadd.f32 0.0, %v2633
      %2635 = vmatmul.f32.gmra.mxu0 %v653
      %v2636 = vpop.f32.mrf.mxu0
      %v2637 = vadd.f32 0.0, %v2636
      %2638 = vmatmul.f32.gmra.mxu0 %v654
      %v2639 = vpop.f32.mrf.mxu0
      %v2640 = vadd.f32 0.0, %v2639
      %2641 = vmatmul.f32.gmra.mxu0 %v655
      %v2642 = vpop.f32.mrf.mxu0
      %v2643 = vadd.f32 0.0, %v2642
      %2644 = vmatmul.f32.gmra.mxu0 %v656
      %v2645 = vpop.f32.mrf.mxu0
      %v2646 = vadd.f32 0.0, %v2645
      %2647 = vmatmul.f32.gmra.mxu0 %v657
      %v2648 = vpop.f32.mrf.mxu0
      %v2649 = vadd.f32 0.0, %v2648
      %2650 = vmatmul.f32.gmra.mxu0 %v658
      %v2651 = vpop.f32.mrf.mxu0
      %v2652 = vadd.f32 0.0, %v2651
      %2653 = vmatmul.f32.gmra.mxu0 %v659
      %v2654 = vpop.f32.mrf.mxu0
      %v2655 = vadd.f32 0.0, %v2654
      %2656 = vmatmul.f32.gmra.mxu0 %v660
      %v2657 = vpop.f32.mrf.mxu0
      %v2658 = vadd.f32 0.0, %v2657
      %2659 = vmatmul.f32.gmra.mxu0 %v661
      %v2660 = vpop.f32.mrf.mxu0
      %v2661 = vadd.f32 0.0, %v2660
      %2662 = vmatmul.f32.gmra.mxu0 %v662
      %v2663 = vpop.f32.mrf.mxu0
      %v2664 = vadd.f32 0.0, %v2663
      %2665 = vmatmul.f32.gmra.mxu0 %v663
      %v2666 = vpop.f32.mrf.mxu0
      %v2667 = vadd.f32 0.0, %v2666
      %2668 = vmatmul.f32.gmra.mxu0 %v664
      %v2669 = vpop.f32.mrf.mxu0
      %v2670 = vadd.f32 0.0, %v2669
      %2671 = vmatmul.f32.gmra.mxu0 %v665
      %v2672 = vpop.f32.mrf.mxu0
      %v2673 = vadd.f32 0.0, %v2672
      %2674 = vmatmul.f32.gmra.mxu0 %v666
      %v2675 = vpop.f32.mrf.mxu0
      %v2676 = vadd.f32 0.0, %v2675
      %2677 = vmatmul.f32.gmra.mxu0 %v667
      %v2678 = vpop.f32.mrf.mxu0
      %v2679 = vadd.f32 0.0, %v2678
      %2680 = vmatmul.f32.gmra.mxu0 %v668
      %v2681 = vpop.f32.mrf.mxu0
      %v2682 = vadd.f32 0.0, %v2681
      %2683 = vmatmul.f32.gmra.mxu0 %v669
      %v2684 = vpop.f32.mrf.mxu0
      %v2685 = vadd.f32 0.0, %v2684
      %2686 = vmatmul.f32.gmra.mxu0 %v670
      %v2687 = vpop.f32.mrf.mxu0
      %v2688 = vadd.f32 0.0, %v2687
      %2689 = vmatmul.f32.gmra.mxu0 %v671
      %v2690 = vpop.f32.mrf.mxu0
      %v2691 = vadd.f32 0.0, %v2690
      %2692 = vmatmul.f32.gmra.mxu0 %v672
      %v2693 = vpop.f32.mrf.mxu0
      %v2694 = vadd.f32 0.0, %v2693
      %2695 = vmatmul.f32.gmra.mxu0 %v673
      %v2696 = vpop.f32.mrf.mxu0
      %v2697 = vadd.f32 0.0, %v2696
      %2698 = vmatmul.f32.gmra.mxu0 %v674
      %v2699 = vpop.f32.mrf.mxu0
      %v2700 = vadd.f32 0.0, %v2699
      %2701 = vdwg.mxu0
      %v2702 = vadd.f32 %v2540, %v2607
      %v2703 = vadd.f32 %v2541, %v2610
      %v2704 = vadd.f32 %v2542, %v2613
      %v2705 = vadd.f32 %v2543, %v2616
      %v2706 = vadd.f32 %v2544, %v2619
      %v2707 = vadd.f32 %v2545, %v2622
      %v2708 = vadd.f32 %v2546, %v2625
      %v2709 = vadd.f32 %v2547, %v2628
      %v2710 = vadd.f32 %v2548, %v2631
      %v2711 = vadd.f32 %v2549, %v2634
      %v2712 = vadd.f32 %v2550, %v2637
      %v2713 = vadd.f32 %v2551, %v2640
      %v2714 = vadd.f32 %v2552, %v2643
      %v2715 = vadd.f32 %v2553, %v2646
      %v2716 = vadd.f32 %v2554, %v2649
      %v2717 = vadd.f32 %v2555, %v2652
      %v2718 = vadd.f32 %v2556, %v2655
      %v2719 = vadd.f32 %v2557, %v2658
      %v2720 = vadd.f32 %v2558, %v2661
      %v2721 = vadd.f32 %v2559, %v2664
      %v2722 = vadd.f32 %v2560, %v2667
      %v2723 = vadd.f32 %v2561, %v2670
      %v2724 = vadd.f32 %v2562, %v2673
      %v2725 = vadd.f32 %v2563, %v2676
      %v2726 = vadd.f32 %v2564, %v2679
      %v2727 = vadd.f32 %v2565, %v2682
      %v2728 = vadd.f32 %v2566, %v2685
      %v2729 = vadd.f32 %v2567, %v2688
      %v2730 = vadd.f32 %v2568, %v2691
      %v2731 = vadd.f32 %v2569, %v2694
      %v2732 = vadd.f32 %v2570, %v2697
      %v2733 = vadd.f32 %v2571, %v2700
      %v2734 = vadd.f32 %v2702, %v1307
      %v2735 = vadd.f32 %v2703, %v1307
      %v2736 = vadd.f32 %v2704, %v1307
      %v2737 = vadd.f32 %v2705, %v1307
      %v2738 = vadd.f32 %v2706, %v1307
      %v2739 = vadd.f32 %v2707, %v1307
      %v2740 = vadd.f32 %v2708, %v1307
      %v2741 = vadd.f32 %v2709, %v1307
      %v2742 = vadd.f32 %v2710, %v1307
      %v2743 = vadd.f32 %v2711, %v1307
      %v2744 = vadd.f32 %v2712, %v1307
      %v2745 = vadd.f32 %v2713, %v1307
      %v2746 = vadd.f32 %v2714, %v1307
      %v2747 = vadd.f32 %v2715, %v1307
      %v2748 = vadd.f32 %v2716, %v1307
      %v2749 = vadd.f32 %v2717, %v1307
      %v2750 = vadd.f32 %v2718, %v1307
      %v2751 = vadd.f32 %v2719, %v1307
      %v2752 = vadd.f32 %v2720, %v1307
      %v2753 = vadd.f32 %v2721, %v1307
      %v2754 = vadd.f32 %v2722, %v1307
      %v2755 = vadd.f32 %v2723, %v1307
      %v2756 = vadd.f32 %v2724, %v1307
      %v2757 = vadd.f32 %v2725, %v1307
      %v2758 = vadd.f32 %v2726, %v1307
      %v2759 = vadd.f32 %v2727, %v1307
      %v2760 = vadd.f32 %v2728, %v1307
      %v2761 = vadd.f32 %v2729, %v1307
      %v2762 = vadd.f32 %v2730, %v1307
      %v2763 = vadd.f32 %v2731, %v1307
      %v2764 = vadd.f32 %v2732, %v1307
      %v2765 = vadd.f32 %v2733, %v1307
      %v2766 = vmax.f32 %v2734, 0.0
      %v2767 = vmax.f32 %v2735, 0.0
      %v2768 = vmax.f32 %v2736, 0.0
      %v2769 = vmax.f32 %v2737, 0.0
      %v2770 = vmax.f32 %v2738, 0.0
      %v2771 = vmax.f32 %v2739, 0.0
      %v2772 = vmax.f32 %v2740, 0.0
      %v2773 = vmax.f32 %v2741, 0.0
      %v2774 = vmax.f32 %v2742, 0.0
      %v2775 = vmax.f32 %v2743, 0.0
      %v2776 = vmax.f32 %v2744, 0.0
      %v2777 = vmax.f32 %v2745, 0.0
      %v2778 = vmax.f32 %v2746, 0.0
      %v2779 = vmax.f32 %v2747, 0.0
      %v2780 = vmax.f32 %v2748, 0.0
      %v2781 = vmax.f32 %v2749, 0.0
      %v2782 = vmax.f32 %v2750, 0.0
      %v2783 = vmax.f32 %v2751, 0.0
      %v2784 = vmax.f32 %v2752, 0.0
      %v2785 = vmax.f32 %v2753, 0.0
      %v2786 = vmax.f32 %v2754, 0.0
      %v2787 = vmax.f32 %v2755, 0.0
      %v2788 = vmax.f32 %v2756, 0.0
      %v2789 = vmax.f32 %v2757, 0.0
      %v2790 = vmax.f32 %v2758, 0.0
      %v2791 = vmax.f32 %v2759, 0.0
      %v2792 = vmax.f32 %v2760, 0.0
      %v2793 = vmax.f32 %v2761, 0.0
      %v2794 = vmax.f32 %v2762, 0.0
      %v2795 = vmax.f32 %v2763, 0.0
      %v2796 = vmax.f32 %v2764, 0.0
      %v2797 = vmax.f32 %v2765, 0.0
      %v2798 = vld [vmem:[%s2085 + $0x2] sm:$0xff]
      %v2799 = vld [vmem:[%s2085 + $0xa] sm:$0xff]
      %v2800 = vld [vmem:[%s2085 + $0x1a] sm:$0xff]
      %v2801 = vld [vmem:[%s2085 + $0x22] sm:$0xff]
      %v2802 = vld [vmem:[%s2085 + $0x32] sm:$0xff]
      %v2803 = vld [vmem:[%s2085 + $0x3a] sm:$0xff]
      %v2804 = vld [vmem:[%s2085 + $0x4a] sm:$0xff]
      %v2805 = vld [vmem:[%s2085 + $0x52] sm:$0xff]
      %v2806 = vld [vmem:[%s2085 + $0x62] sm:$0xff]
      %v2807 = vld [vmem:[%s2085 + $0x6a] sm:$0xff]
      %v2808 = vld [vmem:[%s2085 + $0x7a] sm:$0xff]
      %v2809 = vld [vmem:[%s2085 + $0x82] sm:$0xff]
      %v2810 = vld [vmem:[%s2085 + $0x92] sm:$0xff]
      %v2811 = vld [vmem:[%s2085 + $0x9a] sm:$0xff]
      %v2812 = vld [vmem:[%s2085 + $0xaa] sm:$0xff]
      %v2813 = vld [vmem:[%s2085 + $0xb2] sm:$0xff]
      %v2814 = vld [vmem:[%s2085 + $0xc2] sm:$0xff]
      %v2815 = vld [vmem:[%s2085 + $0xca] sm:$0xff]
      %v2816 = vld [vmem:[%s2085 + $0xda] sm:$0xff]
      %v2817 = vld [vmem:[%s2085 + $0xe2] sm:$0xff]
      %v2818 = vld [vmem:[%s2085 + $0xf2] sm:$0xff]
      %v2819 = vld [vmem:[%s2085 + $0xfa] sm:$0xff]
      %v2820 = vld [vmem:[%s2085 + $0x10a] sm:$0xff]
      %v2821 = vld [vmem:[%s2085 + $0x112] sm:$0xff]
      %v2822 = vld [vmem:[%s2085 + $0x122] sm:$0xff]
      %v2823 = vld [vmem:[%s2085 + $0x12a] sm:$0xff]
      %v2824 = vld [vmem:[%s2085 + $0x13a] sm:$0xff]
      %v2825 = vld [vmem:[%s2085 + $0x142] sm:$0xff]
      %v2826 = vld [vmem:[%s2085 + $0x152] sm:$0xff]
      %v2827 = vld [vmem:[%s2085 + $0x15a] sm:$0xff]
      %v2828 = vld [vmem:[%s2085 + $0x16a] sm:$0xff]
      %v2829 = vld [vmem:[%s2085 + $0x172] sm:$0xff]
      %s2830 = scalar_lea.vmem %s3, 1536
      %v2831 = vld [vmem:[%s2830] sm:$0xff]
      %v2832 = vld [vmem:[%s2830 + $0x8] sm:$0xff]
      %v2833 = vld [vmem:[%s2830 + $0x10] sm:$0xff]
      %v2834 = vld [vmem:[%s2830 + $0x18] sm:$0xff]
      %v2835 = vld [vmem:[%s2830 + $0x20] sm:$0xff]
      %v2836 = vld [vmem:[%s2830 + $0x28] sm:$0xff]
      %v2837 = vld [vmem:[%s2830 + $0x30] sm:$0xff]
      %v2838 = vld [vmem:[%s2830 + $0x38] sm:$0xff]
      %v2839 = vld [vmem:[%s2830 + $0x40] sm:$0xff]
      %v2840 = vld [vmem:[%s2830 + $0x48] sm:$0xff]
      %v2841 = vld [vmem:[%s2830 + $0x50] sm:$0xff]
      %v2842 = vld [vmem:[%s2830 + $0x58] sm:$0xff]
      %v2843 = vld [vmem:[%s2830 + $0x60] sm:$0xff]
      %v2844 = vld [vmem:[%s2830 + $0x68] sm:$0xff]
      %v2845 = vld [vmem:[%s2830 + $0x70] sm:$0xff]
      %v2846 = vld [vmem:[%s2830 + $0x78] sm:$0xff]
      %s2847 = scalar_lea.vmem %s3, 1664
      %v2848 = vld [vmem:[%s2847] sm:$0xff]
      %v2849 = vld [vmem:[%s2847 + $0x8] sm:$0xff]
      %v2850 = vld [vmem:[%s2847 + $0x10] sm:$0xff]
      %v2851 = vld [vmem:[%s2847 + $0x18] sm:$0xff]
      %v2852 = vld [vmem:[%s2847 + $0x20] sm:$0xff]
      %v2853 = vld [vmem:[%s2847 + $0x28] sm:$0xff]
      %v2854 = vld [vmem:[%s2847 + $0x30] sm:$0xff]
      %v2855 = vld [vmem:[%s2847 + $0x38] sm:$0xff]
      %v2856 = vld [vmem:[%s2847 + $0x40] sm:$0xff]
      %v2857 = vld [vmem:[%s2847 + $0x48] sm:$0xff]
      %v2858 = vld [vmem:[%s2847 + $0x50] sm:$0xff]
      %v2859 = vld [vmem:[%s2847 + $0x58] sm:$0xff]
      %v2860 = vld [vmem:[%s2847 + $0x60] sm:$0xff]
      %v2861 = vld [vmem:[%s2847 + $0x68] sm:$0xff]
      %v2862 = vld [vmem:[%s2847 + $0x70] sm:$0xff]
      %v2863 = vld [vmem:[%s2847 + $0x78] sm:$0xff]
      %2864 = vmatpush.msra.mxu0 %v2863
      %2865 = vmatpush.msra.mxu0 %v2862
      %2866 = vmatpush.msra.mxu0 %v2861
      %2867 = vmatpush.msra.mxu0 %v2860
      %2868 = vmatpush.msra.mxu0 %v2859
      %2869 = vmatpush.msra.mxu0 %v2858
      %2870 = vmatpush.msra.mxu0 %v2857
      %2871 = vmatpush.msra.mxu0 %v2856
      %2872 = vmatpush.msra.mxu0 %v2855
      %2873 = vmatpush.msra.mxu0 %v2854
      %2874 = vmatpush.msra.mxu0 %v2853
      %2875 = vmatpush.msra.mxu0 %v2852
      %2876 = vmatpush.msra.mxu0 %v2851
      %2877 = vmatpush.msra.mxu0 %v2850
      %2878 = vmatpush.msra.mxu0 %v2849
      %2879 = vmatpush.msra.mxu0 %v2848
      %2880 = vmatmul.f32.gmra.mxu0 %v2086
      %v2881 = vpop.f32.mrf.mxu0
      %v2882 = vadd.f32 0.0, %v2881
      %2883 = vmatmul.f32.gmra.mxu0 %v2087
      %v2884 = vpop.f32.mrf.mxu0
      %v2885 = vadd.f32 0.0, %v2884
      %2886 = vmatmul.f32.gmra.mxu0 %v2088
      %v2887 = vpop.f32.mrf.mxu0
      %v2888 = vadd.f32 0.0, %v2887
      %2889 = vmatmul.f32.gmra.mxu0 %v2089
      %v2890 = vpop.f32.mrf.mxu0
      %v2891 = vadd.f32 0.0, %v2890
      %2892 = vmatmul.f32.gmra.mxu0 %v2090
      %v2893 = vpop.f32.mrf.mxu0
      %v2894 = vadd.f32 0.0, %v2893
      %2895 = vmatmul.f32.gmra.mxu0 %v2091
      %v2896 = vpop.f32.mrf.mxu0
      %v2897 = vadd.f32 0.0, %v2896
      %2898 = vmatmul.f32.gmra.mxu0 %v2092
      %v2899 = vpop.f32.mrf.mxu0
      %v2900 = vadd.f32 0.0, %v2899
      %2901 = vmatmul.f32.gmra.mxu0 %v2093
      %v2902 = vpop.f32.mrf.mxu0
      %v2903 = vadd.f32 0.0, %v2902
      %2904 = vmatmul.f32.gmra.mxu0 %v2094
      %v2905 = vpop.f32.mrf.mxu0
      %v2906 = vadd.f32 0.0, %v2905
      %2907 = vmatmul.f32.gmra.mxu0 %v2095
      %v2908 = vpop.f32.mrf.mxu0
      %v2909 = vadd.f32 0.0, %v2908
      %2910 = vmatmul.f32.gmra.mxu0 %v2096
      %v2911 = vpop.f32.mrf.mxu0
      %v2912 = vadd.f32 0.0, %v2911
      %2913 = vmatmul.f32.gmra.mxu0 %v2097
      %v2914 = vpop.f32.mrf.mxu0
      %v2915 = vadd.f32 0.0, %v2914
      %2916 = vmatmul.f32.gmra.mxu0 %v2098
      %v2917 = vpop.f32.mrf.mxu0
      %v2918 = vadd.f32 0.0, %v2917
      %2919 = vmatmul.f32.gmra.mxu0 %v2099
      %v2920 = vpop.f32.mrf.mxu0
      %v2921 = vadd.f32 0.0, %v2920
      %2922 = vmatmul.f32.gmra.mxu0 %v2100
      %v2923 = vpop.f32.mrf.mxu0
      %v2924 = vadd.f32 0.0, %v2923
      %2925 = vmatmul.f32.gmra.mxu0 %v2101
      %v2926 = vpop.f32.mrf.mxu0
      %v2927 = vadd.f32 0.0, %v2926
      %2928 = vmatmul.f32.gmra.mxu0 %v2102
      %v2929 = vpop.f32.mrf.mxu0
      %v2930 = vadd.f32 0.0, %v2929
      %2931 = vmatmul.f32.gmra.mxu0 %v2103
      %v2932 = vpop.f32.mrf.mxu0
      %v2933 = vadd.f32 0.0, %v2932
      %2934 = vmatmul.f32.gmra.mxu0 %v2104
      %v2935 = vpop.f32.mrf.mxu0
      %v2936 = vadd.f32 0.0, %v2935
      %2937 = vmatmul.f32.gmra.mxu0 %v2105
      %v2938 = vpop.f32.mrf.mxu0
      %v2939 = vadd.f32 0.0, %v2938
      %2940 = vmatmul.f32.gmra.mxu0 %v2106
      %v2941 = vpop.f32.mrf.mxu0
      %v2942 = vadd.f32 0.0, %v2941
      %2943 = vmatmul.f32.gmra.mxu0 %v2107
      %v2944 = vpop.f32.mrf.mxu0
      %v2945 = vadd.f32 0.0, %v2944
      %2946 = vmatmul.f32.gmra.mxu0 %v2108
      %v2947 = vpop.f32.mrf.mxu0
      %v2948 = vadd.f32 0.0, %v2947
      %2949 = vmatmul.f32.gmra.mxu0 %v2109
      %v2950 = vpop.f32.mrf.mxu0
      %v2951 = vadd.f32 0.0, %v2950
      %2952 = vmatmul.f32.gmra.mxu0 %v2110
      %v2953 = vpop.f32.mrf.mxu0
      %v2954 = vadd.f32 0.0, %v2953
      %2955 = vmatmul.f32.gmra.mxu0 %v2111
      %v2956 = vpop.f32.mrf.mxu0
      %v2957 = vadd.f32 0.0, %v2956
      %2958 = vmatmul.f32.gmra.mxu0 %v2112
      %v2959 = vpop.f32.mrf.mxu0
      %v2960 = vadd.f32 0.0, %v2959
      %2961 = vmatmul.f32.gmra.mxu0 %v2113
      %v2962 = vpop.f32.mrf.mxu0
      %v2963 = vadd.f32 0.0, %v2962
      %2964 = vmatmul.f32.gmra.mxu0 %v2114
      %v2965 = vpop.f32.mrf.mxu0
      %v2966 = vadd.f32 0.0, %v2965
      %2967 = vmatmul.f32.gmra.mxu0 %v2115
      %v2968 = vpop.f32.mrf.mxu0
      %v2969 = vadd.f32 0.0, %v2968
      %2970 = vmatmul.f32.gmra.mxu0 %v2116
      %v2971 = vpop.f32.mrf.mxu0
      %v2972 = vadd.f32 0.0, %v2971
      %2973 = vmatmul.f32.gmra.mxu0 %v2117
      %v2974 = vpop.f32.mrf.mxu0
      %v2975 = vadd.f32 0.0, %v2974
      %2976 = vdwg.mxu0
      %2977 = vmatpush.msra.mxu0 %v2846
      %2978 = vmatpush.msra.mxu0 %v2845
      %2979 = vmatpush.msra.mxu0 %v2844
      %2980 = vmatpush.msra.mxu0 %v2843
      %2981 = vmatpush.msra.mxu0 %v2842
      %2982 = vmatpush.msra.mxu0 %v2841
      %2983 = vmatpush.msra.mxu0 %v2840
      %2984 = vmatpush.msra.mxu0 %v2839
      %2985 = vmatpush.msra.mxu0 %v2838
      %2986 = vmatpush.msra.mxu0 %v2837
      %2987 = vmatpush.msra.mxu0 %v2836
      %2988 = vmatpush.msra.mxu0 %v2835
      %2989 = vmatpush.msra.mxu0 %v2834
      %2990 = vmatpush.msra.mxu0 %v2833
      %2991 = vmatpush.msra.mxu0 %v2832
      %2992 = vmatpush.msra.mxu0 %v2831
      %2993 = vmatmul.f32.gmra.mxu0 %v2798
      %v2994 = vpop.f32.mrf.mxu0
      %v2995 = vadd.f32 %v2882, %v2994
      %2996 = vmatmul.f32.gmra.mxu0 %v2799
      %v2997 = vpop.f32.mrf.mxu0
      %v2998 = vadd.f32 %v2885, %v2997
      %2999 = vmatmul.f32.gmra.mxu0 %v2800
      %v3000 = vpop.f32.mrf.mxu0
      %v3001 = vadd.f32 %v2888, %v3000
      %3002 = vmatmul.f32.gmra.mxu0 %v2801
      %v3003 = vpop.f32.mrf.mxu0
      %v3004 = vadd.f32 %v2891, %v3003
      %3005 = vmatmul.f32.gmra.mxu0 %v2802
      %v3006 = vpop.f32.mrf.mxu0
      %v3007 = vadd.f32 %v2894, %v3006
      %3008 = vmatmul.f32.gmra.mxu0 %v2803
      %v3009 = vpop.f32.mrf.mxu0
      %v3010 = vadd.f32 %v2897, %v3009
      %3011 = vmatmul.f32.gmra.mxu0 %v2804
      %v3012 = vpop.f32.mrf.mxu0
      %v3013 = vadd.f32 %v2900, %v3012
      %3014 = vmatmul.f32.gmra.mxu0 %v2805
      %v3015 = vpop.f32.mrf.mxu0
      %v3016 = vadd.f32 %v2903, %v3015
      %3017 = vmatmul.f32.gmra.mxu0 %v2806
      %v3018 = vpop.f32.mrf.mxu0
      %v3019 = vadd.f32 %v2906, %v3018
      %3020 = vmatmul.f32.gmra.mxu0 %v2807
      %v3021 = vpop.f32.mrf.mxu0
      %v3022 = vadd.f32 %v2909, %v3021
      %3023 = vmatmul.f32.gmra.mxu0 %v2808
      %v3024 = vpop.f32.mrf.mxu0
      %v3025 = vadd.f32 %v2912, %v3024
      %3026 = vmatmul.f32.gmra.mxu0 %v2809
      %v3027 = vpop.f32.mrf.mxu0
      %v3028 = vadd.f32 %v2915, %v3027
      %3029 = vmatmul.f32.gmra.mxu0 %v2810
      %v3030 = vpop.f32.mrf.mxu0
      %v3031 = vadd.f32 %v2918, %v3030
      %3032 = vmatmul.f32.gmra.mxu0 %v2811
      %v3033 = vpop.f32.mrf.mxu0
      %v3034 = vadd.f32 %v2921, %v3033
      %3035 = vmatmul.f32.gmra.mxu0 %v2812
      %v3036 = vpop.f32.mrf.mxu0
      %v3037 = vadd.f32 %v2924, %v3036
      %3038 = vmatmul.f32.gmra.mxu0 %v2813
      %v3039 = vpop.f32.mrf.mxu0
      %v3040 = vadd.f32 %v2927, %v3039
      %3041 = vmatmul.f32.gmra.mxu0 %v2814
      %v3042 = vpop.f32.mrf.mxu0
      %v3043 = vadd.f32 %v2930, %v3042
      %3044 = vmatmul.f32.gmra.mxu0 %v2815
      %v3045 = vpop.f32.mrf.mxu0
      %v3046 = vadd.f32 %v2933, %v3045
      %3047 = vmatmul.f32.gmra.mxu0 %v2816
      %v3048 = vpop.f32.mrf.mxu0
      %v3049 = vadd.f32 %v2936, %v3048
      %3050 = vmatmul.f32.gmra.mxu0 %v2817
      %v3051 = vpop.f32.mrf.mxu0
      %v3052 = vadd.f32 %v2939, %v3051
      %3053 = vmatmul.f32.gmra.mxu0 %v2818
      %v3054 = vpop.f32.mrf.mxu0
      %v3055 = vadd.f32 %v2942, %v3054
      %3056 = vmatmul.f32.gmra.mxu0 %v2819
      %v3057 = vpop.f32.mrf.mxu0
      %v3058 = vadd.f32 %v2945, %v3057
      %3059 = vmatmul.f32.gmra.mxu0 %v2820
      %v3060 = vpop.f32.mrf.mxu0
      %v3061 = vadd.f32 %v2948, %v3060
      %3062 = vmatmul.f32.gmra.mxu0 %v2821
      %v3063 = vpop.f32.mrf.mxu0
      %v3064 = vadd.f32 %v2951, %v3063
      %3065 = vmatmul.f32.gmra.mxu0 %v2822
      %v3066 = vpop.f32.mrf.mxu0
      %v3067 = vadd.f32 %v2954, %v3066
      %3068 = vmatmul.f32.gmra.mxu0 %v2823
      %v3069 = vpop.f32.mrf.mxu0
      %v3070 = vadd.f32 %v2957, %v3069
      %3071 = vmatmul.f32.gmra.mxu0 %v2824
      %v3072 = vpop.f32.mrf.mxu0
      %v3073 = vadd.f32 %v2960, %v3072
      %3074 = vmatmul.f32.gmra.mxu0 %v2825
      %v3075 = vpop.f32.mrf.mxu0
      %v3076 = vadd.f32 %v2963, %v3075
      %3077 = vmatmul.f32.gmra.mxu0 %v2826
      %v3078 = vpop.f32.mrf.mxu0
      %v3079 = vadd.f32 %v2966, %v3078
      %3080 = vmatmul.f32.gmra.mxu0 %v2827
      %v3081 = vpop.f32.mrf.mxu0
      %v3082 = vadd.f32 %v2969, %v3081
      %3083 = vmatmul.f32.gmra.mxu0 %v2828
      %v3084 = vpop.f32.mrf.mxu0
      %v3085 = vadd.f32 %v2972, %v3084
      %3086 = vmatmul.f32.gmra.mxu0 %v2829
      %v3087 = vpop.f32.mrf.mxu0
      %v3088 = vadd.f32 %v2975, %v3087
      %3089 = vdwg.mxu0
      %s3090 = scalar_lea.vmem %s3, 1792
      %v3091 = vld [vmem:[%s3090] sm:$0xff]
      %v3092 = vld [vmem:[%s3090 + $0x8] sm:$0xff]
      %v3093 = vld [vmem:[%s3090 + $0x10] sm:$0xff]
      %v3094 = vld [vmem:[%s3090 + $0x18] sm:$0xff]
      %v3095 = vld [vmem:[%s3090 + $0x20] sm:$0xff]
      %v3096 = vld [vmem:[%s3090 + $0x28] sm:$0xff]
      %v3097 = vld [vmem:[%s3090 + $0x30] sm:$0xff]
      %v3098 = vld [vmem:[%s3090 + $0x38] sm:$0xff]
      %v3099 = vld [vmem:[%s3090 + $0x40] sm:$0xff]
      %v3100 = vld [vmem:[%s3090 + $0x48] sm:$0xff]
      %v3101 = vld [vmem:[%s3090 + $0x50] sm:$0xff]
      %v3102 = vld [vmem:[%s3090 + $0x58] sm:$0xff]
      %v3103 = vld [vmem:[%s3090 + $0x60] sm:$0xff]
      %v3104 = vld [vmem:[%s3090 + $0x68] sm:$0xff]
      %v3105 = vld [vmem:[%s3090 + $0x70] sm:$0xff]
      %v3106 = vld [vmem:[%s3090 + $0x78] sm:$0xff]
      %3107 = vmatpush.msra.mxu0 %v3106
      %3108 = vmatpush.msra.mxu0 %v3105
      %3109 = vmatpush.msra.mxu0 %v3104
      %3110 = vmatpush.msra.mxu0 %v3103
      %3111 = vmatpush.msra.mxu0 %v3102
      %3112 = vmatpush.msra.mxu0 %v3101
      %3113 = vmatpush.msra.mxu0 %v3100
      %3114 = vmatpush.msra.mxu0 %v3099
      %3115 = vmatpush.msra.mxu0 %v3098
      %3116 = vmatpush.msra.mxu0 %v3097
      %3117 = vmatpush.msra.mxu0 %v3096
      %3118 = vmatpush.msra.mxu0 %v3095
      %3119 = vmatpush.msra.mxu0 %v3094
      %3120 = vmatpush.msra.mxu0 %v3093
      %3121 = vmatpush.msra.mxu0 %v3092
      %3122 = vmatpush.msra.mxu0 %v3091
      %3123 = vmatmul.f32.gmra.mxu0 %v1373
      %v3124 = vpop.f32.mrf.mxu0
      %v3125 = vadd.f32 0.0, %v3124
      %3126 = vmatmul.f32.gmra.mxu0 %v1374
      %v3127 = vpop.f32.mrf.mxu0
      %v3128 = vadd.f32 0.0, %v3127
      %3129 = vmatmul.f32.gmra.mxu0 %v1375
      %v3130 = vpop.f32.mrf.mxu0
      %v3131 = vadd.f32 0.0, %v3130
      %3132 = vmatmul.f32.gmra.mxu0 %v1376
      %v3133 = vpop.f32.mrf.mxu0
      %v3134 = vadd.f32 0.0, %v3133
      %3135 = vmatmul.f32.gmra.mxu0 %v1377
      %v3136 = vpop.f32.mrf.mxu0
      %v3137 = vadd.f32 0.0, %v3136
      %3138 = vmatmul.f32.gmra.mxu0 %v1378
      %v3139 = vpop.f32.mrf.mxu0
      %v3140 = vadd.f32 0.0, %v3139
      %3141 = vmatmul.f32.gmra.mxu0 %v1379
      %v3142 = vpop.f32.mrf.mxu0
      %v3143 = vadd.f32 0.0, %v3142
      %3144 = vmatmul.f32.gmra.mxu0 %v1380
      %v3145 = vpop.f32.mrf.mxu0
      %v3146 = vadd.f32 0.0, %v3145
      %3147 = vmatmul.f32.gmra.mxu0 %v1381
      %v3148 = vpop.f32.mrf.mxu0
      %v3149 = vadd.f32 0.0, %v3148
      %3150 = vmatmul.f32.gmra.mxu0 %v1382
      %v3151 = vpop.f32.mrf.mxu0
      %v3152 = vadd.f32 0.0, %v3151
      %3153 = vmatmul.f32.gmra.mxu0 %v1383
      %v3154 = vpop.f32.mrf.mxu0
      %v3155 = vadd.f32 0.0, %v3154
      %3156 = vmatmul.f32.gmra.mxu0 %v1384
      %v3157 = vpop.f32.mrf.mxu0
      %v3158 = vadd.f32 0.0, %v3157
      %3159 = vmatmul.f32.gmra.mxu0 %v1385
      %v3160 = vpop.f32.mrf.mxu0
      %v3161 = vadd.f32 0.0, %v3160
      %3162 = vmatmul.f32.gmra.mxu0 %v1386
      %v3163 = vpop.f32.mrf.mxu0
      %v3164 = vadd.f32 0.0, %v3163
      %3165 = vmatmul.f32.gmra.mxu0 %v1387
      %v3166 = vpop.f32.mrf.mxu0
      %v3167 = vadd.f32 0.0, %v3166
      %3168 = vmatmul.f32.gmra.mxu0 %v1388
      %v3169 = vpop.f32.mrf.mxu0
      %v3170 = vadd.f32 0.0, %v3169
      %3171 = vmatmul.f32.gmra.mxu0 %v1389
      %v3172 = vpop.f32.mrf.mxu0
      %v3173 = vadd.f32 0.0, %v3172
      %3174 = vmatmul.f32.gmra.mxu0 %v1390
      %v3175 = vpop.f32.mrf.mxu0
      %v3176 = vadd.f32 0.0, %v3175
      %3177 = vmatmul.f32.gmra.mxu0 %v1391
      %v3178 = vpop.f32.mrf.mxu0
      %v3179 = vadd.f32 0.0, %v3178
      %3180 = vmatmul.f32.gmra.mxu0 %v1392
      %v3181 = vpop.f32.mrf.mxu0
      %v3182 = vadd.f32 0.0, %v3181
      %3183 = vmatmul.f32.gmra.mxu0 %v1393
      %v3184 = vpop.f32.mrf.mxu0
      %v3185 = vadd.f32 0.0, %v3184
      %3186 = vmatmul.f32.gmra.mxu0 %v1394
      %v3187 = vpop.f32.mrf.mxu0
      %v3188 = vadd.f32 0.0, %v3187
      %3189 = vmatmul.f32.gmra.mxu0 %v1395
      %v3190 = vpop.f32.mrf.mxu0
      %v3191 = vadd.f32 0.0, %v3190
      %3192 = vmatmul.f32.gmra.mxu0 %v1396
      %v3193 = vpop.f32.mrf.mxu0
      %v3194 = vadd.f32 0.0, %v3193
      %3195 = vmatmul.f32.gmra.mxu0 %v1397
      %v3196 = vpop.f32.mrf.mxu0
      %v3197 = vadd.f32 0.0, %v3196
      %3198 = vmatmul.f32.gmra.mxu0 %v1398
      %v3199 = vpop.f32.mrf.mxu0
      %v3200 = vadd.f32 0.0, %v3199
      %3201 = vmatmul.f32.gmra.mxu0 %v1399
      %v3202 = vpop.f32.mrf.mxu0
      %v3203 = vadd.f32 0.0, %v3202
      %3204 = vmatmul.f32.gmra.mxu0 %v1400
      %v3205 = vpop.f32.mrf.mxu0
      %v3206 = vadd.f32 0.0, %v3205
      %3207 = vmatmul.f32.gmra.mxu0 %v1401
      %v3208 = vpop.f32.mrf.mxu0
      %v3209 = vadd.f32 0.0, %v3208
      %3210 = vmatmul.f32.gmra.mxu0 %v1402
      %v3211 = vpop.f32.mrf.mxu0
      %v3212 = vadd.f32 0.0, %v3211
      %3213 = vmatmul.f32.gmra.mxu0 %v1403
      %v3214 = vpop.f32.mrf.mxu0
      %v3215 = vadd.f32 0.0, %v3214
      %3216 = vmatmul.f32.gmra.mxu0 %v1404
      %v3217 = vpop.f32.mrf.mxu0
      %v3218 = vadd.f32 0.0, %v3217
      %3219 = vdwg.mxu0
      %v3220 = vadd.f32 %v2995, %v3125
      %v3221 = vadd.f32 %v2998, %v3128
      %v3222 = vadd.f32 %v3001, %v3131
      %v3223 = vadd.f32 %v3004, %v3134
      %v3224 = vadd.f32 %v3007, %v3137
      %v3225 = vadd.f32 %v3010, %v3140
      %v3226 = vadd.f32 %v3013, %v3143
      %v3227 = vadd.f32 %v3016, %v3146
      %v3228 = vadd.f32 %v3019, %v3149
      %v3229 = vadd.f32 %v3022, %v3152
      %v3230 = vadd.f32 %v3025, %v3155
      %v3231 = vadd.f32 %v3028, %v3158
      %v3232 = vadd.f32 %v3031, %v3161
      %v3233 = vadd.f32 %v3034, %v3164
      %v3234 = vadd.f32 %v3037, %v3167
      %v3235 = vadd.f32 %v3040, %v3170
      %v3236 = vadd.f32 %v3043, %v3173
      %v3237 = vadd.f32 %v3046, %v3176
      %v3238 = vadd.f32 %v3049, %v3179
      %v3239 = vadd.f32 %v3052, %v3182
      %v3240 = vadd.f32 %v3055, %v3185
      %v3241 = vadd.f32 %v3058, %v3188
      %v3242 = vadd.f32 %v3061, %v3191
      %v3243 = vadd.f32 %v3064, %v3194
      %v3244 = vadd.f32 %v3067, %v3197
      %v3245 = vadd.f32 %v3070, %v3200
      %v3246 = vadd.f32 %v3073, %v3203
      %v3247 = vadd.f32 %v3076, %v3206
      %v3248 = vadd.f32 %v3079, %v3209
      %v3249 = vadd.f32 %v3082, %v3212
      %v3250 = vadd.f32 %v3085, %v3215
      %v3251 = vadd.f32 %v3088, %v3218
      %s3252 = scalar_lea.vmem %s3, 1920
      %v3253 = vld [vmem:[%s3252] sm:$0xff]
      %v3254 = vld [vmem:[%s3252 + $0x8] sm:$0xff]
      %v3255 = vld [vmem:[%s3252 + $0x10] sm:$0xff]
      %v3256 = vld [vmem:[%s3252 + $0x18] sm:$0xff]
      %v3257 = vld [vmem:[%s3252 + $0x20] sm:$0xff]
      %v3258 = vld [vmem:[%s3252 + $0x28] sm:$0xff]
      %v3259 = vld [vmem:[%s3252 + $0x30] sm:$0xff]
      %v3260 = vld [vmem:[%s3252 + $0x38] sm:$0xff]
      %v3261 = vld [vmem:[%s3252 + $0x40] sm:$0xff]
      %v3262 = vld [vmem:[%s3252 + $0x48] sm:$0xff]
      %v3263 = vld [vmem:[%s3252 + $0x50] sm:$0xff]
      %v3264 = vld [vmem:[%s3252 + $0x58] sm:$0xff]
      %v3265 = vld [vmem:[%s3252 + $0x60] sm:$0xff]
      %v3266 = vld [vmem:[%s3252 + $0x68] sm:$0xff]
      %v3267 = vld [vmem:[%s3252 + $0x70] sm:$0xff]
      %v3268 = vld [vmem:[%s3252 + $0x78] sm:$0xff]
      %3269 = vmatpush.msra.mxu0 %v3268
      %3270 = vmatpush.msra.mxu0 %v3267
      %3271 = vmatpush.msra.mxu0 %v3266
      %3272 = vmatpush.msra.mxu0 %v3265
      %3273 = vmatpush.msra.mxu0 %v3264
      %3274 = vmatpush.msra.mxu0 %v3263
      %3275 = vmatpush.msra.mxu0 %v3262
      %3276 = vmatpush.msra.mxu0 %v3261
      %3277 = vmatpush.msra.mxu0 %v3260
      %3278 = vmatpush.msra.mxu0 %v3259
      %3279 = vmatpush.msra.mxu0 %v3258
      %3280 = vmatpush.msra.mxu0 %v3257
      %3281 = vmatpush.msra.mxu0 %v3256
      %3282 = vmatpush.msra.mxu0 %v3255
      %3283 = vmatpush.msra.mxu0 %v3254
      %3284 = vmatpush.msra.mxu0 %v3253
      %3285 = vmatmul.f32.gmra.mxu0 %v595
      %v3286 = vpop.f32.mrf.mxu0
      %v3287 = vadd.f32 0.0, %v3286
      %3288 = vmatmul.f32.gmra.mxu0 %v596
      %v3289 = vpop.f32.mrf.mxu0
      %v3290 = vadd.f32 0.0, %v3289
      %3291 = vmatmul.f32.gmra.mxu0 %v597
      %v3292 = vpop.f32.mrf.mxu0
      %v3293 = vadd.f32 0.0, %v3292
      %3294 = vmatmul.f32.gmra.mxu0 %v598
      %v3295 = vpop.f32.mrf.mxu0
      %v3296 = vadd.f32 0.0, %v3295
      %3297 = vmatmul.f32.gmra.mxu0 %v599
      %v3298 = vpop.f32.mrf.mxu0
      %v3299 = vadd.f32 0.0, %v3298
      %3300 = vmatmul.f32.gmra.mxu0 %v600
      %v3301 = vpop.f32.mrf.mxu0
      %v3302 = vadd.f32 0.0, %v3301
      %3303 = vmatmul.f32.gmra.mxu0 %v601
      %v3304 = vpop.f32.mrf.mxu0
      %v3305 = vadd.f32 0.0, %v3304
      %3306 = vmatmul.f32.gmra.mxu0 %v602
      %v3307 = vpop.f32.mrf.mxu0
      %v3308 = vadd.f32 0.0, %v3307
      %3309 = vmatmul.f32.gmra.mxu0 %v603
      %v3310 = vpop.f32.mrf.mxu0
      %v3311 = vadd.f32 0.0, %v3310
      %3312 = vmatmul.f32.gmra.mxu0 %v604
      %v3313 = vpop.f32.mrf.mxu0
      %v3314 = vadd.f32 0.0, %v3313
      %3315 = vmatmul.f32.gmra.mxu0 %v605
      %v3316 = vpop.f32.mrf.mxu0
      %v3317 = vadd.f32 0.0, %v3316
      %3318 = vmatmul.f32.gmra.mxu0 %v606
      %v3319 = vpop.f32.mrf.mxu0
      %v3320 = vadd.f32 0.0, %v3319
      %3321 = vmatmul.f32.gmra.mxu0 %v607
      %v3322 = vpop.f32.mrf.mxu0
      %v3323 = vadd.f32 0.0, %v3322
      %3324 = vmatmul.f32.gmra.mxu0 %v608
      %v3325 = vpop.f32.mrf.mxu0
      %v3326 = vadd.f32 0.0, %v3325
      %3327 = vmatmul.f32.gmra.mxu0 %v609
      %v3328 = vpop.f32.mrf.mxu0
      %v3329 = vadd.f32 0.0, %v3328
      %3330 = vmatmul.f32.gmra.mxu0 %v610
      %v3331 = vpop.f32.mrf.mxu0
      %v3332 = vadd.f32 0.0, %v3331
      %3333 = vmatmul.f32.gmra.mxu0 %v611
      %v3334 = vpop.f32.mrf.mxu0
      %v3335 = vadd.f32 0.0, %v3334
      %3336 = vmatmul.f32.gmra.mxu0 %v612
      %v3337 = vpop.f32.mrf.mxu0
      %v3338 = vadd.f32 0.0, %v3337
      %3339 = vmatmul.f32.gmra.mxu0 %v613
      %v3340 = vpop.f32.mrf.mxu0
      %v3341 = vadd.f32 0.0, %v3340
      %3342 = vmatmul.f32.gmra.mxu0 %v614
      %v3343 = vpop.f32.mrf.mxu0
      %v3344 = vadd.f32 0.0, %v3343
      %3345 = vmatmul.f32.gmra.mxu0 %v615
      %v3346 = vpop.f32.mrf.mxu0
      %v3347 = vadd.f32 0.0, %v3346
      %3348 = vmatmul.f32.gmra.mxu0 %v616
      %v3349 = vpop.f32.mrf.mxu0
      %v3350 = vadd.f32 0.0, %v3349
      %3351 = vmatmul.f32.gmra.mxu0 %v617
      %v3352 = vpop.f32.mrf.mxu0
      %v3353 = vadd.f32 0.0, %v3352
      %3354 = vmatmul.f32.gmra.mxu0 %v618
      %v3355 = vpop.f32.mrf.mxu0
      %v3356 = vadd.f32 0.0, %v3355
      %3357 = vmatmul.f32.gmra.mxu0 %v619
      %v3358 = vpop.f32.mrf.mxu0
      %v3359 = vadd.f32 0.0, %v3358
      %3360 = vmatmul.f32.gmra.mxu0 %v620
      %v3361 = vpop.f32.mrf.mxu0
      %v3362 = vadd.f32 0.0, %v3361
      %3363 = vmatmul.f32.gmra.mxu0 %v621
      %v3364 = vpop.f32.mrf.mxu0
      %v3365 = vadd.f32 0.0, %v3364
      %3366 = vmatmul.f32.gmra.mxu0 %v622
      %v3367 = vpop.f32.mrf.mxu0
      %v3368 = vadd.f32 0.0, %v3367
      %3369 = vmatmul.f32.gmra.mxu0 %v623
      %v3370 = vpop.f32.mrf.mxu0
      %v3371 = vadd.f32 0.0, %v3370
      %3372 = vmatmul.f32.gmra.mxu0 %v624
      %v3373 = vpop.f32.mrf.mxu0
      %v3374 = vadd.f32 0.0, %v3373
      %3375 = vmatmul.f32.gmra.mxu0 %v625
      %v3376 = vpop.f32.mrf.mxu0
      %v3377 = vadd.f32 0.0, %v3376
      %3378 = vmatmul.f32.gmra.mxu0 %v626
      %v3379 = vpop.f32.mrf.mxu0
      %v3380 = vadd.f32 0.0, %v3379
      %3381 = vdwg.mxu0
      %v3382 = vadd.f32 %v3220, %v3287
      %v3383 = vadd.f32 %v3221, %v3290
      %v3384 = vadd.f32 %v3222, %v3293
      %v3385 = vadd.f32 %v3223, %v3296
      %v3386 = vadd.f32 %v3224, %v3299
      %v3387 = vadd.f32 %v3225, %v3302
      %v3388 = vadd.f32 %v3226, %v3305
      %v3389 = vadd.f32 %v3227, %v3308
      %v3390 = vadd.f32 %v3228, %v3311
      %v3391 = vadd.f32 %v3229, %v3314
      %v3392 = vadd.f32 %v3230, %v3317
      %v3393 = vadd.f32 %v3231, %v3320
      %v3394 = vadd.f32 %v3232, %v3323
      %v3395 = vadd.f32 %v3233, %v3326
      %v3396 = vadd.f32 %v3234, %v3329
      %v3397 = vadd.f32 %v3235, %v3332
      %v3398 = vadd.f32 %v3236, %v3335
      %v3399 = vadd.f32 %v3237, %v3338
      %v3400 = vadd.f32 %v3238, %v3341
      %v3401 = vadd.f32 %v3239, %v3344
      %v3402 = vadd.f32 %v3240, %v3347
      %v3403 = vadd.f32 %v3241, %v3350
      %v3404 = vadd.f32 %v3242, %v3353
      %v3405 = vadd.f32 %v3243, %v3356
      %v3406 = vadd.f32 %v3244, %v3359
      %v3407 = vadd.f32 %v3245, %v3362
      %v3408 = vadd.f32 %v3246, %v3365
      %v3409 = vadd.f32 %v3247, %v3368
      %v3410 = vadd.f32 %v3248, %v3371
      %v3411 = vadd.f32 %v3249, %v3374
      %v3412 = vadd.f32 %v3250, %v3377
      %v3413 = vadd.f32 %v3251, %v3380
      %v3414 = vadd.f32 %v3382, %v1307
      %v3415 = vadd.f32 %v3383, %v1307
      %v3416 = vadd.f32 %v3384, %v1307
      %v3417 = vadd.f32 %v3385, %v1307
      %v3418 = vadd.f32 %v3386, %v1307
      %v3419 = vadd.f32 %v3387, %v1307
      %v3420 = vadd.f32 %v3388, %v1307
      %v3421 = vadd.f32 %v3389, %v1307
      %v3422 = vadd.f32 %v3390, %v1307
      %v3423 = vadd.f32 %v3391, %v1307
      %v3424 = vadd.f32 %v3392, %v1307
      %v3425 = vadd.f32 %v3393, %v1307
      %v3426 = vadd.f32 %v3394, %v1307
      %v3427 = vadd.f32 %v3395, %v1307
      %v3428 = vadd.f32 %v3396, %v1307
      %v3429 = vadd.f32 %v3397, %v1307
      %v3430 = vadd.f32 %v3398, %v1307
      %v3431 = vadd.f32 %v3399, %v1307
      %v3432 = vadd.f32 %v3400, %v1307
      %v3433 = vadd.f32 %v3401, %v1307
      %v3434 = vadd.f32 %v3402, %v1307
      %v3435 = vadd.f32 %v3403, %v1307
      %v3436 = vadd.f32 %v3404, %v1307
      %v3437 = vadd.f32 %v3405, %v1307
      %v3438 = vadd.f32 %v3406, %v1307
      %v3439 = vadd.f32 %v3407, %v1307
      %v3440 = vadd.f32 %v3408, %v1307
      %v3441 = vadd.f32 %v3409, %v1307
      %v3442 = vadd.f32 %v3410, %v1307
      %v3443 = vadd.f32 %v3411, %v1307
      %v3444 = vadd.f32 %v3412, %v1307
      %v3445 = vadd.f32 %v3413, %v1307
      %v3446 = vmax.f32 %v3414, 0.0
      %v3447 = vmax.f32 %v3415, 0.0
      %v3448 = vmax.f32 %v3416, 0.0
      %v3449 = vmax.f32 %v3417, 0.0
      %v3450 = vmax.f32 %v3418, 0.0
      %v3451 = vmax.f32 %v3419, 0.0
      %v3452 = vmax.f32 %v3420, 0.0
      %v3453 = vmax.f32 %v3421, 0.0
      %v3454 = vmax.f32 %v3422, 0.0
      %v3455 = vmax.f32 %v3423, 0.0
      %v3456 = vmax.f32 %v3424, 0.0
      %v3457 = vmax.f32 %v3425, 0.0
      %v3458 = vmax.f32 %v3426, 0.0
      %v3459 = vmax.f32 %v3427, 0.0
      %v3460 = vmax.f32 %v3428, 0.0
      %v3461 = vmax.f32 %v3429, 0.0
      %v3462 = vmax.f32 %v3430, 0.0
      %v3463 = vmax.f32 %v3431, 0.0
      %v3464 = vmax.f32 %v3432, 0.0
      %v3465 = vmax.f32 %v3433, 0.0
      %v3466 = vmax.f32 %v3434, 0.0
      %v3467 = vmax.f32 %v3435, 0.0
      %v3468 = vmax.f32 %v3436, 0.0
      %v3469 = vmax.f32 %v3437, 0.0
      %v3470 = vmax.f32 %v3438, 0.0
      %v3471 = vmax.f32 %v3439, 0.0
      %v3472 = vmax.f32 %v3440, 0.0
      %v3473 = vmax.f32 %v3441, 0.0
      %v3474 = vmax.f32 %v3442, 0.0
      %v3475 = vmax.f32 %v3443, 0.0
      %v3476 = vmax.f32 %v3444, 0.0
      %v3477 = vmax.f32 %v3445, 0.0
      %3510 = vrot.lane.b32.xlu0 %v2053, 32
      %v3511 = vpop.permute.xlu0 %3510
      %3512 = vrot.lane.b32.xlu0 %v2054, 32
      %v3513 = vpop.permute.xlu0 %3512
      %3514 = vrot.lane.b32.xlu0 %v2055, 32
      %v3515 = vpop.permute.xlu0 %3514
      %3516 = vrot.lane.b32.xlu0 %v2056, 32
      %v3517 = vpop.permute.xlu0 %3516
      %3518 = vrot.lane.b32.xlu0 %v2057, 32
      %v3519 = vpop.permute.xlu0 %3518
      %3520 = vrot.lane.b32.xlu0 %v2058, 32
      %v3521 = vpop.permute.xlu0 %3520
      %3522 = vrot.lane.b32.xlu0 %v2059, 32
      %v3523 = vpop.permute.xlu0 %3522
      %3524 = vrot.lane.b32.xlu0 %v2060, 32
      %v3525 = vpop.permute.xlu0 %3524
      %3526 = vrot.lane.b32.xlu0 %v2061, 32
      %v3527 = vpop.permute.xlu0 %3526
      %3528 = vrot.lane.b32.xlu0 %v2062, 32
      %v3529 = vpop.permute.xlu0 %3528
      %3530 = vrot.lane.b32.xlu0 %v2063, 32
      %v3531 = vpop.permute.xlu0 %3530
      %3532 = vrot.lane.b32.xlu0 %v2064, 32
      %v3533 = vpop.permute.xlu0 %3532
      %3534 = vrot.lane.b32.xlu0 %v2065, 32
      %v3535 = vpop.permute.xlu0 %3534
      %3536 = vrot.lane.b32.xlu0 %v2066, 32
      %v3537 = vpop.permute.xlu0 %3536
      %3538 = vrot.lane.b32.xlu0 %v2067, 32
      %v3539 = vpop.permute.xlu0 %3538
      %3540 = vrot.lane.b32.xlu0 %v2068, 32
      %v3541 = vpop.permute.xlu0 %3540
      %3542 = vrot.lane.b32.xlu0 %v2069, 32
      %v3543 = vpop.permute.xlu0 %3542
      %3544 = vrot.lane.b32.xlu0 %v2070, 32
      %v3545 = vpop.permute.xlu0 %3544
      %3546 = vrot.lane.b32.xlu0 %v2071, 32
      %v3547 = vpop.permute.xlu0 %3546
      %3548 = vrot.lane.b32.xlu0 %v2072, 32
      %v3549 = vpop.permute.xlu0 %3548
      %3550 = vrot.lane.b32.xlu0 %v2073, 32
      %v3551 = vpop.permute.xlu0 %3550
      %3552 = vrot.lane.b32.xlu0 %v2074, 32
      %v3553 = vpop.permute.xlu0 %3552
      %3554 = vrot.lane.b32.xlu0 %v2075, 32
      %v3555 = vpop.permute.xlu0 %3554
      %3556 = vrot.lane.b32.xlu0 %v2076, 32
      %v3557 = vpop.permute.xlu0 %3556
      %3558 = vrot.lane.b32.xlu0 %v2077, 32
      %v3559 = vpop.permute.xlu0 %3558
      %3560 = vrot.lane.b32.xlu0 %v2078, 32
      %v3561 = vpop.permute.xlu0 %3560
      %3562 = vrot.lane.b32.xlu0 %v2079, 32
      %v3563 = vpop.permute.xlu0 %3562
      %3564 = vrot.lane.b32.xlu0 %v2080, 32
      %v3565 = vpop.permute.xlu0 %3564
      %3566 = vrot.lane.b32.xlu0 %v2081, 32
      %v3567 = vpop.permute.xlu0 %3566
      %3568 = vrot.lane.b32.xlu0 %v2082, 32
      %v3569 = vpop.permute.xlu0 %3568
      %3570 = vrot.lane.b32.xlu0 %v2083, 32
      %v3571 = vpop.permute.xlu0 %3570
      %3572 = vrot.lane.b32.xlu0 %v2084, 32
      %v3573 = vpop.permute.xlu0 %3572
      %3638 = vrot.lane.b32.xlu0 %v2766, 64
      %v3639 = vpop.permute.xlu0 %3638
      %3640 = vrot.lane.b32.xlu0 %v2767, 64
      %v3641 = vpop.permute.xlu0 %3640
      %3642 = vrot.lane.b32.xlu0 %v2768, 64
      %v3643 = vpop.permute.xlu0 %3642
      %3644 = vrot.lane.b32.xlu0 %v2769, 64
      %v3645 = vpop.permute.xlu0 %3644
      %3646 = vrot.lane.b32.xlu0 %v2770, 64
      %v3647 = vpop.permute.xlu0 %3646
      %3648 = vrot.lane.b32.xlu0 %v2771, 64
      %v3649 = vpop.permute.xlu0 %3648
      %3650 = vrot.lane.b32.xlu0 %v2772, 64
      %v3651 = vpop.permute.xlu0 %3650
      %3652 = vrot.lane.b32.xlu0 %v2773, 64
      %v3653 = vpop.permute.xlu0 %3652
      %3654 = vrot.lane.b32.xlu0 %v2774, 64
      %v3655 = vpop.permute.xlu0 %3654
      %3656 = vrot.lane.b32.xlu0 %v2775, 64
      %v3657 = vpop.permute.xlu0 %3656
      %3658 = vrot.lane.b32.xlu0 %v2776, 64
      %v3659 = vpop.permute.xlu0 %3658
      %3660 = vrot.lane.b32.xlu0 %v2777, 64
      %v3661 = vpop.permute.xlu0 %3660
      %3662 = vrot.lane.b32.xlu0 %v2778, 64
      %v3663 = vpop.permute.xlu0 %3662
      %3664 = vrot.lane.b32.xlu0 %v2779, 64
      %v3665 = vpop.permute.xlu0 %3664
      %3666 = vrot.lane.b32.xlu0 %v2780, 64
      %v3667 = vpop.permute.xlu0 %3666
      %3668 = vrot.lane.b32.xlu0 %v2781, 64
      %v3669 = vpop.permute.xlu0 %3668
      %3670 = vrot.lane.b32.xlu0 %v2782, 64
      %v3671 = vpop.permute.xlu0 %3670
      %3672 = vrot.lane.b32.xlu0 %v2783, 64
      %v3673 = vpop.permute.xlu0 %3672
      %3674 = vrot.lane.b32.xlu0 %v2784, 64
      %v3675 = vpop.permute.xlu0 %3674
      %3676 = vrot.lane.b32.xlu0 %v2785, 64
      %v3677 = vpop.permute.xlu0 %3676
      %3678 = vrot.lane.b32.xlu0 %v2786, 64
      %v3679 = vpop.permute.xlu0 %3678
      %3680 = vrot.lane.b32.xlu0 %v2787, 64
      %v3681 = vpop.permute.xlu0 %3680
      %3682 = vrot.lane.b32.xlu0 %v2788, 64
      %v3683 = vpop.permute.xlu0 %3682
      %3684 = vrot.lane.b32.xlu0 %v2789, 64
      %v3685 = vpop.permute.xlu0 %3684
      %3686 = vrot.lane.b32.xlu0 %v2790, 64
      %v3687 = vpop.permute.xlu0 %3686
      %3688 = vrot.lane.b32.xlu0 %v2791, 64
      %v3689 = vpop.permute.xlu0 %3688
      %3690 = vrot.lane.b32.xlu0 %v2792, 64
      %v3691 = vpop.permute.xlu0 %3690
      %3692 = vrot.lane.b32.xlu0 %v2793, 64
      %v3693 = vpop.permute.xlu0 %3692
      %3694 = vrot.lane.b32.xlu0 %v2794, 64
      %v3695 = vpop.permute.xlu0 %3694
      %3696 = vrot.lane.b32.xlu0 %v2795, 64
      %v3697 = vpop.permute.xlu0 %3696
      %3698 = vrot.lane.b32.xlu0 %v2796, 64
      %v3699 = vpop.permute.xlu0 %3698
      %3700 = vrot.lane.b32.xlu0 %v2797, 64
      %v3701 = vpop.permute.xlu0 %3700
      %3766 = vrot.lane.b32.xlu0 %v3446, 96
      %v3767 = vpop.permute.xlu0 %3766
      %3768 = vrot.lane.b32.xlu0 %v3447, 96
      %v3769 = vpop.permute.xlu0 %3768
      %3770 = vrot.lane.b32.xlu0 %v3448, 96
      %v3771 = vpop.permute.xlu0 %3770
      %3772 = vrot.lane.b32.xlu0 %v3449, 96
      %v3773 = vpop.permute.xlu0 %3772
      %3774 = vrot.lane.b32.xlu0 %v3450, 96
      %v3775 = vpop.permute.xlu0 %3774
      %3776 = vrot.lane.b32.xlu0 %v3451, 96
      %v3777 = vpop.permute.xlu0 %3776
      %3778 = vrot.lane.b32.xlu0 %v3452, 96
      %v3779 = vpop.permute.xlu0 %3778
      %3780 = vrot.lane.b32.xlu0 %v3453, 96
      %v3781 = vpop.permute.xlu0 %3780
      %3782 = vrot.lane.b32.xlu0 %v3454, 96
      %v3783 = vpop.permute.xlu0 %3782
      %3784 = vrot.lane.b32.xlu0 %v3455, 96
      %v3785 = vpop.permute.xlu0 %3784
      %3786 = vrot.lane.b32.xlu0 %v3456, 96
      %v3787 = vpop.permute.xlu0 %3786
      %3788 = vrot.lane.b32.xlu0 %v3457, 96
      %v3789 = vpop.permute.xlu0 %3788
      %3790 = vrot.lane.b32.xlu0 %v3458, 96
      %v3791 = vpop.permute.xlu0 %3790
      %3792 = vrot.lane.b32.xlu0 %v3459, 96
      %v3793 = vpop.permute.xlu0 %3792
      %3794 = vrot.lane.b32.xlu0 %v3460, 96
      %v3795 = vpop.permute.xlu0 %3794
      %3796 = vrot.lane.b32.xlu0 %v3461, 96
      %v3797 = vpop.permute.xlu0 %3796
      %3798 = vrot.lane.b32.xlu0 %v3462, 96
      %v3799 = vpop.permute.xlu0 %3798
      %3800 = vrot.lane.b32.xlu0 %v3463, 96
      %v3801 = vpop.permute.xlu0 %3800
      %3802 = vrot.lane.b32.xlu0 %v3464, 96
      %v3803 = vpop.permute.xlu0 %3802
      %3804 = vrot.lane.b32.xlu0 %v3465, 96
      %v3805 = vpop.permute.xlu0 %3804
      %3806 = vrot.lane.b32.xlu0 %v3466, 96
      %v3807 = vpop.permute.xlu0 %3806
      %3808 = vrot.lane.b32.xlu0 %v3467, 96
      %v3809 = vpop.permute.xlu0 %3808
      %3810 = vrot.lane.b32.xlu0 %v3468, 96
      %v3811 = vpop.permute.xlu0 %3810
      %3812 = vrot.lane.b32.xlu0 %v3469, 96
      %v3813 = vpop.permute.xlu0 %3812
      %3814 = vrot.lane.b32.xlu0 %v3470, 96
      %v3815 = vpop.permute.xlu0 %3814
      %3816 = vrot.lane.b32.xlu0 %v3471, 96
      %v3817 = vpop.permute.xlu0 %3816
      %3818 = vrot.lane.b32.xlu0 %v3472, 96
      %v3819 = vpop.permute.xlu0 %3818
      %3820 = vrot.lane.b32.xlu0 %v3473, 96
      %v3821 = vpop.permute.xlu0 %3820
      %3822 = vrot.lane.b32.xlu0 %v3474, 96
      %v3823 = vpop.permute.xlu0 %3822
      %3824 = vrot.lane.b32.xlu0 %v3475, 96
      %v3825 = vpop.permute.xlu0 %3824
      %3826 = vrot.lane.b32.xlu0 %v3476, 96
      %v3827 = vpop.permute.xlu0 %3826
      %3828 = vrot.lane.b32.xlu0 %v3477, 96
      %v3829 = vpop.permute.xlu0 %3828
      %v3862 = vsel %vm265, %v1341, %v3511
      %v3863 = vsel %vm265, %v1342, %v3513
      %v3864 = vsel %vm265, %v1343, %v3515
      %v3865 = vsel %vm265, %v1344, %v3517
      %v3866 = vsel %vm265, %v1345, %v3519
      %v3867 = vsel %vm265, %v1346, %v3521
      %v3868 = vsel %vm265, %v1347, %v3523
      %v3869 = vsel %vm265, %v1348, %v3525
      %v3870 = vsel %vm265, %v1349, %v3527
      %v3871 = vsel %vm265, %v1350, %v3529
      %v3872 = vsel %vm265, %v1351, %v3531
      %v3873 = vsel %vm265, %v1352, %v3533
      %v3874 = vsel %vm265, %v1353, %v3535
      %v3875 = vsel %vm265, %v1354, %v3537
      %v3876 = vsel %vm265, %v1355, %v3539
      %v3877 = vsel %vm265, %v1356, %v3541
      %v3878 = vsel %vm265, %v1357, %v3543
      %v3879 = vsel %vm265, %v1358, %v3545
      %v3880 = vsel %vm265, %v1359, %v3547
      %v3881 = vsel %vm265, %v1360, %v3549
      %v3882 = vsel %vm265, %v1361, %v3551
      %v3883 = vsel %vm265, %v1362, %v3553
      %v3884 = vsel %vm265, %v1363, %v3555
      %v3885 = vsel %vm265, %v1364, %v3557
      %v3886 = vsel %vm265, %v1365, %v3559
      %v3887 = vsel %vm265, %v1366, %v3561
      %v3888 = vsel %vm265, %v1367, %v3563
      %v3889 = vsel %vm265, %v1368, %v3565
      %v3890 = vsel %vm265, %v1369, %v3567
      %v3891 = vsel %vm265, %v1370, %v3569
      %v3892 = vsel %vm265, %v1371, %v3571
      %v3893 = vsel %vm265, %v1372, %v3573
      %vm3894 = vcmask 523264
      %v3895 = vsel %vm3894, %v3862, %v3639
      %v3896 = vsel %vm3894, %v3863, %v3641
      %v3897 = vsel %vm3894, %v3864, %v3643
      %v3898 = vsel %vm3894, %v3865, %v3645
      %v3899 = vsel %vm3894, %v3866, %v3647
      %v3900 = vsel %vm3894, %v3867, %v3649
      %v3901 = vsel %vm3894, %v3868, %v3651
      %v3902 = vsel %vm3894, %v3869, %v3653
      %v3903 = vsel %vm3894, %v3870, %v3655
      %v3904 = vsel %vm3894, %v3871, %v3657
      %v3905 = vsel %vm3894, %v3872, %v3659
      %v3906 = vsel %vm3894, %v3873, %v3661
      %v3907 = vsel %vm3894, %v3874, %v3663
      %v3908 = vsel %vm3894, %v3875, %v3665
      %v3909 = vsel %vm3894, %v3876, %v3667
      %v3910 = vsel %vm3894, %v3877, %v3669
      %v3911 = vsel %vm3894, %v3878, %v3671
      %v3912 = vsel %vm3894, %v3879, %v3673
      %v3913 = vsel %vm3894, %v3880, %v3675
      %v3914 = vsel %vm3894, %v3881, %v3677
      %v3915 = vsel %vm3894, %v3882, %v3679
      %v3916 = vsel %vm3894, %v3883, %v3681
      %v3917 = vsel %vm3894, %v3884, %v3683
      %v3918 = vsel %vm3894, %v3885, %v3685
      %v3919 = vsel %vm3894, %v3886, %v3687
      %v3920 = vsel %vm3894, %v3887, %v3689
      %v3921 = vsel %vm3894, %v3888, %v3691
      %v3922 = vsel %vm3894, %v3889, %v3693
      %v3923 = vsel %vm3894, %v3890, %v3695
      %v3924 = vsel %vm3894, %v3891, %v3697
      %v3925 = vsel %vm3894, %v3892, %v3699
      %v3926 = vsel %vm3894, %v3893, %v3701
      %vm3927 = vcmask 785408
      %v3928 = vsel %vm3927, %v3895, %v3767
      %v3929 = vsel %vm3927, %v3896, %v3769
      %v3930 = vsel %vm3927, %v3897, %v3771
      %v3931 = vsel %vm3927, %v3898, %v3773
      %v3932 = vsel %vm3927, %v3899, %v3775
      %v3933 = vsel %vm3927, %v3900, %v3777
      %v3934 = vsel %vm3927, %v3901, %v3779
      %v3935 = vsel %vm3927, %v3902, %v3781
      %v3936 = vsel %vm3927, %v3903, %v3783
      %v3937 = vsel %vm3927, %v3904, %v3785
      %v3938 = vsel %vm3927, %v3905, %v3787
      %v3939 = vsel %vm3927, %v3906, %v3789
      %v3940 = vsel %vm3927, %v3907, %v3791
      %v3941 = vsel %vm3927, %v3908, %v3793
      %v3942 = vsel %vm3927, %v3909, %v3795
      %v3943 = vsel %vm3927, %v3910, %v3797
      %v3944 = vsel %vm3927, %v3911, %v3799
      %v3945 = vsel %vm3927, %v3912, %v3801
      %v3946 = vsel %vm3927, %v3913, %v3803
      %v3947 = vsel %vm3927, %v3914, %v3805
      %v3948 = vsel %vm3927, %v3915, %v3807
      %v3949 = vsel %vm3927, %v3916, %v3809
      %v3950 = vsel %vm3927, %v3917, %v3811
      %v3951 = vsel %vm3927, %v3918, %v3813
      %v3952 = vsel %vm3927, %v3919, %v3815
      %v3953 = vsel %vm3927, %v3920, %v3817
      %v3954 = vsel %vm3927, %v3921, %v3819
      %v3955 = vsel %vm3927, %v3922, %v3821
      %v3956 = vsel %vm3927, %v3923, %v3823
      %v3957 = vsel %vm3927, %v3924, %v3825
      %v3958 = vsel %vm3927, %v3925, %v3827
      %v3959 = vsel %vm3927, %v3926, %v3829
      %3960 = vst [vmem:[%s224] sm:$0xff] %v3928
      %3961 = vst [vmem:[%s224 + $0x8] sm:$0xff] %v3929
      %3962 = vst [vmem:[%s224 + $0x10] sm:$0xff] %v3930
      %3963 = vst [vmem:[%s224 + $0x18] sm:$0xff] %v3931
      %3964 = vst [vmem:[%s224 + $0x20] sm:$0xff] %v3932
      %3965 = vst [vmem:[%s224 + $0x28] sm:$0xff] %v3933
      %3966 = vst [vmem:[%s224 + $0x30] sm:$0xff] %v3934
      %3967 = vst [vmem:[%s224 + $0x38] sm:$0xff] %v3935
      %3968 = vst [vmem:[%s224 + $0x40] sm:$0xff] %v3936
      %3969 = vst [vmem:[%s224 + $0x48] sm:$0xff] %v3937
      %3970 = vst [vmem:[%s224 + $0x50] sm:$0xff] %v3938
      %3971 = vst [vmem:[%s224 + $0x58] sm:$0xff] %v3939
      %3972 = vst [vmem:[%s224 + $0x60] sm:$0xff] %v3940
      %3973 = vst [vmem:[%s224 + $0x68] sm:$0xff] %v3941
      %3974 = vst [vmem:[%s224 + $0x70] sm:$0xff] %v3942
      %3975 = vst [vmem:[%s224 + $0x78] sm:$0xff] %v3943
      %3976 = vst [vmem:[%s224 + $0x80] sm:$0xff] %v3944
      %3977 = vst [vmem:[%s224 + $0x88] sm:$0xff] %v3945
      %3978 = vst [vmem:[%s224 + $0x90] sm:$0xff] %v3946
      %3979 = vst [vmem:[%s224 + $0x98] sm:$0xff] %v3947
      %3980 = vst [vmem:[%s224 + $0xa0] sm:$0xff] %v3948
      %3981 = vst [vmem:[%s224 + $0xa8] sm:$0xff] %v3949
      %3982 = vst [vmem:[%s224 + $0xb0] sm:$0xff] %v3950
      %3983 = vst [vmem:[%s224 + $0xb8] sm:$0xff] %v3951
      %3984 = vst [vmem:[%s224 + $0xc0] sm:$0xff] %v3952
      %3985 = vst [vmem:[%s224 + $0xc8] sm:$0xff] %v3953
      %3986 = vst [vmem:[%s224 + $0xd0] sm:$0xff] %v3954
      %3987 = vst [vmem:[%s224 + $0xd8] sm:$0xff] %v3955
      %3988 = vst [vmem:[%s224 + $0xe0] sm:$0xff] %v3956
      %3989 = vst [vmem:[%s224 + $0xe8] sm:$0xff] %v3957
      %3990 = vst [vmem:[%s224 + $0xf0] sm:$0xff] %v3958
      %3991 = vst [vmem:[%s224 + $0xf8] sm:$0xff] %v3959
      %p3992 = scmp.lt.s32.totalorder %s16, 1
      %s3993 = scalar_select %p3992, %s16, 1
      %s3994 = smul.addr %s3993, 32
      %s3995 = smul.addr %s3994, 8
      %s3996 = scalar_lea.vmem %s5, %s3995
      // Predicated region
      $region41: #{decoder_block_forward.1} parent=39 // pred_check
        %p3997 = pneg %p144
      $region42: #{decoder_block_forward.1} parent=39 // pred_check_branch
        %3999 = sbr.rel (%p3997) target = $region44
      $region43: #{decoder_block_forward.1} parent=39 // pred_region
        _
      $region44: #{decoder_block_forward.1} parent=39 // pred_fallthru
        _
    $region40: #{decoder_block_forward.1} parent=5 // pred_fallthru
      _
    %p4000 = scmp.le.s32.totalorder 2, %s11
    // Predicated region
    $region45: #{decoder_block_forward.1} parent=5 // pred_check
      %p4001 = pneg %p4000
    $region46: #{decoder_block_forward.1} parent=5 // pred_check_branch
      %4003 = sbr.rel (%p4001) target = $region48
    $region47: #{decoder_block_forward.1} parent=5 // pred_region
      %s4004 = ssub.s32 %s11, 2
      // Predicated region
      $region49: #{decoder_block_forward.1} parent=47 // pred_check
        %p4005 = pneg %p150
      $region50: #{decoder_block_forward.1} parent=47 // pred_check_branch
        %4007 = sbr.rel (%p4005) target = $region52
      $region51: #{decoder_block_forward.1} parent=47 // pred_region
        %p4008 = scmp.lt.s32.totalorder %s17, 1
        %s4009 = scalar_select %p4008, %s17, 1
        %s4010 = smul.addr %s4009, 32
        %s4011 = smul.addr %s4010, 8
        %s4012 = scalar_lea.vmem %s5, %s4011
      $region52: #{decoder_block_forward.1} parent=47 // pred_fallthru
        _
    $region48: #{decoder_block_forward.1} parent=5 // pred_fallthru
      _
  $region6: #{decoder_block_forward.1} parent=0 // loop_footer
    %s15 = sadd.s32 1, %s11
  $region7: #{decoder_block_forward.1} parent=0 // loop_footer_branch
    %10 = sbr.rel target = $region3
  $region8: #{decoder_block_forward.1} parent=0 // loop_exit
    _

</llo_original>
